<compile_context>
chip_gen: v5e
topology: v5e:2x2
jax: 0.10.0
libtpu: 0.0.40
codegen_flags: <defaults>
</compile_context>

<pallas_src>
import jax
import jax.numpy as jnp
from jax import lax
from jax.experimental import pallas as pl
from jax.experimental.pallas import tpu as pltpu


def _double_conv_kernel(x_ref, w1_ref, s1_ref, b1_ref, w2_ref, s2_ref, b2_ref,
                        o_ref, xpad_ref, ypad_ref, col1_ref, col2_ref):
    """Fused (conv3x3 -> BN -> ReLU) * 2 for one batch element.

    x_ref    : (1, H, W, Cin)     NHWC input tile
    w1_ref   : (9*Cin,  Cout)     stage-1 weights in im2col layout
    s1_ref   : (1, Cout)          stage-1 folded BN scale
    b1_ref   : (1, Cout)          stage-1 folded BN bias
    w2_ref   : (9*Cout, Cout)     stage-2 weights in im2col layout
    s2_ref   : (1, Cout)          stage-2 folded BN scale
    b2_ref   : (1, Cout)          stage-2 folded BN bias
    o_ref    : (1, Cout, H*W)     channels-major output (lane-dense last dim)
    xpad_ref : (H+2, W+2, Cin)    VMEM scratch: zero-padded input
    ypad_ref : (H+2, W+2, Cout)   VMEM scratch: zero-padded stage-1 output
    col1_ref : (H*W, 9*Cin)       VMEM scratch: stage-1 im2col matrix
    col2_ref : (H*W, 9*Cout)      VMEM scratch: stage-2 im2col matrix
    """
    H, W, Cin = x_ref.shape[1], x_ref.shape[2], x_ref.shape[3]
    Cout = s1_ref.shape[1]

    # ---------------- stage 1: conv -> BN -> ReLU --------------------------
    xpad_ref[...] = jnp.zeros_like(xpad_ref)            # zero halo
    xpad_ref[1:H + 1, 1:W + 1, :] = x_ref[0]            # interior = input

    # Build im2col matrix (H*W, 9*Cin) once, then a single MXU matmul.
    for dy in range(3):
        for dx in range(3):
            k = dy * 3 + dx
            patch = xpad_ref[dy:dy + H, dx:dx + W, :].reshape(H * W, Cin)
            col1_ref[:, k * Cin:(k + 1) * Cin] = patch

    y1 = jnp.dot(col1_ref[...], w1_ref[...],
                 preferred_element_type=jnp.float32)     # (H*W, Cout)
    y1 = jnp.maximum(y1 * s1_ref[0] + b1_ref[0], 0.0)    # folded BN + ReLU

    # ---------------- stage 2: conv -> BN -> ReLU --------------------------
    # Intermediate never leaves VMEM.
    ypad_ref[...] = jnp.zeros_like(ypad_ref)
    ypad_ref[1:H + 1, 1:W + 1, :] = y1.reshape(H, W, Cout)

    for dy in range(3):
        for dx in range(3):
            k = dy * 3 + dx
            patch = ypad_ref[dy:dy + H, dx:dx + W, :].reshape(H * W, Cout)
            col2_ref[:, k * Cout:(k + 1) * Cout] = patch

    y2 = jnp.dot(col2_ref[...], w2_ref[...],
                 preferred_element_type=jnp.float32)     # (H*W, Cout)
    y2 = jnp.maximum(y2 * s2_ref[0] + b2_ref[0], 0.0)

    # Channels-major, lane-dense store: last dim H*W (multiple of 128 here).
    o_ref[0] = y2.T.astype(o_ref.dtype)                  # (Cout, H*W)


def double_conv_pallas(x_nhwc, w1m, s1, b1, w2m, s2, b2):
    """x_nhwc: (N,H,W,Cin) f32; w*m: (9*C, Cout); s*/b*: (1, Cout).

    Returns (N, Cout, H*W) f32 (channels-major, i.e. NCHW flattened on HW).
    """
    N, H, W, Cin = x_nhwc.shape
    Cout = w1m.shape[1]
    HW = H * W

    grid_spec = pltpu.PrefetchScalarGridSpec(
        num_scalar_prefetch=0,
        grid=(N,),
        in_specs=[
            pl.BlockSpec((1, H, W, Cin), lambda n: (n, 0, 0, 0)),
            pl.BlockSpec((9 * Cin, Cout), lambda n: (0, 0)),
            pl.BlockSpec((1, Cout), lambda n: (0, 0)),
            pl.BlockSpec((1, Cout), lambda n: (0, 0)),
            pl.BlockSpec((9 * Cout, Cout), lambda n: (0, 0)),
            pl.BlockSpec((1, Cout), lambda n: (0, 0)),
            pl.BlockSpec((1, Cout), lambda n: (0, 0)),
        ],
        out_specs=pl.BlockSpec((1, Cout, HW), lambda n: (n, 0, 0)),
        scratch_shapes=[
            pltpu.VMEM((H + 2, W + 2, Cin), jnp.float32),   # padded input
            pltpu.VMEM((H + 2, W + 2, Cout), jnp.float32),  # padded stage-1 out
            pltpu.VMEM((HW, 9 * Cin), jnp.float32),         # im2col stage 1
            pltpu.VMEM((HW, 9 * Cout), jnp.float32),        # im2col stage 2
        ],
    )

    return pl.pallas_call(
        _double_conv_kernel,
        out_shape=jax.ShapeDtypeStruct((N, Cout, HW), jnp.float32),
        grid_spec=grid_spec,
        compiler_params=pltpu.CompilerParams(
            dimension_semantics=("parallel",)),
    )(x_nhwc, w1m, s1, b1, w2m, s2, b2)


def _fold_bn(conv_bias, gamma, beta, running_mean, running_var, eps=1e-5):
    scale = gamma / jnp.sqrt(running_var + eps)
    bias = beta + (conv_bias - running_mean) * scale
    return scale, bias


def make_double_conv_params(key, in_ch, out_ch):
    """Deterministic synthetic params matching nn.Conv2d/BatchNorm2d shapes."""
    ks = jax.random.split(key, 8)
    p = {}
    # conv weights stored as (3, 3, Cin, Cout)  (HWIO)
    w1 = jax.random.normal(ks[0], (3, 3, in_ch, out_ch), jnp.float32) * 0.1
    b1 = jax.random.normal(ks[1], (out_ch,), jnp.float32) * 0.1
    g1 = 1.0 + 0.1 * jax.random.normal(ks[2], (out_ch,), jnp.float32)
    be1 = 0.1 * jax.random.normal(ks[3], (out_ch,), jnp.float32)
    m1 = 0.05 * jax.random.normal(ks[4], (out_ch,), jnp.float32)
    v1 = jnp.abs(1.0 + 0.1 * jax.random.normal(ks[5], (out_ch,), jnp.float32))

    w2 = jax.random.normal(ks[6], (3, 3, out_ch, out_ch), jnp.float32) * 0.1
    b2 = jax.random.normal(ks[7], (out_ch,), jnp.float32) * 0.1
    g2 = jnp.ones((out_ch,), jnp.float32)
    be2 = jnp.zeros((out_ch,), jnp.float32)
    m2 = jnp.zeros((out_ch,), jnp.float32)
    v2 = jnp.ones((out_ch,), jnp.float32)

    s1, fb1 = _fold_bn(b1, g1, be1, m1, v1)
    s2, fb2 = _fold_bn(b2, g2, be2, m2, v2)
    p["w1"], p["scale1"], p["bias1"] = w1, s1, fb1
    p["w2"], p["scale2"], p["bias2"] = w2, s2, fb2
    return p


@jax.jit
def double_conv_forward(x_nchw, params):
    """Mirrors double_conv.forward. Input/output are NCHW like PyTorch."""
    N, Cin, H, W = x_nchw.shape
    Cout = params["w1"].shape[-1]

    x_nhwc = jnp.transpose(x_nchw, (0, 2, 3, 1)).astype(jnp.float32)
    w1m = params["w1"].reshape(9 * Cin, Cout).astype(jnp.float32)
    w2m = params["w2"].reshape(9 * Cout, Cout).astype(jnp.float32)
    s1 = params["scale1"].reshape(1, Cout).astype(jnp.float32)
    b1 = params["bias1"].reshape(1, Cout).astype(jnp.float32)
    s2 = params["scale2"].reshape(1, Cout).astype(jnp.float32)
    b2 = params["bias2"].reshape(1, Cout).astype(jnp.float32)

    out = double_conv_pallas(x_nhwc, w1m, s1, b1, w2m, s2, b2)  # (N,Cout,H*W)
    return out.reshape(N, Cout, H, W)                            # free reshape


def _reference_forward(x_nchw, params):
    """Pure-JAX reference (same folded-BN inference semantics)."""
    x = jnp.transpose(x_nchw, (0, 2, 3, 1)).astype(jnp.float32)
    for w, s, b in ((params["w1"], params["scale1"], params["bias1"]),
                    (params["w2"], params["scale2"], params["bias2"])):
        y = lax.conv_general_dilated(
            x, w, window_strides=(1, 1), padding="SAME",
            dimension_numbers=("NHWC", "HWIO", "NHWC"),
            precision=lax.Precision.HIGHEST)
        x = jnp.maximum(y * s + b, 0.0)
    return jnp.transpose(x, (0, 3, 1, 2))


if __name__ == "__main__":
    key = jax.random.PRNGKey(0)
    kx, kp = jax.random.split(key)

    N, C_in, C_out, H, W = 2, 4, 8, 16, 16
    x = jax.random.normal(kx, (N, C_in, H, W), jnp.float32)
    params = make_double_conv_params(kp, C_in, C_out)

    out = double_conv_forward(x, params)
    jax.block_until_ready(out)
    assert out.shape == (N, C_out, H, W)

    ref = _reference_forward(x, params)
    max_err = float(jnp.max(jnp.abs(out - ref)))
    assert max_err < 5e-2, f"mismatch vs reference: max abs err {max_err}"

    print("KERNEL_OK")
</pallas_src>

<mosaic_0001>
module attributes {stable_mosaic.version = 11 : i64} {
  func.func @_double_conv_kernel(%arg0: i32, %arg1: memref<1x16x16x4xf32, #tpu.memory_space<vmem>>, %arg2: memref<36x8xf32, #tpu.memory_space<vmem>>, %arg3: memref<1x8xf32, #tpu.memory_space<vmem>>, %arg4: memref<1x8xf32, #tpu.memory_space<vmem>>, %arg5: memref<72x8xf32, #tpu.memory_space<vmem>>, %arg6: memref<1x8xf32, #tpu.memory_space<vmem>>, %arg7: memref<1x8xf32, #tpu.memory_space<vmem>>, %arg8: memref<1x8x256xf32, #tpu.memory_space<vmem>>, %arg9: memref<18x18x4xf32, #tpu.memory_space<vmem>>, %arg10: memref<18x18x8xf32, #tpu.memory_space<vmem>>, %arg11: memref<256x36xf32, #tpu.memory_space<vmem>>, %arg12: memref<256x72xf32, #tpu.memory_space<vmem>>) attributes {dimension_semantics = [#tpu.dimension_semantics<parallel>], iteration_bounds = array<i64: 2>, scalar_prefetch = 0 : i64, scratch_operands = 4 : i64, tpu.core_type = #tpu.core_type<tc>, window_params = [{transform_indices = @transform_0, window_bounds = array<i64: 1, 16, 16, 4>}, {pipeline_mode = #tpu.pipeline_mode<synchronous>, transform_indices = @transform_1, window_bounds = array<i64: 36, 8>}, {pipeline_mode = #tpu.pipeline_mode<synchronous>, transform_indices = @transform_2, window_bounds = array<i64: 1, 8>}, {pipeline_mode = #tpu.pipeline_mode<synchronous>, transform_indices = @transform_3, window_bounds = array<i64: 1, 8>}, {pipeline_mode = #tpu.pipeline_mode<synchronous>, transform_indices = @transform_4, window_bounds = array<i64: 72, 8>}, {pipeline_mode = #tpu.pipeline_mode<synchronous>, transform_indices = @transform_5, window_bounds = array<i64: 1, 8>}, {pipeline_mode = #tpu.pipeline_mode<synchronous>, transform_indices = @transform_6, window_bounds = array<i64: 1, 8>}, {transform_indices = @transform_7, window_bounds = array<i64: 1, 8, 256>}]} {
    %cst = arith.constant 0.000000e+00 : f32
    %0 = vector.broadcast %cst : f32 to vector<18x18x4xf32>
    %c0 = arith.constant 0 : index
    %c0_0 = arith.constant 0 : index
    %c0_1 = arith.constant 0 : index
    %1 = vector.load %arg9[%c0, %c0_0, %c0_1] : memref<18x18x4xf32, #tpu.memory_space<vmem>>, vector<18x18x4xf32>
    tpu.vector_store %arg9[%c0, %c0_0, %c0_1], %0 {strides = array<i32>} : memref<18x18x4xf32, #tpu.memory_space<vmem>>, vector<18x18x4xf32>,
    %c0_2 = arith.constant 0 : index
    %c0_3 = arith.constant 0 : index
    %c0_4 = arith.constant 0 : index
    %c0_5 = arith.constant 0 : index
    %2 = vector.load %arg1[%c0_2, %c0_3, %c0_4, %c0_5] : memref<1x16x16x4xf32, #tpu.memory_space<vmem>>, vector<1x16x16x4xf32>
    %3 = vector.shape_cast %2 : vector<1x16x16x4xf32> to vector<16x16x4xf32>
    %c1 = arith.constant 1 : index
    %c1_6 = arith.constant 1 : index
    %c0_7 = arith.constant 0 : index
    %4 = vector.load %arg9[%c1, %c1_6, %c0_7] : memref<18x18x4xf32, #tpu.memory_space<vmem>>, vector<16x16x4xf32>
    tpu.vector_store %arg9[%c1, %c1_6, %c0_7], %3 {strides = array<i32>} : memref<18x18x4xf32, #tpu.memory_space<vmem>>, vector<16x16x4xf32>,
    %c0_8 = arith.constant 0 : index
    %c0_9 = arith.constant 0 : index
    %c0_10 = arith.constant 0 : index
    %5 = vector.load %arg9[%c0_8, %c0_9, %c0_10] : memref<18x18x4xf32, #tpu.memory_space<vmem>>, vector<16x16x4xf32>
    %6 = vector.shape_cast %5 : vector<16x16x4xf32> to vector<256x4xf32>
    %c0_11 = arith.constant 0 : index
    %c0_12 = arith.constant 0 : index
    %7 = vector.load %arg11[%c0_11, %c0_12] : memref<256x36xf32, #tpu.memory_space<vmem>>, vector<256x4xf32>
    tpu.vector_store %arg11[%c0_11, %c0_12], %6 {strides = array<i32>} : memref<256x36xf32, #tpu.memory_space<vmem>>, vector<256x4xf32>,
    %c0_13 = arith.constant 0 : index
    %c1_14 = arith.constant 1 : index
    %c0_15 = arith.constant 0 : index
    %8 = vector.load %arg9[%c0_13, %c1_14, %c0_15] : memref<18x18x4xf32, #tpu.memory_space<vmem>>, vector<16x16x4xf32>
    %9 = vector.shape_cast %8 : vector<16x16x4xf32> to vector<256x4xf32>
    %c0_16 = arith.constant 0 : index
    %c4 = arith.constant 4 : index
    %10 = vector.load %arg11[%c0_16, %c4] : memref<256x36xf32, #tpu.memory_space<vmem>>, vector<256x4xf32>
    tpu.vector_store %arg11[%c0_16, %c4], %9 {strides = array<i32>} : memref<256x36xf32, #tpu.memory_space<vmem>>, vector<256x4xf32>,
    %c0_17 = arith.constant 0 : index
    %c2 = arith.constant 2 : index
    %c0_18 = arith.constant 0 : index
    %11 = vector.load %arg9[%c0_17, %c2, %c0_18] : memref<18x18x4xf32, #tpu.memory_space<vmem>>, vector<16x16x4xf32>
    %12 = vector.shape_cast %11 : vector<16x16x4xf32> to vector<256x4xf32>
    %c0_19 = arith.constant 0 : index
    %c8 = arith.constant 8 : index
    %13 = vector.load %arg11[%c0_19, %c8] : memref<256x36xf32, #tpu.memory_space<vmem>>, vector<256x4xf32>
    tpu.vector_store %arg11[%c0_19, %c8], %12 {strides = array<i32>} : memref<256x36xf32, #tpu.memory_space<vmem>>, vector<256x4xf32>,
    %c1_20 = arith.constant 1 : index
    %c0_21 = arith.constant 0 : index
    %c0_22 = arith.constant 0 : index
    %14 = vector.load %arg9[%c1_20, %c0_21, %c0_22] : memref<18x18x4xf32, #tpu.memory_space<vmem>>, vector<16x16x4xf32>
    %15 = vector.shape_cast %14 : vector<16x16x4xf32> to vector<256x4xf32>
    %c0_23 = arith.constant 0 : index
    %c12 = arith.constant 12 : index
    %16 = vector.load %arg11[%c0_23, %c12] : memref<256x36xf32, #tpu.memory_space<vmem>>, vector<256x4xf32>
    tpu.vector_store %arg11[%c0_23, %c12], %15 {strides = array<i32>} : memref<256x36xf32, #tpu.memory_space<vmem>>, vector<256x4xf32>,
    %c1_24 = arith.constant 1 : index
    %c1_25 = arith.constant 1 : index
    %c0_26 = arith.constant 0 : index
    %17 = vector.load %arg9[%c1_24, %c1_25, %c0_26] : memref<18x18x4xf32, #tpu.memory_space<vmem>>, vector<16x16x4xf32>
    %18 = vector.shape_cast %17 : vector<16x16x4xf32> to vector<256x4xf32>
    %c0_27 = arith.constant 0 : index
    %c16 = arith.constant 16 : index
    %19 = vector.load %arg11[%c0_27, %c16] : memref<256x36xf32, #tpu.memory_space<vmem>>, vector<256x4xf32>
    tpu.vector_store %arg11[%c0_27, %c16], %18 {strides = array<i32>} : memref<256x36xf32, #tpu.memory_space<vmem>>, vector<256x4xf32>,
    %c1_28 = arith.constant 1 : index
    %c2_29 = arith.constant 2 : index
    %c0_30 = arith.constant 0 : index
    %20 = vector.load %arg9[%c1_28, %c2_29, %c0_30] : memref<18x18x4xf32, #tpu.memory_space<vmem>>, vector<16x16x4xf32>
    %21 = vector.shape_cast %20 : vector<16x16x4xf32> to vector<256x4xf32>
    %c0_31 = arith.constant 0 : index
    %c20 = arith.constant 20 : index
    %22 = vector.load %arg11[%c0_31, %c20] : memref<256x36xf32, #tpu.memory_space<vmem>>, vector<256x4xf32>
    tpu.vector_store %arg11[%c0_31, %c20], %21 {strides = array<i32>} : memref<256x36xf32, #tpu.memory_space<vmem>>, vector<256x4xf32>,
    %c2_32 = arith.constant 2 : index
    %c0_33 = arith.constant 0 : index
    %c0_34 = arith.constant 0 : index
    %23 = vector.load %arg9[%c2_32, %c0_33, %c0_34] : memref<18x18x4xf32, #tpu.memory_space<vmem>>, vector<16x16x4xf32>
    %24 = vector.shape_cast %23 : vector<16x16x4xf32> to vector<256x4xf32>
    %c0_35 = arith.constant 0 : index
    %c24 = arith.constant 24 : index
    %25 = vector.load %arg11[%c0_35, %c24] : memref<256x36xf32, #tpu.memory_space<vmem>>, vector<256x4xf32>
    tpu.vector_store %arg11[%c0_35, %c24], %24 {strides = array<i32>} : memref<256x36xf32, #tpu.memory_space<vmem>>, vector<256x4xf32>,
    %c2_36 = arith.constant 2 : index
    %c1_37 = arith.constant 1 : index
    %c0_38 = arith.constant 0 : index
    %26 = vector.load %arg9[%c2_36, %c1_37, %c0_38] : memref<18x18x4xf32, #tpu.memory_space<vmem>>, vector<16x16x4xf32>
    %27 = vector.shape_cast %26 : vector<16x16x4xf32> to vector<256x4xf32>
    %c0_39 = arith.constant 0 : index
    %c28 = arith.constant 28 : index
    %28 = vector.load %arg11[%c0_39, %c28] : memref<256x36xf32, #tpu.memory_space<vmem>>, vector<256x4xf32>
    tpu.vector_store %arg11[%c0_39, %c28], %27 {strides = array<i32>} : memref<256x36xf32, #tpu.memory_space<vmem>>, vector<256x4xf32>,
    %c2_40 = arith.constant 2 : index
    %c2_41 = arith.constant 2 : index
    %c0_42 = arith.constant 0 : index
    %29 = vector.load %arg9[%c2_40, %c2_41, %c0_42] : memref<18x18x4xf32, #tpu.memory_space<vmem>>, vector<16x16x4xf32>
    %30 = vector.shape_cast %29 : vector<16x16x4xf32> to vector<256x4xf32>
    %c0_43 = arith.constant 0 : index
    %c32 = arith.constant 32 : index
    %31 = vector.load %arg11[%c0_43, %c32] : memref<256x36xf32, #tpu.memory_space<vmem>>, vector<256x4xf32>
    tpu.vector_store %arg11[%c0_43, %c32], %30 {strides = array<i32>} : memref<256x36xf32, #tpu.memory_space<vmem>>, vector<256x4xf32>,
    %c0_44 = arith.constant 0 : index
    %c0_45 = arith.constant 0 : index
    %32 = vector.load %arg11[%c0_44, %c0_45] : memref<256x36xf32, #tpu.memory_space<vmem>>, vector<256x36xf32>
    %c0_46 = arith.constant 0 : index
    %c0_47 = arith.constant 0 : index
    %33 = vector.load %arg2[%c0_46, %c0_47] : memref<36x8xf32, #tpu.memory_space<vmem>>, vector<36x8xf32>
    %cst_48 = arith.constant dense<0.000000e+00> : vector<256x8xf32>
    %34 = tpu.matmul %32, %33, %cst_48 {dimension_numbers = #tpu.dot_dimension_numbers<[1], [0], [0], [1], [0, 0, 1, 1], [], []>} : vector<256x36xf32>, vector<36x8xf32>, vector<256x8xf32> -> vector<256x8xf32>
    %c0_49 = arith.constant 0 : index
    %c0_50 = arith.constant 0 : index
    %35 = vector.load %arg3[%c0_49, %c0_50] : memref<1x8xf32, #tpu.memory_space<vmem>>, vector<1x8xf32>
    %36 = vector.shape_cast %35 : vector<1x8xf32> to vector<8xf32>
    %37 = vector.shape_cast %36 : vector<8xf32> to vector<1x8xf32>
    %38 = vector.broadcast %37 : vector<1x8xf32> to vector<256x8xf32>
    %39 = arith.mulf %34, %38 : vector<256x8xf32>
    %c0_51 = arith.constant 0 : index
    %c0_52 = arith.constant 0 : index
    %40 = vector.load %arg4[%c0_51, %c0_52] : memref<1x8xf32, #tpu.memory_space<vmem>>, vector<1x8xf32>
    %41 = vector.shape_cast %40 : vector<1x8xf32> to vector<8xf32>
    %42 = vector.shape_cast %41 : vector<8xf32> to vector<1x8xf32>
    %43 = vector.broadcast %42 : vector<1x8xf32> to vector<256x8xf32>
    %44 = arith.addf %39, %43 : vector<256x8xf32>
    %cst_53 = arith.constant 0.000000e+00 : f32
    %45 = vector.broadcast %cst_53 : f32 to vector<256x8xf32>
    %46 = arith.maximumf %44, %45 : vector<256x8xf32>
    %cst_54 = arith.constant 0.000000e+00 : f32
    %47 = vector.broadcast %cst_54 : f32 to vector<18x18x8xf32>
    %c0_55 = arith.constant 0 : index
    %c0_56 = arith.constant 0 : index
    %c0_57 = arith.constant 0 : index
    %48 = vector.load %arg10[%c0_55, %c0_56, %c0_57] : memref<18x18x8xf32, #tpu.memory_space<vmem>>, vector<18x18x8xf32>
    tpu.vector_store %arg10[%c0_55, %c0_56, %c0_57], %47 {strides = array<i32>} : memref<18x18x8xf32, #tpu.memory_space<vmem>>, vector<18x18x8xf32>,
    %49 = vector.shape_cast %46 : vector<256x8xf32> to vector<16x16x8xf32>
    %c1_58 = arith.constant 1 : index
    %c1_59 = arith.constant 1 : index
    %c0_60 = arith.constant 0 : index
    %50 = vector.load %arg10[%c1_58, %c1_59, %c0_60] : memref<18x18x8xf32, #tpu.memory_space<vmem>>, vector<16x16x8xf32>
    tpu.vector_store %arg10[%c1_58, %c1_59, %c0_60], %49 {strides = array<i32>} : memref<18x18x8xf32, #tpu.memory_space<vmem>>, vector<16x16x8xf32>,
    %c0_61 = arith.constant 0 : index
    %c0_62 = arith.constant 0 : index
    %c0_63 = arith.constant 0 : index
    %51 = vector.load %arg10[%c0_61, %c0_62, %c0_63] : memref<18x18x8xf32, #tpu.memory_space<vmem>>, vector<16x16x8xf32>
    %52 = vector.shape_cast %51 : vector<16x16x8xf32> to vector<256x8xf32>
    %c0_64 = arith.constant 0 : index
    %c0_65 = arith.constant 0 : index
    %53 = vector.load %arg12[%c0_64, %c0_65] : memref<256x72xf32, #tpu.memory_space<vmem>>, vector<256x8xf32>
    tpu.vector_store %arg12[%c0_64, %c0_65], %52 {strides = array<i32>} : memref<256x72xf32, #tpu.memory_space<vmem>>, vector<256x8xf32>,
    %c0_66 = arith.constant 0 : index
    %c1_67 = arith.constant 1 : index
    %c0_68 = arith.constant 0 : index
    %54 = vector.load %arg10[%c0_66, %c1_67, %c0_68] : memref<18x18x8xf32, #tpu.memory_space<vmem>>, vector<16x16x8xf32>
    %55 = vector.shape_cast %54 : vector<16x16x8xf32> to vector<256x8xf32>
    %c0_69 = arith.constant 0 : index
    %c8_70 = arith.constant 8 : index
    %56 = vector.load %arg12[%c0_69, %c8_70] : memref<256x72xf32, #tpu.memory_space<vmem>>, vector<256x8xf32>
    tpu.vector_store %arg12[%c0_69, %c8_70], %55 {strides = array<i32>} : memref<256x72xf32, #tpu.memory_space<vmem>>, vector<256x8xf32>,
    %c0_71 = arith.constant 0 : index
    %c2_72 = arith.constant 2 : index
    %c0_73 = arith.constant 0 : index
    %57 = vector.load %arg10[%c0_71, %c2_72, %c0_73] : memref<18x18x8xf32, #tpu.memory_space<vmem>>, vector<16x16x8xf32>
    %58 = vector.shape_cast %57 : vector<16x16x8xf32> to vector<256x8xf32>
    %c0_74 = arith.constant 0 : index
    %c16_75 = arith.constant 16 : index
    %59 = vector.load %arg12[%c0_74, %c16_75] : memref<256x72xf32, #tpu.memory_space<vmem>>, vector<256x8xf32>
    tpu.vector_store %arg12[%c0_74, %c16_75], %58 {strides = array<i32>} : memref<256x72xf32, #tpu.memory_space<vmem>>, vector<256x8xf32>,
    %c1_76 = arith.constant 1 : index
    %c0_77 = arith.constant 0 : index
    %c0_78 = arith.constant 0 : index
    %60 = vector.load %arg10[%c1_76, %c0_77, %c0_78] : memref<18x18x8xf32, #tpu.memory_space<vmem>>, vector<16x16x8xf32>
    %61 = vector.shape_cast %60 : vector<16x16x8xf32> to vector<256x8xf32>
    %c0_79 = arith.constant 0 : index
    %c24_80 = arith.constant 24 : index
    %62 = vector.load %arg12[%c0_79, %c24_80] : memref<256x72xf32, #tpu.memory_space<vmem>>, vector<256x8xf32>
    tpu.vector_store %arg12[%c0_79, %c24_80], %61 {strides = array<i32>} : memref<256x72xf32, #tpu.memory_space<vmem>>, vector<256x8xf32>,
    %c1_81 = arith.constant 1 : index
    %c1_82 = arith.constant 1 : index
    %c0_83 = arith.constant 0 : index
    %63 = vector.load %arg10[%c1_81, %c1_82, %c0_83] : memref<18x18x8xf32, #tpu.memory_space<vmem>>, vector<16x16x8xf32>
    %64 = vector.shape_cast %63 : vector<16x16x8xf32> to vector<256x8xf32>
    %c0_84 = arith.constant 0 : index
    %c32_85 = arith.constant 32 : index
    %65 = vector.load %arg12[%c0_84, %c32_85] : memref<256x72xf32, #tpu.memory_space<vmem>>, vector<256x8xf32>
    tpu.vector_store %arg12[%c0_84, %c32_85], %64 {strides = array<i32>} : memref<256x72xf32, #tpu.memory_space<vmem>>, vector<256x8xf32>,
    %c1_86 = arith.constant 1 : index
    %c2_87 = arith.constant 2 : index
    %c0_88 = arith.constant 0 : index
    %66 = vector.load %arg10[%c1_86, %c2_87, %c0_88] : memref<18x18x8xf32, #tpu.memory_space<vmem>>, vector<16x16x8xf32>
    %67 = vector.shape_cast %66 : vector<16x16x8xf32> to vector<256x8xf32>
    %c0_89 = arith.constant 0 : index
    %c40 = arith.constant 40 : index
    %68 = vector.load %arg12[%c0_89, %c40] : memref<256x72xf32, #tpu.memory_space<vmem>>, vector<256x8xf32>
    tpu.vector_store %arg12[%c0_89, %c40], %67 {strides = array<i32>} : memref<256x72xf32, #tpu.memory_space<vmem>>, vector<256x8xf32>,
    %c2_90 = arith.constant 2 : index
    %c0_91 = arith.constant 0 : index
    %c0_92 = arith.constant 0 : index
    %69 = vector.load %arg10[%c2_90, %c0_91, %c0_92] : memref<18x18x8xf32, #tpu.memory_space<vmem>>, vector<16x16x8xf32>
    %70 = vector.shape_cast %69 : vector<16x16x8xf32> to vector<256x8xf32>
    %c0_93 = arith.constant 0 : index
    %c48 = arith.constant 48 : index
    %71 = vector.load %arg12[%c0_93, %c48] : memref<256x72xf32, #tpu.memory_space<vmem>>, vector<256x8xf32>
    tpu.vector_store %arg12[%c0_93, %c48], %70 {strides = array<i32>} : memref<256x72xf32, #tpu.memory_space<vmem>>, vector<256x8xf32>,
    %c2_94 = arith.constant 2 : index
    %c1_95 = arith.constant 1 : index
    %c0_96 = arith.constant 0 : index
    %72 = vector.load %arg10[%c2_94, %c1_95, %c0_96] : memref<18x18x8xf32, #tpu.memory_space<vmem>>, vector<16x16x8xf32>
    %73 = vector.shape_cast %72 : vector<16x16x8xf32> to vector<256x8xf32>
    %c0_97 = arith.constant 0 : index
    %c56 = arith.constant 56 : index
    %74 = vector.load %arg12[%c0_97, %c56] : memref<256x72xf32, #tpu.memory_space<vmem>>, vector<256x8xf32>
    tpu.vector_store %arg12[%c0_97, %c56], %73 {strides = array<i32>} : memref<256x72xf32, #tpu.memory_space<vmem>>, vector<256x8xf32>,
    %c2_98 = arith.constant 2 : index
    %c2_99 = arith.constant 2 : index
    %c0_100 = arith.constant 0 : index
    %75 = vector.load %arg10[%c2_98, %c2_99, %c0_100] : memref<18x18x8xf32, #tpu.memory_space<vmem>>, vector<16x16x8xf32>
    %76 = vector.shape_cast %75 : vector<16x16x8xf32> to vector<256x8xf32>
    %c0_101 = arith.constant 0 : index
    %c64 = arith.constant 64 : index
    %77 = vector.load %arg12[%c0_101, %c64] : memref<256x72xf32, #tpu.memory_space<vmem>>, vector<256x8xf32>
    tpu.vector_store %arg12[%c0_101, %c64], %76 {strides = array<i32>} : memref<256x72xf32, #tpu.memory_space<vmem>>, vector<256x8xf32>,
    %c0_102 = arith.constant 0 : index
    %c0_103 = arith.constant 0 : index
    %78 = vector.load %arg12[%c0_102, %c0_103] : memref<256x72xf32, #tpu.memory_space<vmem>>, vector<256x72xf32>
    %c0_104 = arith.constant 0 : index
    %c0_105 = arith.constant 0 : index
    %79 = vector.load %arg5[%c0_104, %c0_105] : memref<72x8xf32, #tpu.memory_space<vmem>>, vector<72x8xf32>
    %cst_106 = arith.constant dense<0.000000e+00> : vector<256x8xf32>
    %80 = tpu.matmul %78, %79, %cst_106 {dimension_numbers = #tpu.dot_dimension_numbers<[1], [0], [0], [1], [0, 0, 1, 1], [], []>} : vector<256x72xf32>, vector<72x8xf32>, vector<256x8xf32> -> vector<256x8xf32>
    %c0_107 = arith.constant 0 : index
    %c0_108 = arith.constant 0 : index
    %81 = vector.load %arg6[%c0_107, %c0_108] : memref<1x8xf32, #tpu.memory_space<vmem>>, vector<1x8xf32>
    %82 = vector.shape_cast %81 : vector<1x8xf32> to vector<8xf32>
    %83 = vector.shape_cast %82 : vector<8xf32> to vector<1x8xf32>
    %84 = vector.broadcast %83 : vector<1x8xf32> to vector<256x8xf32>
    %85 = arith.mulf %80, %84 : vector<256x8xf32>
    %c0_109 = arith.constant 0 : index
    %c0_110 = arith.constant 0 : index
    %86 = vector.load %arg7[%c0_109, %c0_110] : memref<1x8xf32, #tpu.memory_space<vmem>>, vector<1x8xf32>
    %87 = vector.shape_cast %86 : vector<1x8xf32> to vector<8xf32>
    %88 = vector.shape_cast %87 : vector<8xf32> to vector<1x8xf32>
    %89 = vector.broadcast %88 : vector<1x8xf32> to vector<256x8xf32>
    %90 = arith.addf %85, %89 : vector<256x8xf32>
    %cst_111 = arith.constant 0.000000e+00 : f32
    %91 = vector.broadcast %cst_111 : f32 to vector<256x8xf32>
    %92 = arith.maximumf %90, %91 : vector<256x8xf32>
    %93 = tpu.transpose %92, [1, 0] : vector<256x8xf32> -> vector<8x256xf32>
    %c0_112 = arith.constant 0 : index
    %c0_113 = arith.constant 0 : index
    %c0_114 = arith.constant 0 : index
    %94 = vector.load %arg8[%c0_112, %c0_113, %c0_114] : memref<1x8x256xf32, #tpu.memory_space<vmem>>, vector<1x8x256xf32>
    %95 = vector.shape_cast %94 : vector<1x8x256xf32> to vector<8x256xf32>
    %96 = vector.shape_cast %93 : vector<8x256xf32> to vector<1x8x256xf32>
    tpu.vector_store %arg8[%c0_112, %c0_113, %c0_114], %96 {strides = array<i32>} : memref<1x8x256xf32, #tpu.memory_space<vmem>>, vector<1x8x256xf32>,
    return
  }
  func.func @transform_0(%arg0: i32) -> (i32, i32, i32, i32) {
    %c0_i32 = arith.constant 0 : i32
    %c0_i32_0 = arith.constant 0 : i32
    %c0_i32_1 = arith.constant 0 : i32
    %c0_i32_2 = arith.constant 0 : i32
    return %arg0, %c0_i32, %c0_i32_0, %c0_i32_1 : i32, i32, i32, i32
  }
  func.func @transform_1(%arg0: i32) -> (i32, i32) {
    %c0_i32 = arith.constant 0 : i32
    %c0_i32_0 = arith.constant 0 : i32
    %c0_i32_1 = arith.constant 0 : i32
    return %c0_i32, %c0_i32_0 : i32, i32
  }
  func.func @transform_2(%arg0: i32) -> (i32, i32) {
    %c0_i32 = arith.constant 0 : i32
    %c0_i32_0 = arith.constant 0 : i32
    %c0_i32_1 = arith.constant 0 : i32
    return %c0_i32, %c0_i32_0 : i32, i32
  }
  func.func @transform_3(%arg0: i32) -> (i32, i32) {
    %c0_i32 = arith.constant 0 : i32
    %c0_i32_0 = arith.constant 0 : i32
    %c0_i32_1 = arith.constant 0 : i32
    return %c0_i32, %c0_i32_0 : i32, i32
  }
  func.func @transform_4(%arg0: i32) -> (i32, i32) {
    %c0_i32 = arith.constant 0 : i32
    %c0_i32_0 = arith.constant 0 : i32
    %c0_i32_1 = arith.constant 0 : i32
    return %c0_i32, %c0_i32_0 : i32, i32
  }
  func.func @transform_5(%arg0: i32) -> (i32, i32) {
    %c0_i32 = arith.constant 0 : i32
    %c0_i32_0 = arith.constant 0 : i32
    %c0_i32_1 = arith.constant 0 : i32
    return %c0_i32, %c0_i32_0 : i32, i32
  }
  func.func @transform_6(%arg0: i32) -> (i32, i32) {
    %c0_i32 = arith.constant 0 : i32
    %c0_i32_0 = arith.constant 0 : i32
    %c0_i32_1 = arith.constant 0 : i32
    return %c0_i32, %c0_i32_0 : i32, i32
  }
  func.func @transform_7(%arg0: i32) -> (i32, i32, i32) {
    %c0_i32 = arith.constant 0 : i32
    %c0_i32_0 = arith.constant 0 : i32
    %c0_i32_1 = arith.constant 0 : i32
    return %arg0, %c0_i32, %c0_i32_0 : i32, i32, i32
  }
}

</mosaic_0001>

<llo_original>
// kernel: double_conv_forward.1
$region0: #{double_conv_forward.1}
  #allocation0 [shape = 'u32[]', space=smem, size = 0x4, offset = 0x4, fixed_abs, tag = 'smem constant byte address 0x4 - core index']
  #allocation1 [shape = 'u32[72,128]{1,0:T(1,128)}', space=vmem, size = 0x9000, scoped, tag = 'internal scratch']
  #allocation2 [shape = 'f32[18,18,4]{2,1,0:T(8,128)}', space=vmem, size = 0x36000, scoped, tag = 'scratch operand']
  #allocation3 [shape = 'f32[18,18,8]{2,1,0:T(8,128)}', space=vmem, size = 0x36000, scoped, tag = 'scratch operand']
  #allocation4 [shape = 'f32[256,36]{1,0:T(8,128)}', space=vmem, size = 0x20000, scoped, tag = 'scratch operand']
  #allocation5 [shape = 'f32[256,72]{1,0:T(8,128)}', space=vmem, size = 0x20000, scoped, tag = 'scratch operand']
  %s0 = inlined_call_operand.vmem [shape: f32[2,16,16,4], index: 0, kind: input, shape index: {}]
  %s1 = inlined_call_operand.vmem [shape: f32[36,8], index: 1, kind: input, shape index: {}]
  %s2 = inlined_call_operand.vmem [shape: f32[1,8], index: 2, kind: input, shape index: {}]
  %s3 = inlined_call_operand.vmem [shape: f32[1,8], index: 3, kind: input, shape index: {}]
  %s4 = inlined_call_operand.vmem [shape: f32[72,8], index: 4, kind: input, shape index: {}]
  %s5 = inlined_call_operand.vmem [shape: f32[1,8], index: 5, kind: input, shape index: {}]
  %s6 = inlined_call_operand.vmem [shape: f32[1,8], index: 6, kind: input, shape index: {}]
  %s7 = inlined_call_operand.vmem [shape: f32[2,8,256], index: 7, kind: output, shape index: {}]
  %s8 = sld [smem:[#allocation0]]
  $region61: #{double_conv_forward.1} parent=0
    _
  %s10 = ssub.s32 1, %s8
  %s11 = scalar_select 0, %s10, %s8
  loop: start=0, step=1, limit=4
  $region2: #{double_conv_forward.1} parent=0 // loop_pre_header
    _
  $region3: #{double_conv_forward.1} parent=0 // loop_header
    %s13 = sphi 0, %s17
    %p14 = scmp.ge.s32.totalorder %s13, 4
    %s23 = sphi 0, %s25
    %s26 = sphi 0, %s23
    %s27 = sphi 0, %s26
    %s43 = sphi 0, %s27
    %s47 = sphi 0, %s47
    %s49 = sphi 0, %s47
    %s50 = sphi 0, %s49
    %s64 = sphi 0, %s50
    %s68 = sphi 0, %s68
    %s70 = sphi 0, %s68
    %s71 = sphi 0, %s70
    %s85 = sphi 0, %s71
    %s89 = sphi 0, %s89
    %s91 = sphi 0, %s89
    %s92 = sphi 0, %s91
    %s106 = sphi 0, %s92
    %s110 = sphi 0, %s110
    %s112 = sphi 0, %s110
    %s113 = sphi 0, %s112
    %s127 = sphi 0, %s113
    %s131 = sphi 0, %s131
    %s133 = sphi 0, %s131
    %s134 = sphi 0, %s133
    %s148 = sphi 0, %s134
    %s152 = sphi 0, %s152
    %s154 = sphi 0, %s152
    %s155 = sphi 0, %s154
    %s169 = sphi 0, %s155
    %s175 = sphi 0, %s177
    %s178 = sphi 0, %s175
    %s179 = sphi 0, %s178
    %s195 = sphi 0, %s179
  $region4: #{double_conv_forward.1} parent=0 // loop_header_branch
    %16 = sbr.rel (%p14) target = $region8
  $region5: #{double_conv_forward.1} parent=0 // loop_body
    %s18 = ssub.s32 %s13, 1
    %s19 = ssub.s32 %s13, 2
    %s20 = sadd.s32 %s13, 1
    %s21 = ssub.s32 %s13, %s20
    %p22 = scmp.eq.s32.totalorder %s21, 0
    %s24 = sadd.s32 %s23, 1
    %s25 = scalar_select %p22, %s23, %s24
    %p28 = pneg %p22
    %p29 = scmp.eq.s32.totalorder %s13, 1
    %p30 = por %p28, %p29
    %p31 = scmp.ne.s32.totalorder %s23, %s26
    %p32 = scmp.eq.s32.totalorder %s13, 0
    %p33 = por %p31, %p32
    %p34 = scmp.ne.s32.totalorder %s23, %s26
    %p35 = scmp.eq.s32.totalorder %s18, 1
    %p36 = por %p34, %p35
    %p37 = scmp.ne.s32.totalorder %s26, %s27
    %p38 = scmp.eq.s32.totalorder %s18, 0
    %p39 = por %p37, %p38
    %p40 = scmp.ne.s32.totalorder %s26, %s27
    %p41 = scmp.eq.s32.totalorder %s19, 1
    %p42 = por %p40, %p41
    %p44 = scmp.ne.s32.totalorder %s27, %s43
    %p45 = scmp.eq.s32.totalorder %s19, 0
    %p46 = por %p44, %p45
    %s48 = sadd.s32 %s47, 1
    %p51 = scmp.eq.s32.totalorder %s13, 1
    %p52 = scmp.ne.s32.totalorder %s47, %s49
    %p53 = scmp.eq.s32.totalorder %s13, 0
    %p54 = por %p52, %p53
    %p55 = scmp.ne.s32.totalorder %s47, %s49
    %p56 = scmp.eq.s32.totalorder %s18, 1
    %p57 = por %p55, %p56
    %p58 = scmp.ne.s32.totalorder %s49, %s50
    %p59 = scmp.eq.s32.totalorder %s18, 0
    %p60 = por %p58, %p59
    %p61 = scmp.ne.s32.totalorder %s49, %s50
    %p62 = scmp.eq.s32.totalorder %s19, 1
    %p63 = por %p61, %p62
    %p65 = scmp.ne.s32.totalorder %s50, %s64
    %p66 = scmp.eq.s32.totalorder %s19, 0
    %p67 = por %p65, %p66
    %s69 = sadd.s32 %s68, 1
    %p72 = scmp.eq.s32.totalorder %s13, 1
    %p73 = scmp.ne.s32.totalorder %s68, %s70
    %p74 = scmp.eq.s32.totalorder %s13, 0
    %p75 = por %p73, %p74
    %p76 = scmp.ne.s32.totalorder %s68, %s70
    %p77 = scmp.eq.s32.totalorder %s18, 1
    %p78 = por %p76, %p77
    %p79 = scmp.ne.s32.totalorder %s70, %s71
    %p80 = scmp.eq.s32.totalorder %s18, 0
    %p81 = por %p79, %p80
    %p82 = scmp.ne.s32.totalorder %s70, %s71
    %p83 = scmp.eq.s32.totalorder %s19, 1
    %p84 = por %p82, %p83
    %p86 = scmp.ne.s32.totalorder %s71, %s85
    %p87 = scmp.eq.s32.totalorder %s19, 0
    %p88 = por %p86, %p87
    %s90 = sadd.s32 %s89, 1
    %p93 = scmp.eq.s32.totalorder %s13, 1
    %p94 = scmp.ne.s32.totalorder %s89, %s91
    %p95 = scmp.eq.s32.totalorder %s13, 0
    %p96 = por %p94, %p95
    %p97 = scmp.ne.s32.totalorder %s89, %s91
    %p98 = scmp.eq.s32.totalorder %s18, 1
    %p99 = por %p97, %p98
    %p100 = scmp.ne.s32.totalorder %s91, %s92
    %p101 = scmp.eq.s32.totalorder %s18, 0
    %p102 = por %p100, %p101
    %p103 = scmp.ne.s32.totalorder %s91, %s92
    %p104 = scmp.eq.s32.totalorder %s19, 1
    %p105 = por %p103, %p104
    %p107 = scmp.ne.s32.totalorder %s92, %s106
    %p108 = scmp.eq.s32.totalorder %s19, 0
    %p109 = por %p107, %p108
    %s111 = sadd.s32 %s110, 1
    %p114 = scmp.eq.s32.totalorder %s13, 1
    %p115 = scmp.ne.s32.totalorder %s110, %s112
    %p116 = scmp.eq.s32.totalorder %s13, 0
    %p117 = por %p115, %p116
    %p118 = scmp.ne.s32.totalorder %s110, %s112
    %p119 = scmp.eq.s32.totalorder %s18, 1
    %p120 = por %p118, %p119
    %p121 = scmp.ne.s32.totalorder %s112, %s113
    %p122 = scmp.eq.s32.totalorder %s18, 0
    %p123 = por %p121, %p122
    %p124 = scmp.ne.s32.totalorder %s112, %s113
    %p125 = scmp.eq.s32.totalorder %s19, 1
    %p126 = por %p124, %p125
    %p128 = scmp.ne.s32.totalorder %s113, %s127
    %p129 = scmp.eq.s32.totalorder %s19, 0
    %p130 = por %p128, %p129
    %s132 = sadd.s32 %s131, 1
    %p135 = scmp.eq.s32.totalorder %s13, 1
    %p136 = scmp.ne.s32.totalorder %s131, %s133
    %p137 = scmp.eq.s32.totalorder %s13, 0
    %p138 = por %p136, %p137
    %p139 = scmp.ne.s32.totalorder %s131, %s133
    %p140 = scmp.eq.s32.totalorder %s18, 1
    %p141 = por %p139, %p140
    %p142 = scmp.ne.s32.totalorder %s133, %s134
    %p143 = scmp.eq.s32.totalorder %s18, 0
    %p144 = por %p142, %p143
    %p145 = scmp.ne.s32.totalorder %s133, %s134
    %p146 = scmp.eq.s32.totalorder %s19, 1
    %p147 = por %p145, %p146
    %p149 = scmp.ne.s32.totalorder %s134, %s148
    %p150 = scmp.eq.s32.totalorder %s19, 0
    %p151 = por %p149, %p150
    %s153 = sadd.s32 %s152, 1
    %p156 = scmp.eq.s32.totalorder %s13, 1
    %p157 = scmp.ne.s32.totalorder %s152, %s154
    %p158 = scmp.eq.s32.totalorder %s13, 0
    %p159 = por %p157, %p158
    %p160 = scmp.ne.s32.totalorder %s152, %s154
    %p161 = scmp.eq.s32.totalorder %s18, 1
    %p162 = por %p160, %p161
    %p163 = scmp.ne.s32.totalorder %s154, %s155
    %p164 = scmp.eq.s32.totalorder %s18, 0
    %p165 = por %p163, %p164
    %p166 = scmp.ne.s32.totalorder %s154, %s155
    %p167 = scmp.eq.s32.totalorder %s19, 1
    %p168 = por %p166, %p167
    %p170 = scmp.ne.s32.totalorder %s155, %s169
    %p171 = scmp.eq.s32.totalorder %s19, 0
    %p172 = por %p170, %p171
    %s173 = ssub.s32 %s13, %s20
    %p174 = scmp.eq.s32.totalorder %s173, 0
    %s176 = sadd.s32 %s175, 1
    %s177 = scalar_select %p174, %s175, %s176
    %p180 = pneg %p174
    %p181 = scmp.eq.s32.totalorder %s13, 1
    %p182 = por %p180, %p181
    %p183 = scmp.ne.s32.totalorder %s175, %s178
    %p184 = scmp.eq.s32.totalorder %s13, 0
    %p185 = por %p183, %p184
    %p186 = scmp.ne.s32.totalorder %s175, %s178
    %p187 = scmp.eq.s32.totalorder %s18, 1
    %p188 = por %p186, %p187
    %p189 = scmp.ne.s32.totalorder %s178, %s179
    %p190 = scmp.eq.s32.totalorder %s18, 0
    %p191 = por %p189, %p190
    %p192 = scmp.ne.s32.totalorder %s178, %s179
    %p193 = scmp.eq.s32.totalorder %s19, 1
    %p194 = por %p192, %p193
    %p196 = scmp.ne.s32.totalorder %s179, %s195
    %p197 = scmp.eq.s32.totalorder %s19, 0
    %p198 = por %p196, %p197
    %p199 = scmp.le.s32.totalorder 1, %s13
    %p200 = scmp.lt.s32.totalorder %s13, 3
    %p201 = pnand %p199, %p200
    %p202 = pneg %p201
    // Predicated region
    $region9: #{double_conv_forward.1} parent=5 // pred_check
      _
    $region10: #{double_conv_forward.1} parent=5 // pred_check_branch
      %204 = sbr.rel (%p201) target = $region12
    $region11: #{double_conv_forward.1} parent=5 // pred_region
      %s205 = ssub.s32 %s13, 1
      // Predicated region
      $region13: #{double_conv_forward.1} parent=11 // pred_check
        %p206 = pneg %p60
      $region14: #{double_conv_forward.1} parent=11 // pred_check_branch
        %208 = sbr.rel (%p206) target = $region16
      $region15: #{double_conv_forward.1} parent=11 // pred_region
        _
      $region16: #{double_conv_forward.1} parent=11 // pred_fallthru
        _
      // Predicated region
      $region17: #{double_conv_forward.1} parent=11 // pred_check
        %p209 = pneg %p81
      $region18: #{double_conv_forward.1} parent=11 // pred_check_branch
        %211 = sbr.rel (%p209) target = $region20
      $region19: #{double_conv_forward.1} parent=11 // pred_region
        _
      $region20: #{double_conv_forward.1} parent=11 // pred_fallthru
        _
      // Predicated region
      $region21: #{double_conv_forward.1} parent=11 // pred_check
        %p212 = pneg %p102
      $region22: #{double_conv_forward.1} parent=11 // pred_check_branch
        %214 = sbr.rel (%p212) target = $region24
      $region23: #{double_conv_forward.1} parent=11 // pred_region
        _
      $region24: #{double_conv_forward.1} parent=11 // pred_fallthru
        _
      // Predicated region
      $region25: #{double_conv_forward.1} parent=11 // pred_check
        %p215 = pneg %p123
      $region26: #{double_conv_forward.1} parent=11 // pred_check_branch
        %217 = sbr.rel (%p215) target = $region28
      $region27: #{double_conv_forward.1} parent=11 // pred_region
        _
      $region28: #{double_conv_forward.1} parent=11 // pred_fallthru
        _
      // Predicated region
      $region29: #{double_conv_forward.1} parent=11 // pred_check
        %p218 = pneg %p144
      $region30: #{double_conv_forward.1} parent=11 // pred_check_branch
        %220 = sbr.rel (%p218) target = $region32
      $region31: #{double_conv_forward.1} parent=11 // pred_region
        _
      $region32: #{double_conv_forward.1} parent=11 // pred_fallthru
        _
      // Predicated region
      $region33: #{double_conv_forward.1} parent=11 // pred_check
        %p221 = pneg %p165
      $region34: #{double_conv_forward.1} parent=11 // pred_check_branch
        %223 = sbr.rel (%p221) target = $region36
      $region35: #{double_conv_forward.1} parent=11 // pred_region
        _
      $region36: #{double_conv_forward.1} parent=11 // pred_fallthru
        _
    $region12: #{double_conv_forward.1} parent=5 // pred_fallthru
      _
    %p224 = scmp.lt.s32.totalorder %s13, 2
    // Predicated region
    $region37: #{double_conv_forward.1} parent=5 // pred_check
      %p225 = pneg %p224
    $region38: #{double_conv_forward.1} parent=5 // pred_check_branch
      %227 = sbr.rel (%p225) target = $region40
    $region39: #{double_conv_forward.1} parent=5 // pred_region
      // Predicated region
      $region41: #{double_conv_forward.1} parent=39 // pred_check
        %p228 = pneg %p33
      $region42: #{double_conv_forward.1} parent=39 // pred_check_branch
        %230 = sbr.rel (%p228) target = $region44
      $region43: #{double_conv_forward.1} parent=39 // pred_region
        %p231 = scmp.lt.s32.totalorder %s13, 1
        %s232 = scalar_select %p231, %s13, 1
        %s233 = smul.addr %s232, 32
        %s234 = smul.addr %s233, 8
        %s235 = scalar_lea.vmem %s0, %s234
      $region44: #{double_conv_forward.1} parent=39 // pred_fallthru
        _
    $region40: #{double_conv_forward.1} parent=5 // pred_fallthru
      _
    %p236 = scmp.le.s32.totalorder 1, %s13
    %p237 = scmp.lt.s32.totalorder %s13, 3
    %p238 = pnand %p236, %p237
    %p239 = pneg %p238
    // Predicated region
    $region45: #{double_conv_forward.1} parent=5 // pred_check
      _
    $region46: #{double_conv_forward.1} parent=5 // pred_check_branch
      %241 = sbr.rel (%p238) target = $region48
    $region47: #{double_conv_forward.1} parent=5 // pred_region
      %s242 = ssub.s32 %s13, 1
      %p243 = scmp.lt.s32.totalorder %s18, 1
      %s244 = scalar_select %p243, %s18, 1
      %s245 = smul.addr %s244, 32
      %s246 = smul.addr %s245, 8
      %s247 = scalar_lea.vmem %s0, %s246
      %p248 = pneg %p39
      %p249 = pneg %p36
      %p250 = pneg %p60
      %p251 = pneg %p57
      %p252 = pneg %p81
      %p253 = pneg %p78
      %p254 = pneg %p102
      %p255 = pneg %p99
      %p256 = pneg %p123
      %p257 = pneg %p120
      %p258 = pneg %p144
      %p259 = pneg %p141
      %p260 = pneg %p165
      %p261 = pneg %p162
      %p262 = pneg %p191
      %p263 = pneg %p188
      %p264 = scmp.lt.s32.totalorder %s18, 1
      %s265 = scalar_select %p264, %s18, 1
      %s266 = smul.addr %s265, 2
      %s267 = smul.addr %s266, 8
      %s268 = scalar_lea.vmem %s7, %s267
      %p269 = scmp.lt.s32.totalorder %s18, 1
      %s270 = scalar_select %p269, %s18, 1
      %s271 = smul.addr %s270, 32
      %s272 = smul.addr %s271, 8
      %s273 = scalar_lea.vmem %s0, %s272
      %p274 = scmp.lt.s32.totalorder %s18, 1
      %s275 = scalar_select %p274, %s18, 1
      %s276 = smul.addr %s275, 2
      %s277 = smul.addr %s276, 8
      %s278 = scalar_lea.vmem %s7, %s277
      %vm279 = vcmask 31744
      %280 = vst.msk [vmem:[#allocation2] sm:$0xff] %vm279, 0.0
      %281 = vst.msk [vmem:[#allocation2 + $0x8] sm:$0xff] %vm279, 0.0
      %vm282 = vcmask 25600
      %283 = vst.msk [vmem:[#allocation2 + $0x10] sm:$0x3] %vm282, 0.0
      %284 = vst.msk [vmem:[#allocation2 + $0x18] sm:$0xff] %vm279, 0.0
      %285 = vst.msk [vmem:[#allocation2 + $0x20] sm:$0xff] %vm279, 0.0
      %286 = vst.msk [vmem:[#allocation2 + $0x28] sm:$0x3] %vm282, 0.0
      %287 = vst.msk [vmem:[#allocation2 + $0x30] sm:$0xff] %vm279, 0.0
      %288 = vst.msk [vmem:[#allocation2 + $0x38] sm:$0xff] %vm279, 0.0
      %289 = vst.msk [vmem:[#allocation2 + $0x40] sm:$0x3] %vm282, 0.0
      %290 = vst.msk [vmem:[#allocation2 + $0x48] sm:$0xff] %vm279, 0.0
      %291 = vst.msk [vmem:[#allocation2 + $0x50] sm:$0xff] %vm279, 0.0
      %292 = vst.msk [vmem:[#allocation2 + $0x58] sm:$0x3] %vm282, 0.0
      %293 = vst.msk [vmem:[#allocation2 + $0x60] sm:$0xff] %vm279, 0.0
      %294 = vst.msk [vmem:[#allocation2 + $0x68] sm:$0xff] %vm279, 0.0
      %295 = vst.msk [vmem:[#allocation2 + $0x70] sm:$0x3] %vm282, 0.0
      %296 = vst.msk [vmem:[#allocation2 + $0x78] sm:$0xff] %vm279, 0.0
      %297 = vst.msk [vmem:[#allocation2 + $0x80] sm:$0xff] %vm279, 0.0
      %298 = vst.msk [vmem:[#allocation2 + $0x88] sm:$0x3] %vm282, 0.0
      %299 = vst.msk [vmem:[#allocation2 + $0x90] sm:$0xff] %vm279, 0.0
      %300 = vst.msk [vmem:[#allocation2 + $0x98] sm:$0xff] %vm279, 0.0
      %301 = vst.msk [vmem:[#allocation2 + $0xa0] sm:$0x3] %vm282, 0.0
      %302 = vst.msk [vmem:[#allocation2 + $0xa8] sm:$0xff] %vm279, 0.0
      %303 = vst.msk [vmem:[#allocation2 + $0xb0] sm:$0xff] %vm279, 0.0
      %304 = vst.msk [vmem:[#allocation2 + $0xb8] sm:$0x3] %vm282, 0.0
      %305 = vst.msk [vmem:[#allocation2 + $0xc0] sm:$0xff] %vm279, 0.0
      %306 = vst.msk [vmem:[#allocation2 + $0xc8] sm:$0xff] %vm279, 0.0
      %307 = vst.msk [vmem:[#allocation2 + $0xd0] sm:$0x3] %vm282, 0.0
      %308 = vst.msk [vmem:[#allocation2 + $0xd8] sm:$0xff] %vm279, 0.0
      %309 = vst.msk [vmem:[#allocation2 + $0xe0] sm:$0xff] %vm279, 0.0
      %310 = vst.msk [vmem:[#allocation2 + $0xe8] sm:$0x3] %vm282, 0.0
      %311 = vst.msk [vmem:[#allocation2 + $0xf0] sm:$0xff] %vm279, 0.0
      %312 = vst.msk [vmem:[#allocation2 + $0xf8] sm:$0xff] %vm279, 0.0
      %313 = vst.msk [vmem:[#allocation2 + $0x100] sm:$0x3] %vm282, 0.0
      %314 = vst.msk [vmem:[#allocation2 + $0x108] sm:$0xff] %vm279, 0.0
      %315 = vst.msk [vmem:[#allocation2 + $0x110] sm:$0xff] %vm279, 0.0
      %316 = vst.msk [vmem:[#allocation2 + $0x118] sm:$0x3] %vm282, 0.0
      %317 = vst.msk [vmem:[#allocation2 + $0x120] sm:$0xff] %vm279, 0.0
      %318 = vst.msk [vmem:[#allocation2 + $0x128] sm:$0xff] %vm279, 0.0
      %319 = vst.msk [vmem:[#allocation2 + $0x130] sm:$0x3] %vm282, 0.0
      %320 = vst.msk [vmem:[#allocation2 + $0x138] sm:$0xff] %vm279, 0.0
      %321 = vst.msk [vmem:[#allocation2 + $0x140] sm:$0xff] %vm279, 0.0
      %322 = vst.msk [vmem:[#allocation2 + $0x148] sm:$0x3] %vm282, 0.0
      %323 = vst.msk [vmem:[#allocation2 + $0x150] sm:$0xff] %vm279, 0.0
      %324 = vst.msk [vmem:[#allocation2 + $0x158] sm:$0xff] %vm279, 0.0
      %325 = vst.msk [vmem:[#allocation2 + $0x160] sm:$0x3] %vm282, 0.0
      %326 = vst.msk [vmem:[#allocation2 + $0x168] sm:$0xff] %vm279, 0.0
      %327 = vst.msk [vmem:[#allocation2 + $0x170] sm:$0xff] %vm279, 0.0
      %328 = vst.msk [vmem:[#allocation2 + $0x178] sm:$0x3] %vm282, 0.0
      %329 = vst.msk [vmem:[#allocation2 + $0x180] sm:$0xff] %vm279, 0.0
      %330 = vst.msk [vmem:[#allocation2 + $0x188] sm:$0xff] %vm279, 0.0
      %331 = vst.msk [vmem:[#allocation2 + $0x190] sm:$0x3] %vm282, 0.0
      %332 = vst.msk [vmem:[#allocation2 + $0x198] sm:$0xff] %vm279, 0.0
      %333 = vst.msk [vmem:[#allocation2 + $0x1a0] sm:$0xff] %vm279, 0.0
      %334 = vst.msk [vmem:[#allocation2 + $0x1a8] sm:$0x3] %vm282, 0.0
      %v335 = vld [vmem:[%s273] sm:$0xff]
      %v336 = vld [vmem:[%s273 + $0x8] sm:$0xff]
      %v337 = vld [vmem:[%s273 + $0x10] sm:$0xff]
      %v338 = vld [vmem:[%s273 + $0x18] sm:$0xff]
      %v339 = vld [vmem:[%s273 + $0x20] sm:$0xff]
      %v340 = vld [vmem:[%s273 + $0x28] sm:$0xff]
      %v341 = vld [vmem:[%s273 + $0x30] sm:$0xff]
      %v342 = vld [vmem:[%s273 + $0x38] sm:$0xff]
      %v343 = vld [vmem:[%s273 + $0x40] sm:$0xff]
      %v344 = vld [vmem:[%s273 + $0x48] sm:$0xff]
      %v345 = vld [vmem:[%s273 + $0x50] sm:$0xff]
      %v346 = vld [vmem:[%s273 + $0x58] sm:$0xff]
      %v347 = vld [vmem:[%s273 + $0x60] sm:$0xff]
      %v348 = vld [vmem:[%s273 + $0x68] sm:$0xff]
      %v349 = vld [vmem:[%s273 + $0x70] sm:$0xff]
      %v350 = vld [vmem:[%s273 + $0x78] sm:$0xff]
      %v351 = vld [vmem:[%s273 + $0x80] sm:$0xff]
      %v352 = vld [vmem:[%s273 + $0x88] sm:$0xff]
      %v353 = vld [vmem:[%s273 + $0x90] sm:$0xff]
      %v354 = vld [vmem:[%s273 + $0x98] sm:$0xff]
      %v355 = vld [vmem:[%s273 + $0xa0] sm:$0xff]
      %v356 = vld [vmem:[%s273 + $0xa8] sm:$0xff]
      %v357 = vld [vmem:[%s273 + $0xb0] sm:$0xff]
      %v358 = vld [vmem:[%s273 + $0xb8] sm:$0xff]
      %v359 = vld [vmem:[%s273 + $0xc0] sm:$0xff]
      %v360 = vld [vmem:[%s273 + $0xc8] sm:$0xff]
      %v361 = vld [vmem:[%s273 + $0xd0] sm:$0xff]
      %v362 = vld [vmem:[%s273 + $0xd8] sm:$0xff]
      %v363 = vld [vmem:[%s273 + $0xe0] sm:$0xff]
      %v364 = vld [vmem:[%s273 + $0xe8] sm:$0xff]
      %v365 = vld [vmem:[%s273 + $0xf0] sm:$0xff]
      %v366 = vld [vmem:[%s273 + $0xf8] sm:$0xff]
      %s367 = scalar_lea.vmem [#allocation2], 24
      %368 = vst.msk [vmem:[%s367 + $0x1] sm:$0xff] %vm279, %v335
      %369 = vst.msk [vmem:[%s367 + $0x9] sm:$0xff] %vm279, %v336
      %370 = vst.msk [vmem:[%s367 + $0x19] sm:$0xff] %vm279, %v337
      %371 = vst.msk [vmem:[%s367 + $0x21] sm:$0xff] %vm279, %v338
      %372 = vst.msk [vmem:[%s367 + $0x31] sm:$0xff] %vm279, %v339
      %373 = vst.msk [vmem:[%s367 + $0x39] sm:$0xff] %vm279, %v340
      %374 = vst.msk [vmem:[%s367 + $0x49] sm:$0xff] %vm279, %v341
      %375 = vst.msk [vmem:[%s367 + $0x51] sm:$0xff] %vm279, %v342
      %376 = vst.msk [vmem:[%s367 + $0x61] sm:$0xff] %vm279, %v343
      %377 = vst.msk [vmem:[%s367 + $0x69] sm:$0xff] %vm279, %v344
      %378 = vst.msk [vmem:[%s367 + $0x79] sm:$0xff] %vm279, %v345
      %379 = vst.msk [vmem:[%s367 + $0x81] sm:$0xff] %vm279, %v346
      %380 = vst.msk [vmem:[%s367 + $0x91] sm:$0xff] %vm279, %v347
      %381 = vst.msk [vmem:[%s367 + $0x99] sm:$0xff] %vm279, %v348
      %382 = vst.msk [vmem:[%s367 + $0xa9] sm:$0xff] %vm279, %v349
      %383 = vst.msk [vmem:[%s367 + $0xb1] sm:$0xff] %vm279, %v350
      %384 = vst.msk [vmem:[%s367 + $0xc1] sm:$0xff] %vm279, %v351
      %385 = vst.msk [vmem:[%s367 + $0xc9] sm:$0xff] %vm279, %v352
      %386 = vst.msk [vmem:[%s367 + $0xd9] sm:$0xff] %vm279, %v353
      %387 = vst.msk [vmem:[%s367 + $0xe1] sm:$0xff] %vm279, %v354
      %388 = vst.msk [vmem:[%s367 + $0xf1] sm:$0xff] %vm279, %v355
      %389 = vst.msk [vmem:[%s367 + $0xf9] sm:$0xff] %vm279, %v356
      %390 = vst.msk [vmem:[%s367 + $0x109] sm:$0xff] %vm279, %v357
      %391 = vst.msk [vmem:[%s367 + $0x111] sm:$0xff] %vm279, %v358
      %392 = vst.msk [vmem:[%s367 + $0x121] sm:$0xff] %vm279, %v359
      %393 = vst.msk [vmem:[%s367 + $0x129] sm:$0xff] %vm279, %v360
      %394 = vst.msk [vmem:[%s367 + $0x139] sm:$0xff] %vm279, %v361
      %395 = vst.msk [vmem:[%s367 + $0x141] sm:$0xff] %vm279, %v362
      %396 = vst.msk [vmem:[%s367 + $0x151] sm:$0xff] %vm279, %v363
      %397 = vst.msk [vmem:[%s367 + $0x159] sm:$0xff] %vm279, %v364
      %398 = vst.msk [vmem:[%s367 + $0x169] sm:$0xff] %vm279, %v365
      %399 = vst.msk [vmem:[%s367 + $0x171] sm:$0xff] %vm279, %v366
      %v400 = vld [vmem:[#allocation2] sm:$0xff]
      %v401 = vld [vmem:[#allocation2 + $0x8] sm:$0xff]
      %v402 = vld [vmem:[#allocation2 + $0x18] sm:$0xff]
      %v403 = vld [vmem:[#allocation2 + $0x20] sm:$0xff]
      %v404 = vld [vmem:[#allocation2 + $0x30] sm:$0xff]
      %v405 = vld [vmem:[#allocation2 + $0x38] sm:$0xff]
      %v406 = vld [vmem:[#allocation2 + $0x48] sm:$0xff]
      %v407 = vld [vmem:[#allocation2 + $0x50] sm:$0xff]
      %v408 = vld [vmem:[#allocation2 + $0x60] sm:$0xff]
      %v409 = vld [vmem:[#allocation2 + $0x68] sm:$0xff]
      %v410 = vld [vmem:[#allocation2 + $0x78] sm:$0xff]
      %v411 = vld [vmem:[#allocation2 + $0x80] sm:$0xff]
      %v412 = vld [vmem:[#allocation2 + $0x90] sm:$0xff]
      %v413 = vld [vmem:[#allocation2 + $0x98] sm:$0xff]
      %v414 = vld [vmem:[#allocation2 + $0xa8] sm:$0xff]
      %v415 = vld [vmem:[#allocation2 + $0xb0] sm:$0xff]
      %v416 = vld [vmem:[#allocation2 + $0xc0] sm:$0xff]
      %v417 = vld [vmem:[#allocation2 + $0xc8] sm:$0xff]
      %v418 = vld [vmem:[#allocation2 + $0xd8] sm:$0xff]
      %v419 = vld [vmem:[#allocation2 + $0xe0] sm:$0xff]
      %v420 = vld [vmem:[#allocation2 + $0xf0] sm:$0xff]
      %v421 = vld [vmem:[#allocation2 + $0xf8] sm:$0xff]
      %v422 = vld [vmem:[#allocation2 + $0x108] sm:$0xff]
      %v423 = vld [vmem:[#allocation2 + $0x110] sm:$0xff]
      %v424 = vld [vmem:[#allocation2 + $0x120] sm:$0xff]
      %v425 = vld [vmem:[#allocation2 + $0x128] sm:$0xff]
      %v426 = vld [vmem:[#allocation2 + $0x138] sm:$0xff]
      %v427 = vld [vmem:[#allocation2 + $0x140] sm:$0xff]
      %v428 = vld [vmem:[#allocation2 + $0x150] sm:$0xff]
      %v429 = vld [vmem:[#allocation2 + $0x158] sm:$0xff]
      %v430 = vld [vmem:[#allocation2 + $0x168] sm:$0xff]
      %v431 = vld [vmem:[#allocation2 + $0x170] sm:$0xff]
      %432 = vst.msk [vmem:[#allocation4] sm:$0xff] %vm279, %v400
      %433 = vst.msk [vmem:[#allocation4 + $0x8] sm:$0xff] %vm279, %v401
      %434 = vst.msk [vmem:[#allocation4 + $0x10] sm:$0xff] %vm279, %v402
      %435 = vst.msk [vmem:[#allocation4 + $0x18] sm:$0xff] %vm279, %v403
      %436 = vst.msk [vmem:[#allocation4 + $0x20] sm:$0xff] %vm279, %v404
      %437 = vst.msk [vmem:[#allocation4 + $0x28] sm:$0xff] %vm279, %v405
      %438 = vst.msk [vmem:[#allocation4 + $0x30] sm:$0xff] %vm279, %v406
      %439 = vst.msk [vmem:[#allocation4 + $0x38] sm:$0xff] %vm279, %v407
      %440 = vst.msk [vmem:[#allocation4 + $0x40] sm:$0xff] %vm279, %v408
      %441 = vst.msk [vmem:[#allocation4 + $0x48] sm:$0xff] %vm279, %v409
      %442 = vst.msk [vmem:[#allocation4 + $0x50] sm:$0xff] %vm279, %v410
      %443 = vst.msk [vmem:[#allocation4 + $0x58] sm:$0xff] %vm279, %v411
      %444 = vst.msk [vmem:[#allocation4 + $0x60] sm:$0xff] %vm279, %v412
      %445 = vst.msk [vmem:[#allocation4 + $0x68] sm:$0xff] %vm279, %v413
      %446 = vst.msk [vmem:[#allocation4 + $0x70] sm:$0xff] %vm279, %v414
      %447 = vst.msk [vmem:[#allocation4 + $0x78] sm:$0xff] %vm279, %v415
      %448 = vst.msk [vmem:[#allocation4 + $0x80] sm:$0xff] %vm279, %v416
      %449 = vst.msk [vmem:[#allocation4 + $0x88] sm:$0xff] %vm279, %v417
      %450 = vst.msk [vmem:[#allocation4 + $0x90] sm:$0xff] %vm279, %v418
      %451 = vst.msk [vmem:[#allocation4 + $0x98] sm:$0xff] %vm279, %v419
      %452 = vst.msk [vmem:[#allocation4 + $0xa0] sm:$0xff] %vm279, %v420
      %453 = vst.msk [vmem:[#allocation4 + $0xa8] sm:$0xff] %vm279, %v421
      %454 = vst.msk [vmem:[#allocation4 + $0xb0] sm:$0xff] %vm279, %v422
      %455 = vst.msk [vmem:[#allocation4 + $0xb8] sm:$0xff] %vm279, %v423
      %456 = vst.msk [vmem:[#allocation4 + $0xc0] sm:$0xff] %vm279, %v424
      %457 = vst.msk [vmem:[#allocation4 + $0xc8] sm:$0xff] %vm279, %v425
      %458 = vst.msk [vmem:[#allocation4 + $0xd0] sm:$0xff] %vm279, %v426
      %459 = vst.msk [vmem:[#allocation4 + $0xd8] sm:$0xff] %vm279, %v427
      %460 = vst.msk [vmem:[#allocation4 + $0xe0] sm:$0xff] %vm279, %v428
      %461 = vst.msk [vmem:[#allocation4 + $0xe8] sm:$0xff] %vm279, %v429
      %462 = vst.msk [vmem:[#allocation4 + $0xf0] sm:$0xff] %vm279, %v430
      %463 = vst.msk [vmem:[#allocation4 + $0xf8] sm:$0xff] %vm279, %v431
      %v464 = vld [vmem:[#allocation2 + $0x1] sm:$0xff]
      %v465 = vld [vmem:[#allocation2 + $0x9] sm:$0xff]
      %v466 = vld [vmem:[#allocation2 + $0x19] sm:$0xff]
      %v467 = vld [vmem:[#allocation2 + $0x21] sm:$0xff]
      %v468 = vld [vmem:[#allocation2 + $0x31] sm:$0xff]
      %v469 = vld [vmem:[#allocation2 + $0x39] sm:$0xff]
      %v470 = vld [vmem:[#allocation2 + $0x49] sm:$0xff]
      %v471 = vld [vmem:[#allocation2 + $0x51] sm:$0xff]
      %v472 = vld [vmem:[#allocation2 + $0x61] sm:$0xff]
      %v473 = vld [vmem:[#allocation2 + $0x69] sm:$0xff]
      %v474 = vld [vmem:[#allocation2 + $0x79] sm:$0xff]
      %v475 = vld [vmem:[#allocation2 + $0x81] sm:$0xff]
      %v476 = vld [vmem:[#allocation2 + $0x91] sm:$0xff]
      %v477 = vld [vmem:[#allocation2 + $0x99] sm:$0xff]
      %v478 = vld [vmem:[#allocation2 + $0xa9] sm:$0xff]
      %v479 = vld [vmem:[#allocation2 + $0xb1] sm:$0xff]
      %v480 = vld [vmem:[#allocation2 + $0xc1] sm:$0xff]
      %v481 = vld [vmem:[#allocation2 + $0xc9] sm:$0xff]
      %v482 = vld [vmem:[#allocation2 + $0xd9] sm:$0xff]
      %v483 = vld [vmem:[#allocation2 + $0xe1] sm:$0xff]
      %v484 = vld [vmem:[#allocation2 + $0xf1] sm:$0xff]
      %v485 = vld [vmem:[#allocation2 + $0xf9] sm:$0xff]
      %v486 = vld [vmem:[#allocation2 + $0x109] sm:$0xff]
      %v487 = vld [vmem:[#allocation2 + $0x111] sm:$0xff]
      %v488 = vld [vmem:[#allocation2 + $0x121] sm:$0xff]
      %v489 = vld [vmem:[#allocation2 + $0x129] sm:$0xff]
      %v490 = vld [vmem:[#allocation2 + $0x139] sm:$0xff]
      %v491 = vld [vmem:[#allocation2 + $0x141] sm:$0xff]
      %v492 = vld [vmem:[#allocation2 + $0x151] sm:$0xff]
      %v493 = vld [vmem:[#allocation2 + $0x159] sm:$0xff]
      %v494 = vld [vmem:[#allocation2 + $0x169] sm:$0xff]
      %v495 = vld [vmem:[#allocation2 + $0x171] sm:$0xff]
      %528 = vrot.lane.b32.xlu0 %v464, 4
      %v529 = vpop.permute.xlu0 %528
      %530 = vrot.lane.b32.xlu0 %v465, 4
      %v531 = vpop.permute.xlu0 %530
      %532 = vrot.lane.b32.xlu0 %v466, 4
      %v533 = vpop.permute.xlu0 %532
      %534 = vrot.lane.b32.xlu0 %v467, 4
      %v535 = vpop.permute.xlu0 %534
      %536 = vrot.lane.b32.xlu0 %v468, 4
      %v537 = vpop.permute.xlu0 %536
      %538 = vrot.lane.b32.xlu0 %v469, 4
      %v539 = vpop.permute.xlu0 %538
      %540 = vrot.lane.b32.xlu0 %v470, 4
      %v541 = vpop.permute.xlu0 %540
      %542 = vrot.lane.b32.xlu0 %v471, 4
      %v543 = vpop.permute.xlu0 %542
      %544 = vrot.lane.b32.xlu0 %v472, 4
      %v545 = vpop.permute.xlu0 %544
      %546 = vrot.lane.b32.xlu0 %v473, 4
      %v547 = vpop.permute.xlu0 %546
      %548 = vrot.lane.b32.xlu0 %v474, 4
      %v549 = vpop.permute.xlu0 %548
      %550 = vrot.lane.b32.xlu0 %v475, 4
      %v551 = vpop.permute.xlu0 %550
      %552 = vrot.lane.b32.xlu0 %v476, 4
      %v553 = vpop.permute.xlu0 %552
      %554 = vrot.lane.b32.xlu0 %v477, 4
      %v555 = vpop.permute.xlu0 %554
      %556 = vrot.lane.b32.xlu0 %v478, 4
      %v557 = vpop.permute.xlu0 %556
      %558 = vrot.lane.b32.xlu0 %v479, 4
      %v559 = vpop.permute.xlu0 %558
      %560 = vrot.lane.b32.xlu0 %v480, 4
      %v561 = vpop.permute.xlu0 %560
      %562 = vrot.lane.b32.xlu0 %v481, 4
      %v563 = vpop.permute.xlu0 %562
      %564 = vrot.lane.b32.xlu0 %v482, 4
      %v565 = vpop.permute.xlu0 %564
      %566 = vrot.lane.b32.xlu0 %v483, 4
      %v567 = vpop.permute.xlu0 %566
      %568 = vrot.lane.b32.xlu0 %v484, 4
      %v569 = vpop.permute.xlu0 %568
      %570 = vrot.lane.b32.xlu0 %v485, 4
      %v571 = vpop.permute.xlu0 %570
      %572 = vrot.lane.b32.xlu0 %v486, 4
      %v573 = vpop.permute.xlu0 %572
      %574 = vrot.lane.b32.xlu0 %v487, 4
      %v575 = vpop.permute.xlu0 %574
      %576 = vrot.lane.b32.xlu0 %v488, 4
      %v577 = vpop.permute.xlu0 %576
      %578 = vrot.lane.b32.xlu0 %v489, 4
      %v579 = vpop.permute.xlu0 %578
      %580 = vrot.lane.b32.xlu0 %v490, 4
      %v581 = vpop.permute.xlu0 %580
      %582 = vrot.lane.b32.xlu0 %v491, 4
      %v583 = vpop.permute.xlu0 %582
      %584 = vrot.lane.b32.xlu0 %v492, 4
      %v585 = vpop.permute.xlu0 %584
      %586 = vrot.lane.b32.xlu0 %v493, 4
      %v587 = vpop.permute.xlu0 %586
      %588 = vrot.lane.b32.xlu0 %v494, 4
      %v589 = vpop.permute.xlu0 %588
      %590 = vrot.lane.b32.xlu0 %v495, 4
      %v591 = vpop.permute.xlu0 %590
      %vm624 = vcmask 64544
      %625 = vst.msk [vmem:[#allocation4] sm:$0xff] %vm624, %v529
      %626 = vst.msk [vmem:[#allocation4 + $0x8] sm:$0xff] %vm624, %v531
      %627 = vst.msk [vmem:[#allocation4 + $0x10] sm:$0xff] %vm624, %v533
      %628 = vst.msk [vmem:[#allocation4 + $0x18] sm:$0xff] %vm624, %v535
      %629 = vst.msk [vmem:[#allocation4 + $0x20] sm:$0xff] %vm624, %v537
      %630 = vst.msk [vmem:[#allocation4 + $0x28] sm:$0xff] %vm624, %v539
      %631 = vst.msk [vmem:[#allocation4 + $0x30] sm:$0xff] %vm624, %v541
      %632 = vst.msk [vmem:[#allocation4 + $0x38] sm:$0xff] %vm624, %v543
      %633 = vst.msk [vmem:[#allocation4 + $0x40] sm:$0xff] %vm624, %v545
      %634 = vst.msk [vmem:[#allocation4 + $0x48] sm:$0xff] %vm624, %v547
      %635 = vst.msk [vmem:[#allocation4 + $0x50] sm:$0xff] %vm624, %v549
      %636 = vst.msk [vmem:[#allocation4 + $0x58] sm:$0xff] %vm624, %v551
      %637 = vst.msk [vmem:[#allocation4 + $0x60] sm:$0xff] %vm624, %v553
      %638 = vst.msk [vmem:[#allocation4 + $0x68] sm:$0xff] %vm624, %v555
      %639 = vst.msk [vmem:[#allocation4 + $0x70] sm:$0xff] %vm624, %v557
      %640 = vst.msk [vmem:[#allocation4 + $0x78] sm:$0xff] %vm624, %v559
      %641 = vst.msk [vmem:[#allocation4 + $0x80] sm:$0xff] %vm624, %v561
      %642 = vst.msk [vmem:[#allocation4 + $0x88] sm:$0xff] %vm624, %v563
      %643 = vst.msk [vmem:[#allocation4 + $0x90] sm:$0xff] %vm624, %v565
      %644 = vst.msk [vmem:[#allocation4 + $0x98] sm:$0xff] %vm624, %v567
      %645 = vst.msk [vmem:[#allocation4 + $0xa0] sm:$0xff] %vm624, %v569
      %646 = vst.msk [vmem:[#allocation4 + $0xa8] sm:$0xff] %vm624, %v571
      %647 = vst.msk [vmem:[#allocation4 + $0xb0] sm:$0xff] %vm624, %v573
      %648 = vst.msk [vmem:[#allocation4 + $0xb8] sm:$0xff] %vm624, %v575
      %649 = vst.msk [vmem:[#allocation4 + $0xc0] sm:$0xff] %vm624, %v577
      %650 = vst.msk [vmem:[#allocation4 + $0xc8] sm:$0xff] %vm624, %v579
      %651 = vst.msk [vmem:[#allocation4 + $0xd0] sm:$0xff] %vm624, %v581
      %652 = vst.msk [vmem:[#allocation4 + $0xd8] sm:$0xff] %vm624, %v583
      %653 = vst.msk [vmem:[#allocation4 + $0xe0] sm:$0xff] %vm624, %v585
      %654 = vst.msk [vmem:[#allocation4 + $0xe8] sm:$0xff] %vm624, %v587
      %655 = vst.msk [vmem:[#allocation4 + $0xf0] sm:$0xff] %vm624, %v589
      %656 = vst.msk [vmem:[#allocation4 + $0xf8] sm:$0xff] %vm624, %v591
      %v657 = vld [vmem:[#allocation2 + $0x2] sm:$0xff]
      %v658 = vld [vmem:[#allocation2 + $0xa] sm:$0xff]
      %v659 = vld [vmem:[#allocation2 + $0x1a] sm:$0xff]
      %v660 = vld [vmem:[#allocation2 + $0x22] sm:$0xff]
      %v661 = vld [vmem:[#allocation2 + $0x32] sm:$0xff]
      %v662 = vld [vmem:[#allocation2 + $0x3a] sm:$0xff]
      %v663 = vld [vmem:[#allocation2 + $0x4a] sm:$0xff]
      %v664 = vld [vmem:[#allocation2 + $0x52] sm:$0xff]
      %v665 = vld [vmem:[#allocation2 + $0x62] sm:$0xff]
      %v666 = vld [vmem:[#allocation2 + $0x6a] sm:$0xff]
      %v667 = vld [vmem:[#allocation2 + $0x7a] sm:$0xff]
      %v668 = vld [vmem:[#allocation2 + $0x82] sm:$0xff]
      %v669 = vld [vmem:[#allocation2 + $0x92] sm:$0xff]
      %v670 = vld [vmem:[#allocation2 + $0x9a] sm:$0xff]
      %v671 = vld [vmem:[#allocation2 + $0xaa] sm:$0xff]
      %v672 = vld [vmem:[#allocation2 + $0xb2] sm:$0xff]
      %v673 = vld [vmem:[#allocation2 + $0xc2] sm:$0xff]
      %v674 = vld [vmem:[#allocation2 + $0xca] sm:$0xff]
      %v675 = vld [vmem:[#allocation2 + $0xda] sm:$0xff]
      %v676 = vld [vmem:[#allocation2 + $0xe2] sm:$0xff]
      %v677 = vld [vmem:[#allocation2 + $0xf2] sm:$0xff]
      %v678 = vld [vmem:[#allocation2 + $0xfa] sm:$0xff]
      %v679 = vld [vmem:[#allocation2 + $0x10a] sm:$0xff]
      %v680 = vld [vmem:[#allocation2 + $0x112] sm:$0xff]
      %v681 = vld [vmem:[#allocation2 + $0x122] sm:$0xff]
      %v682 = vld [vmem:[#allocation2 + $0x12a] sm:$0xff]
      %v683 = vld [vmem:[#allocation2 + $0x13a] sm:$0xff]
      %v684 = vld [vmem:[#allocation2 + $0x142] sm:$0xff]
      %v685 = vld [vmem:[#allocation2 + $0x152] sm:$0xff]
      %v686 = vld [vmem:[#allocation2 + $0x15a] sm:$0xff]
      %v687 = vld [vmem:[#allocation2 + $0x16a] sm:$0xff]
      %v688 = vld [vmem:[#allocation2 + $0x172] sm:$0xff]
      %721 = vrot.lane.b32.xlu0 %v657, 8
      %v722 = vpop.permute.xlu0 %721
      %723 = vrot.lane.b32.xlu0 %v658, 8
      %v724 = vpop.permute.xlu0 %723
      %725 = vrot.lane.b32.xlu0 %v659, 8
      %v726 = vpop.permute.xlu0 %725
      %727 = vrot.lane.b32.xlu0 %v660, 8
      %v728 = vpop.permute.xlu0 %727
      %729 = vrot.lane.b32.xlu0 %v661, 8
      %v730 = vpop.permute.xlu0 %729
      %731 = vrot.lane.b32.xlu0 %v662, 8
      %v732 = vpop.permute.xlu0 %731
      %733 = vrot.lane.b32.xlu0 %v663, 8
      %v734 = vpop.permute.xlu0 %733
      %735 = vrot.lane.b32.xlu0 %v664, 8
      %v736 = vpop.permute.xlu0 %735
      %737 = vrot.lane.b32.xlu0 %v665, 8
      %v738 = vpop.permute.xlu0 %737
      %739 = vrot.lane.b32.xlu0 %v666, 8
      %v740 = vpop.permute.xlu0 %739
      %741 = vrot.lane.b32.xlu0 %v667, 8
      %v742 = vpop.permute.xlu0 %741
      %743 = vrot.lane.b32.xlu0 %v668, 8
      %v744 = vpop.permute.xlu0 %743
      %745 = vrot.lane.b32.xlu0 %v669, 8
      %v746 = vpop.permute.xlu0 %745
      %747 = vrot.lane.b32.xlu0 %v670, 8
      %v748 = vpop.permute.xlu0 %747
      %749 = vrot.lane.b32.xlu0 %v671, 8
      %v750 = vpop.permute.xlu0 %749
      %751 = vrot.lane.b32.xlu0 %v672, 8
      %v752 = vpop.permute.xlu0 %751
      %753 = vrot.lane.b32.xlu0 %v673, 8
      %v754 = vpop.permute.xlu0 %753
      %755 = vrot.lane.b32.xlu0 %v674, 8
      %v756 = vpop.permute.xlu0 %755
      %757 = vrot.lane.b32.xlu0 %v675, 8
      %v758 = vpop.permute.xlu0 %757
      %759 = vrot.lane.b32.xlu0 %v676, 8
      %v760 = vpop.permute.xlu0 %759
      %761 = vrot.lane.b32.xlu0 %v677, 8
      %v762 = vpop.permute.xlu0 %761
      %763 = vrot.lane.b32.xlu0 %v678, 8
      %v764 = vpop.permute.xlu0 %763
      %765 = vrot.lane.b32.xlu0 %v679, 8
      %v766 = vpop.permute.xlu0 %765
      %767 = vrot.lane.b32.xlu0 %v680, 8
      %v768 = vpop.permute.xlu0 %767
      %769 = vrot.lane.b32.xlu0 %v681, 8
      %v770 = vpop.permute.xlu0 %769
      %771 = vrot.lane.b32.xlu0 %v682, 8
      %v772 = vpop.permute.xlu0 %771
      %773 = vrot.lane.b32.xlu0 %v683, 8
      %v774 = vpop.permute.xlu0 %773
      %775 = vrot.lane.b32.xlu0 %v684, 8
      %v776 = vpop.permute.xlu0 %775
      %777 = vrot.lane.b32.xlu0 %v685, 8
      %v778 = vpop.permute.xlu0 %777
      %779 = vrot.lane.b32.xlu0 %v686, 8
      %v780 = vpop.permute.xlu0 %779
      %781 = vrot.lane.b32.xlu0 %v687, 8
      %v782 = vpop.permute.xlu0 %781
      %783 = vrot.lane.b32.xlu0 %v688, 8
      %v784 = vpop.permute.xlu0 %783
      %vm817 = vcmask 97344
      %818 = vst.msk [vmem:[#allocation4] sm:$0xff] %vm817, %v722
      %819 = vst.msk [vmem:[#allocation4 + $0x8] sm:$0xff] %vm817, %v724
      %820 = vst.msk [vmem:[#allocation4 + $0x10] sm:$0xff] %vm817, %v726
      %821 = vst.msk [vmem:[#allocation4 + $0x18] sm:$0xff] %vm817, %v728
      %822 = vst.msk [vmem:[#allocation4 + $0x20] sm:$0xff] %vm817, %v730
      %823 = vst.msk [vmem:[#allocation4 + $0x28] sm:$0xff] %vm817, %v732
      %824 = vst.msk [vmem:[#allocation4 + $0x30] sm:$0xff] %vm817, %v734
      %825 = vst.msk [vmem:[#allocation4 + $0x38] sm:$0xff] %vm817, %v736
      %826 = vst.msk [vmem:[#allocation4 + $0x40] sm:$0xff] %vm817, %v738
      %827 = vst.msk [vmem:[#allocation4 + $0x48] sm:$0xff] %vm817, %v740
      %828 = vst.msk [vmem:[#allocation4 + $0x50] sm:$0xff] %vm817, %v742
      %829 = vst.msk [vmem:[#allocation4 + $0x58] sm:$0xff] %vm817, %v744
      %830 = vst.msk [vmem:[#allocation4 + $0x60] sm:$0xff] %vm817, %v746
      %831 = vst.msk [vmem:[#allocation4 + $0x68] sm:$0xff] %vm817, %v748
      %832 = vst.msk [vmem:[#allocation4 + $0x70] sm:$0xff] %vm817, %v750
      %833 = vst.msk [vmem:[#allocation4 + $0x78] sm:$0xff] %vm817, %v752
      %834 = vst.msk [vmem:[#allocation4 + $0x80] sm:$0xff] %vm817, %v754
      %835 = vst.msk [vmem:[#allocation4 + $0x88] sm:$0xff] %vm817, %v756
      %836 = vst.msk [vmem:[#allocation4 + $0x90] sm:$0xff] %vm817, %v758
      %837 = vst.msk [vmem:[#allocation4 + $0x98] sm:$0xff] %vm817, %v760
      %838 = vst.msk [vmem:[#allocation4 + $0xa0] sm:$0xff] %vm817, %v762
      %839 = vst.msk [vmem:[#allocation4 + $0xa8] sm:$0xff] %vm817, %v764
      %840 = vst.msk [vmem:[#allocation4 + $0xb0] sm:$0xff] %vm817, %v766
      %841 = vst.msk [vmem:[#allocation4 + $0xb8] sm:$0xff] %vm817, %v768
      %842 = vst.msk [vmem:[#allocation4 + $0xc0] sm:$0xff] %vm817, %v770
      %843 = vst.msk [vmem:[#allocation4 + $0xc8] sm:$0xff] %vm817, %v772
      %844 = vst.msk [vmem:[#allocation4 + $0xd0] sm:$0xff] %vm817, %v774
      %845 = vst.msk [vmem:[#allocation4 + $0xd8] sm:$0xff] %vm817, %v776
      %846 = vst.msk [vmem:[#allocation4 + $0xe0] sm:$0xff] %vm817, %v778
      %847 = vst.msk [vmem:[#allocation4 + $0xe8] sm:$0xff] %vm817, %v780
      %848 = vst.msk [vmem:[#allocation4 + $0xf0] sm:$0xff] %vm817, %v782
      %849 = vst.msk [vmem:[#allocation4 + $0xf8] sm:$0xff] %vm817, %v784
      %v850 = vld [vmem:[%s367] sm:$0xff]
      %v851 = vld [vmem:[%s367 + $0x8] sm:$0xff]
      %v852 = vld [vmem:[%s367 + $0x18] sm:$0xff]
      %v853 = vld [vmem:[%s367 + $0x20] sm:$0xff]
      %v854 = vld [vmem:[%s367 + $0x30] sm:$0xff]
      %v855 = vld [vmem:[%s367 + $0x38] sm:$0xff]
      %v856 = vld [vmem:[%s367 + $0x48] sm:$0xff]
      %v857 = vld [vmem:[%s367 + $0x50] sm:$0xff]
      %v858 = vld [vmem:[%s367 + $0x60] sm:$0xff]
      %v859 = vld [vmem:[%s367 + $0x68] sm:$0xff]
      %v860 = vld [vmem:[%s367 + $0x78] sm:$0xff]
      %v861 = vld [vmem:[%s367 + $0x80] sm:$0xff]
      %v862 = vld [vmem:[%s367 + $0x90] sm:$0xff]
      %v863 = vld [vmem:[%s367 + $0x98] sm:$0xff]
      %v864 = vld [vmem:[%s367 + $0xa8] sm:$0xff]
      %v865 = vld [vmem:[%s367 + $0xb0] sm:$0xff]
      %v866 = vld [vmem:[%s367 + $0xc0] sm:$0xff]
      %v867 = vld [vmem:[%s367 + $0xc8] sm:$0xff]
      %v868 = vld [vmem:[%s367 + $0xd8] sm:$0xff]
      %v869 = vld [vmem:[%s367 + $0xe0] sm:$0xff]
      %v870 = vld [vmem:[%s367 + $0xf0] sm:$0xff]
      %v871 = vld [vmem:[%s367 + $0xf8] sm:$0xff]
      %v872 = vld [vmem:[%s367 + $0x108] sm:$0xff]
      %v873 = vld [vmem:[%s367 + $0x110] sm:$0xff]
      %v874 = vld [vmem:[%s367 + $0x120] sm:$0xff]
      %v875 = vld [vmem:[%s367 + $0x128] sm:$0xff]
      %v876 = vld [vmem:[%s367 + $0x138] sm:$0xff]
      %v877 = vld [vmem:[%s367 + $0x140] sm:$0xff]
      %v878 = vld [vmem:[%s367 + $0x150] sm:$0xff]
      %v879 = vld [vmem:[%s367 + $0x158] sm:$0xff]
      %v880 = vld [vmem:[%s367 + $0x168] sm:$0xff]
      %v881 = vld [vmem:[%s367 + $0x170] sm:$0xff]
      %914 = vrot.lane.b32.xlu0 %v850, 12
      %v915 = vpop.permute.xlu0 %914
      %916 = vrot.lane.b32.xlu0 %v851, 12
      %v917 = vpop.permute.xlu0 %916
      %918 = vrot.lane.b32.xlu0 %v852, 12
      %v919 = vpop.permute.xlu0 %918
      %920 = vrot.lane.b32.xlu0 %v853, 12
      %v921 = vpop.permute.xlu0 %920
      %922 = vrot.lane.b32.xlu0 %v854, 12
      %v923 = vpop.permute.xlu0 %922
      %924 = vrot.lane.b32.xlu0 %v855, 12
      %v925 = vpop.permute.xlu0 %924
      %926 = vrot.lane.b32.xlu0 %v856, 12
      %v927 = vpop.permute.xlu0 %926
      %928 = vrot.lane.b32.xlu0 %v857, 12
      %v929 = vpop.permute.xlu0 %928
      %930 = vrot.lane.b32.xlu0 %v858, 12
      %v931 = vpop.permute.xlu0 %930
      %932 = vrot.lane.b32.xlu0 %v859, 12
      %v933 = vpop.permute.xlu0 %932
      %934 = vrot.lane.b32.xlu0 %v860, 12
      %v935 = vpop.permute.xlu0 %934
      %936 = vrot.lane.b32.xlu0 %v861, 12
      %v937 = vpop.permute.xlu0 %936
      %938 = vrot.lane.b32.xlu0 %v862, 12
      %v939 = vpop.permute.xlu0 %938
      %940 = vrot.lane.b32.xlu0 %v863, 12
      %v941 = vpop.permute.xlu0 %940
      %942 = vrot.lane.b32.xlu0 %v864, 12
      %v943 = vpop.permute.xlu0 %942
      %944 = vrot.lane.b32.xlu0 %v865, 12
      %v945 = vpop.permute.xlu0 %944
      %946 = vrot.lane.b32.xlu0 %v866, 12
      %v947 = vpop.permute.xlu0 %946
      %948 = vrot.lane.b32.xlu0 %v867, 12
      %v949 = vpop.permute.xlu0 %948
      %950 = vrot.lane.b32.xlu0 %v868, 12
      %v951 = vpop.permute.xlu0 %950
      %952 = vrot.lane.b32.xlu0 %v869, 12
      %v953 = vpop.permute.xlu0 %952
      %954 = vrot.lane.b32.xlu0 %v870, 12
      %v955 = vpop.permute.xlu0 %954
      %956 = vrot.lane.b32.xlu0 %v871, 12
      %v957 = vpop.permute.xlu0 %956
      %958 = vrot.lane.b32.xlu0 %v872, 12
      %v959 = vpop.permute.xlu0 %958
      %960 = vrot.lane.b32.xlu0 %v873, 12
      %v961 = vpop.permute.xlu0 %960
      %962 = vrot.lane.b32.xlu0 %v874, 12
      %v963 = vpop.permute.xlu0 %962
      %964 = vrot.lane.b32.xlu0 %v875, 12
      %v965 = vpop.permute.xlu0 %964
      %966 = vrot.lane.b32.xlu0 %v876, 12
      %v967 = vpop.permute.xlu0 %966
      %968 = vrot.lane.b32.xlu0 %v877, 12
      %v969 = vpop.permute.xlu0 %968
      %970 = vrot.lane.b32.xlu0 %v878, 12
      %v971 = vpop.permute.xlu0 %970
      %972 = vrot.lane.b32.xlu0 %v879, 12
      %v973 = vpop.permute.xlu0 %972
      %974 = vrot.lane.b32.xlu0 %v880, 12
      %v975 = vpop.permute.xlu0 %974
      %976 = vrot.lane.b32.xlu0 %v881, 12
      %v977 = vpop.permute.xlu0 %976
      %vm1010 = vcmask 130144
      %1011 = vst.msk [vmem:[#allocation4] sm:$0xff] %vm1010, %v915
      %1012 = vst.msk [vmem:[#allocation4 + $0x8] sm:$0xff] %vm1010, %v917
      %1013 = vst.msk [vmem:[#allocation4 + $0x10] sm:$0xff] %vm1010, %v919
      %1014 = vst.msk [vmem:[#allocation4 + $0x18] sm:$0xff] %vm1010, %v921
      %1015 = vst.msk [vmem:[#allocation4 + $0x20] sm:$0xff] %vm1010, %v923
      %1016 = vst.msk [vmem:[#allocation4 + $0x28] sm:$0xff] %vm1010, %v925
      %1017 = vst.msk [vmem:[#allocation4 + $0x30] sm:$0xff] %vm1010, %v927
      %1018 = vst.msk [vmem:[#allocation4 + $0x38] sm:$0xff] %vm1010, %v929
      %1019 = vst.msk [vmem:[#allocation4 + $0x40] sm:$0xff] %vm1010, %v931
      %1020 = vst.msk [vmem:[#allocation4 + $0x48] sm:$0xff] %vm1010, %v933
      %1021 = vst.msk [vmem:[#allocation4 + $0x50] sm:$0xff] %vm1010, %v935
      %1022 = vst.msk [vmem:[#allocation4 + $0x58] sm:$0xff] %vm1010, %v937
      %1023 = vst.msk [vmem:[#allocation4 + $0x60] sm:$0xff] %vm1010, %v939
      %1024 = vst.msk [vmem:[#allocation4 + $0x68] sm:$0xff] %vm1010, %v941
      %1025 = vst.msk [vmem:[#allocation4 + $0x70] sm:$0xff] %vm1010, %v943
      %1026 = vst.msk [vmem:[#allocation4 + $0x78] sm:$0xff] %vm1010, %v945
      %1027 = vst.msk [vmem:[#allocation4 + $0x80] sm:$0xff] %vm1010, %v947
      %1028 = vst.msk [vmem:[#allocation4 + $0x88] sm:$0xff] %vm1010, %v949
      %1029 = vst.msk [vmem:[#allocation4 + $0x90] sm:$0xff] %vm1010, %v951
      %1030 = vst.msk [vmem:[#allocation4 + $0x98] sm:$0xff] %vm1010, %v953
      %1031 = vst.msk [vmem:[#allocation4 + $0xa0] sm:$0xff] %vm1010, %v955
      %1032 = vst.msk [vmem:[#allocation4 + $0xa8] sm:$0xff] %vm1010, %v957
      %1033 = vst.msk [vmem:[#allocation4 + $0xb0] sm:$0xff] %vm1010, %v959
      %1034 = vst.msk [vmem:[#allocation4 + $0xb8] sm:$0xff] %vm1010, %v961
      %1035 = vst.msk [vmem:[#allocation4 + $0xc0] sm:$0xff] %vm1010, %v963
      %1036 = vst.msk [vmem:[#allocation4 + $0xc8] sm:$0xff] %vm1010, %v965
      %1037 = vst.msk [vmem:[#allocation4 + $0xd0] sm:$0xff] %vm1010, %v967
      %1038 = vst.msk [vmem:[#allocation4 + $0xd8] sm:$0xff] %vm1010, %v969
      %1039 = vst.msk [vmem:[#allocation4 + $0xe0] sm:$0xff] %vm1010, %v971
      %1040 = vst.msk [vmem:[#allocation4 + $0xe8] sm:$0xff] %vm1010, %v973
      %1041 = vst.msk [vmem:[#allocation4 + $0xf0] sm:$0xff] %vm1010, %v975
      %1042 = vst.msk [vmem:[#allocation4 + $0xf8] sm:$0xff] %vm1010, %v977
      %v1043 = vld [vmem:[%s367 + $0x1] sm:$0xff]
      %v1044 = vld [vmem:[%s367 + $0x9] sm:$0xff]
      %v1045 = vld [vmem:[%s367 + $0x19] sm:$0xff]
      %v1046 = vld [vmem:[%s367 + $0x21] sm:$0xff]
      %v1047 = vld [vmem:[%s367 + $0x31] sm:$0xff]
      %v1048 = vld [vmem:[%s367 + $0x39] sm:$0xff]
      %v1049 = vld [vmem:[%s367 + $0x49] sm:$0xff]
      %v1050 = vld [vmem:[%s367 + $0x51] sm:$0xff]
      %v1051 = vld [vmem:[%s367 + $0x61] sm:$0xff]
      %v1052 = vld [vmem:[%s367 + $0x69] sm:$0xff]
      %v1053 = vld [vmem:[%s367 + $0x79] sm:$0xff]
      %v1054 = vld [vmem:[%s367 + $0x81] sm:$0xff]
      %v1055 = vld [vmem:[%s367 + $0x91] sm:$0xff]
      %v1056 = vld [vmem:[%s367 + $0x99] sm:$0xff]
      %v1057 = vld [vmem:[%s367 + $0xa9] sm:$0xff]
      %v1058 = vld [vmem:[%s367 + $0xb1] sm:$0xff]
      %v1059 = vld [vmem:[%s367 + $0xc1] sm:$0xff]
      %v1060 = vld [vmem:[%s367 + $0xc9] sm:$0xff]
      %v1061 = vld [vmem:[%s367 + $0xd9] sm:$0xff]
      %v1062 = vld [vmem:[%s367 + $0xe1] sm:$0xff]
      %v1063 = vld [vmem:[%s367 + $0xf1] sm:$0xff]
      %v1064 = vld [vmem:[%s367 + $0xf9] sm:$0xff]
      %v1065 = vld [vmem:[%s367 + $0x109] sm:$0xff]
      %v1066 = vld [vmem:[%s367 + $0x111] sm:$0xff]
      %v1067 = vld [vmem:[%s367 + $0x121] sm:$0xff]
      %v1068 = vld [vmem:[%s367 + $0x129] sm:$0xff]
      %v1069 = vld [vmem:[%s367 + $0x139] sm:$0xff]
      %v1070 = vld [vmem:[%s367 + $0x141] sm:$0xff]
      %v1071 = vld [vmem:[%s367 + $0x151] sm:$0xff]
      %v1072 = vld [vmem:[%s367 + $0x159] sm:$0xff]
      %v1073 = vld [vmem:[%s367 + $0x169] sm:$0xff]
      %v1074 = vld [vmem:[%s367 + $0x171] sm:$0xff]
      %1107 = vrot.lane.b32.xlu0 %v1043, 16
      %v1108 = vpop.permute.xlu0 %1107
      %1109 = vrot.lane.b32.xlu0 %v1044, 16
      %v1110 = vpop.permute.xlu0 %1109
      %1111 = vrot.lane.b32.xlu0 %v1045, 16
      %v1112 = vpop.permute.xlu0 %1111
      %1113 = vrot.lane.b32.xlu0 %v1046, 16
      %v1114 = vpop.permute.xlu0 %1113
      %1115 = vrot.lane.b32.xlu0 %v1047, 16
      %v1116 = vpop.permute.xlu0 %1115
      %1117 = vrot.lane.b32.xlu0 %v1048, 16
      %v1118 = vpop.permute.xlu0 %1117
      %1119 = vrot.lane.b32.xlu0 %v1049, 16
      %v1120 = vpop.permute.xlu0 %1119
      %1121 = vrot.lane.b32.xlu0 %v1050, 16
      %v1122 = vpop.permute.xlu0 %1121
      %1123 = vrot.lane.b32.xlu0 %v1051, 16
      %v1124 = vpop.permute.xlu0 %1123
      %1125 = vrot.lane.b32.xlu0 %v1052, 16
      %v1126 = vpop.permute.xlu0 %1125
      %1127 = vrot.lane.b32.xlu0 %v1053, 16
      %v1128 = vpop.permute.xlu0 %1127
      %1129 = vrot.lane.b32.xlu0 %v1054, 16
      %v1130 = vpop.permute.xlu0 %1129
      %1131 = vrot.lane.b32.xlu0 %v1055, 16
      %v1132 = vpop.permute.xlu0 %1131
      %1133 = vrot.lane.b32.xlu0 %v1056, 16
      %v1134 = vpop.permute.xlu0 %1133
      %1135 = vrot.lane.b32.xlu0 %v1057, 16
      %v1136 = vpop.permute.xlu0 %1135
      %1137 = vrot.lane.b32.xlu0 %v1058, 16
      %v1138 = vpop.permute.xlu0 %1137
      %1139 = vrot.lane.b32.xlu0 %v1059, 16
      %v1140 = vpop.permute.xlu0 %1139
      %1141 = vrot.lane.b32.xlu0 %v1060, 16
      %v1142 = vpop.permute.xlu0 %1141
      %1143 = vrot.lane.b32.xlu0 %v1061, 16
      %v1144 = vpop.permute.xlu0 %1143
      %1145 = vrot.lane.b32.xlu0 %v1062, 16
      %v1146 = vpop.permute.xlu0 %1145
      %1147 = vrot.lane.b32.xlu0 %v1063, 16
      %v1148 = vpop.permute.xlu0 %1147
      %1149 = vrot.lane.b32.xlu0 %v1064, 16
      %v1150 = vpop.permute.xlu0 %1149
      %1151 = vrot.lane.b32.xlu0 %v1065, 16
      %v1152 = vpop.permute.xlu0 %1151
      %1153 = vrot.lane.b32.xlu0 %v1066, 16
      %v1154 = vpop.permute.xlu0 %1153
      %1155 = vrot.lane.b32.xlu0 %v1067, 16
      %v1156 = vpop.permute.xlu0 %1155
      %1157 = vrot.lane.b32.xlu0 %v1068, 16
      %v1158 = vpop.permute.xlu0 %1157
      %1159 = vrot.lane.b32.xlu0 %v1069, 16
      %v1160 = vpop.permute.xlu0 %1159
      %1161 = vrot.lane.b32.xlu0 %v1070, 16
      %v1162 = vpop.permute.xlu0 %1161
      %1163 = vrot.lane.b32.xlu0 %v1071, 16
      %v1164 = vpop.permute.xlu0 %1163
      %1165 = vrot.lane.b32.xlu0 %v1072, 16
      %v1166 = vpop.permute.xlu0 %1165
      %1167 = vrot.lane.b32.xlu0 %v1073, 16
      %v1168 = vpop.permute.xlu0 %1167
      %1169 = vrot.lane.b32.xlu0 %v1074, 16
      %v1170 = vpop.permute.xlu0 %1169
      %vm1203 = vcmask 162944
      %1204 = vst.msk [vmem:[#allocation4] sm:$0xff] %vm1203, %v1108
      %1205 = vst.msk [vmem:[#allocation4 + $0x8] sm:$0xff] %vm1203, %v1110
      %1206 = vst.msk [vmem:[#allocation4 + $0x10] sm:$0xff] %vm1203, %v1112
      %1207 = vst.msk [vmem:[#allocation4 + $0x18] sm:$0xff] %vm1203, %v1114
      %1208 = vst.msk [vmem:[#allocation4 + $0x20] sm:$0xff] %vm1203, %v1116
      %1209 = vst.msk [vmem:[#allocation4 + $0x28] sm:$0xff] %vm1203, %v1118
      %1210 = vst.msk [vmem:[#allocation4 + $0x30] sm:$0xff] %vm1203, %v1120
      %1211 = vst.msk [vmem:[#allocation4 + $0x38] sm:$0xff] %vm1203, %v1122
      %1212 = vst.msk [vmem:[#allocation4 + $0x40] sm:$0xff] %vm1203, %v1124
      %1213 = vst.msk [vmem:[#allocation4 + $0x48] sm:$0xff] %vm1203, %v1126
      %1214 = vst.msk [vmem:[#allocation4 + $0x50] sm:$0xff] %vm1203, %v1128
      %1215 = vst.msk [vmem:[#allocation4 + $0x58] sm:$0xff] %vm1203, %v1130
      %1216 = vst.msk [vmem:[#allocation4 + $0x60] sm:$0xff] %vm1203, %v1132
      %1217 = vst.msk [vmem:[#allocation4 + $0x68] sm:$0xff] %vm1203, %v1134
      %1218 = vst.msk [vmem:[#allocation4 + $0x70] sm:$0xff] %vm1203, %v1136
      %1219 = vst.msk [vmem:[#allocation4 + $0x78] sm:$0xff] %vm1203, %v1138
      %1220 = vst.msk [vmem:[#allocation4 + $0x80] sm:$0xff] %vm1203, %v1140
      %1221 = vst.msk [vmem:[#allocation4 + $0x88] sm:$0xff] %vm1203, %v1142
      %1222 = vst.msk [vmem:[#allocation4 + $0x90] sm:$0xff] %vm1203, %v1144
      %1223 = vst.msk [vmem:[#allocation4 + $0x98] sm:$0xff] %vm1203, %v1146
      %1224 = vst.msk [vmem:[#allocation4 + $0xa0] sm:$0xff] %vm1203, %v1148
      %1225 = vst.msk [vmem:[#allocation4 + $0xa8] sm:$0xff] %vm1203, %v1150
      %1226 = vst.msk [vmem:[#allocation4 + $0xb0] sm:$0xff] %vm1203, %v1152
      %1227 = vst.msk [vmem:[#allocation4 + $0xb8] sm:$0xff] %vm1203, %v1154
      %1228 = vst.msk [vmem:[#allocation4 + $0xc0] sm:$0xff] %vm1203, %v1156
      %1229 = vst.msk [vmem:[#allocation4 + $0xc8] sm:$0xff] %vm1203, %v1158
      %1230 = vst.msk [vmem:[#allocation4 + $0xd0] sm:$0xff] %vm1203, %v1160
      %1231 = vst.msk [vmem:[#allocation4 + $0xd8] sm:$0xff] %vm1203, %v1162
      %1232 = vst.msk [vmem:[#allocation4 + $0xe0] sm:$0xff] %vm1203, %v1164
      %1233 = vst.msk [vmem:[#allocation4 + $0xe8] sm:$0xff] %vm1203, %v1166
      %1234 = vst.msk [vmem:[#allocation4 + $0xf0] sm:$0xff] %vm1203, %v1168
      %1235 = vst.msk [vmem:[#allocation4 + $0xf8] sm:$0xff] %vm1203, %v1170
      %v1236 = vld [vmem:[%s367 + $0x2] sm:$0xff]
      %v1237 = vld [vmem:[%s367 + $0xa] sm:$0xff]
      %v1238 = vld [vmem:[%s367 + $0x1a] sm:$0xff]
      %v1239 = vld [vmem:[%s367 + $0x22] sm:$0xff]
      %v1240 = vld [vmem:[%s367 + $0x32] sm:$0xff]
      %v1241 = vld [vmem:[%s367 + $0x3a] sm:$0xff]
      %v1242 = vld [vmem:[%s367 + $0x4a] sm:$0xff]
      %v1243 = vld [vmem:[%s367 + $0x52] sm:$0xff]
      %v1244 = vld [vmem:[%s367 + $0x62] sm:$0xff]
      %v1245 = vld [vmem:[%s367 + $0x6a] sm:$0xff]
      %v1246 = vld [vmem:[%s367 + $0x7a] sm:$0xff]
      %v1247 = vld [vmem:[%s367 + $0x82] sm:$0xff]
      %v1248 = vld [vmem:[%s367 + $0x92] sm:$0xff]
      %v1249 = vld [vmem:[%s367 + $0x9a] sm:$0xff]
      %v1250 = vld [vmem:[%s367 + $0xaa] sm:$0xff]
      %v1251 = vld [vmem:[%s367 + $0xb2] sm:$0xff]
      %v1252 = vld [vmem:[%s367 + $0xc2] sm:$0xff]
      %v1253 = vld [vmem:[%s367 + $0xca] sm:$0xff]
      %v1254 = vld [vmem:[%s367 + $0xda] sm:$0xff]
      %v1255 = vld [vmem:[%s367 + $0xe2] sm:$0xff]
      %v1256 = vld [vmem:[%s367 + $0xf2] sm:$0xff]
      %v1257 = vld [vmem:[%s367 + $0xfa] sm:$0xff]
      %v1258 = vld [vmem:[%s367 + $0x10a] sm:$0xff]
      %v1259 = vld [vmem:[%s367 + $0x112] sm:$0xff]
      %v1260 = vld [vmem:[%s367 + $0x122] sm:$0xff]
      %v1261 = vld [vmem:[%s367 + $0x12a] sm:$0xff]
      %v1262 = vld [vmem:[%s367 + $0x13a] sm:$0xff]
      %v1263 = vld [vmem:[%s367 + $0x142] sm:$0xff]
      %v1264 = vld [vmem:[%s367 + $0x152] sm:$0xff]
      %v1265 = vld [vmem:[%s367 + $0x15a] sm:$0xff]
      %v1266 = vld [vmem:[%s367 + $0x16a] sm:$0xff]
      %v1267 = vld [vmem:[%s367 + $0x172] sm:$0xff]
      %1300 = vrot.lane.b32.xlu0 %v1236, 20
      %v1301 = vpop.permute.xlu0 %1300
      %1302 = vrot.lane.b32.xlu0 %v1237, 20
      %v1303 = vpop.permute.xlu0 %1302
      %1304 = vrot.lane.b32.xlu0 %v1238, 20
      %v1305 = vpop.permute.xlu0 %1304
      %1306 = vrot.lane.b32.xlu0 %v1239, 20
      %v1307 = vpop.permute.xlu0 %1306
      %1308 = vrot.lane.b32.xlu0 %v1240, 20
      %v1309 = vpop.permute.xlu0 %1308
      %1310 = vrot.lane.b32.xlu0 %v1241, 20
      %v1311 = vpop.permute.xlu0 %1310
      %1312 = vrot.lane.b32.xlu0 %v1242, 20
      %v1313 = vpop.permute.xlu0 %1312
      %1314 = vrot.lane.b32.xlu0 %v1243, 20
      %v1315 = vpop.permute.xlu0 %1314
      %1316 = vrot.lane.b32.xlu0 %v1244, 20
      %v1317 = vpop.permute.xlu0 %1316
      %1318 = vrot.lane.b32.xlu0 %v1245, 20
      %v1319 = vpop.permute.xlu0 %1318
      %1320 = vrot.lane.b32.xlu0 %v1246, 20
      %v1321 = vpop.permute.xlu0 %1320
      %1322 = vrot.lane.b32.xlu0 %v1247, 20
      %v1323 = vpop.permute.xlu0 %1322
      %1324 = vrot.lane.b32.xlu0 %v1248, 20
      %v1325 = vpop.permute.xlu0 %1324
      %1326 = vrot.lane.b32.xlu0 %v1249, 20
      %v1327 = vpop.permute.xlu0 %1326
      %1328 = vrot.lane.b32.xlu0 %v1250, 20
      %v1329 = vpop.permute.xlu0 %1328
      %1330 = vrot.lane.b32.xlu0 %v1251, 20
      %v1331 = vpop.permute.xlu0 %1330
      %1332 = vrot.lane.b32.xlu0 %v1252, 20
      %v1333 = vpop.permute.xlu0 %1332
      %1334 = vrot.lane.b32.xlu0 %v1253, 20
      %v1335 = vpop.permute.xlu0 %1334
      %1336 = vrot.lane.b32.xlu0 %v1254, 20
      %v1337 = vpop.permute.xlu0 %1336
      %1338 = vrot.lane.b32.xlu0 %v1255, 20
      %v1339 = vpop.permute.xlu0 %1338
      %1340 = vrot.lane.b32.xlu0 %v1256, 20
      %v1341 = vpop.permute.xlu0 %1340
      %1342 = vrot.lane.b32.xlu0 %v1257, 20
      %v1343 = vpop.permute.xlu0 %1342
      %1344 = vrot.lane.b32.xlu0 %v1258, 20
      %v1345 = vpop.permute.xlu0 %1344
      %1346 = vrot.lane.b32.xlu0 %v1259, 20
      %v1347 = vpop.permute.xlu0 %1346
      %1348 = vrot.lane.b32.xlu0 %v1260, 20
      %v1349 = vpop.permute.xlu0 %1348
      %1350 = vrot.lane.b32.xlu0 %v1261, 20
      %v1351 = vpop.permute.xlu0 %1350
      %1352 = vrot.lane.b32.xlu0 %v1262, 20
      %v1353 = vpop.permute.xlu0 %1352
      %1354 = vrot.lane.b32.xlu0 %v1263, 20
      %v1355 = vpop.permute.xlu0 %1354
      %1356 = vrot.lane.b32.xlu0 %v1264, 20
      %v1357 = vpop.permute.xlu0 %1356
      %1358 = vrot.lane.b32.xlu0 %v1265, 20
      %v1359 = vpop.permute.xlu0 %1358
      %1360 = vrot.lane.b32.xlu0 %v1266, 20
      %v1361 = vpop.permute.xlu0 %1360
      %1362 = vrot.lane.b32.xlu0 %v1267, 20
      %v1363 = vpop.permute.xlu0 %1362
      %vm1396 = vcmask 195744
      %1397 = vst.msk [vmem:[#allocation4] sm:$0xff] %vm1396, %v1301
      %1398 = vst.msk [vmem:[#allocation4 + $0x8] sm:$0xff] %vm1396, %v1303
      %1399 = vst.msk [vmem:[#allocation4 + $0x10] sm:$0xff] %vm1396, %v1305
      %1400 = vst.msk [vmem:[#allocation4 + $0x18] sm:$0xff] %vm1396, %v1307
      %1401 = vst.msk [vmem:[#allocation4 + $0x20] sm:$0xff] %vm1396, %v1309
      %1402 = vst.msk [vmem:[#allocation4 + $0x28] sm:$0xff] %vm1396, %v1311
      %1403 = vst.msk [vmem:[#allocation4 + $0x30] sm:$0xff] %vm1396, %v1313
      %1404 = vst.msk [vmem:[#allocation4 + $0x38] sm:$0xff] %vm1396, %v1315
      %1405 = vst.msk [vmem:[#allocation4 + $0x40] sm:$0xff] %vm1396, %v1317
      %1406 = vst.msk [vmem:[#allocation4 + $0x48] sm:$0xff] %vm1396, %v1319
      %1407 = vst.msk [vmem:[#allocation4 + $0x50] sm:$0xff] %vm1396, %v1321
      %1408 = vst.msk [vmem:[#allocation4 + $0x58] sm:$0xff] %vm1396, %v1323
      %1409 = vst.msk [vmem:[#allocation4 + $0x60] sm:$0xff] %vm1396, %v1325
      %1410 = vst.msk [vmem:[#allocation4 + $0x68] sm:$0xff] %vm1396, %v1327
      %1411 = vst.msk [vmem:[#allocation4 + $0x70] sm:$0xff] %vm1396, %v1329
      %1412 = vst.msk [vmem:[#allocation4 + $0x78] sm:$0xff] %vm1396, %v1331
      %1413 = vst.msk [vmem:[#allocation4 + $0x80] sm:$0xff] %vm1396, %v1333
      %1414 = vst.msk [vmem:[#allocation4 + $0x88] sm:$0xff] %vm1396, %v1335
      %1415 = vst.msk [vmem:[#allocation4 + $0x90] sm:$0xff] %vm1396, %v1337
      %1416 = vst.msk [vmem:[#allocation4 + $0x98] sm:$0xff] %vm1396, %v1339
      %1417 = vst.msk [vmem:[#allocation4 + $0xa0] sm:$0xff] %vm1396, %v1341
      %1418 = vst.msk [vmem:[#allocation4 + $0xa8] sm:$0xff] %vm1396, %v1343
      %1419 = vst.msk [vmem:[#allocation4 + $0xb0] sm:$0xff] %vm1396, %v1345
      %1420 = vst.msk [vmem:[#allocation4 + $0xb8] sm:$0xff] %vm1396, %v1347
      %1421 = vst.msk [vmem:[#allocation4 + $0xc0] sm:$0xff] %vm1396, %v1349
      %1422 = vst.msk [vmem:[#allocation4 + $0xc8] sm:$0xff] %vm1396, %v1351
      %1423 = vst.msk [vmem:[#allocation4 + $0xd0] sm:$0xff] %vm1396, %v1353
      %1424 = vst.msk [vmem:[#allocation4 + $0xd8] sm:$0xff] %vm1396, %v1355
      %1425 = vst.msk [vmem:[#allocation4 + $0xe0] sm:$0xff] %vm1396, %v1357
      %1426 = vst.msk [vmem:[#allocation4 + $0xe8] sm:$0xff] %vm1396, %v1359
      %1427 = vst.msk [vmem:[#allocation4 + $0xf0] sm:$0xff] %vm1396, %v1361
      %1428 = vst.msk [vmem:[#allocation4 + $0xf8] sm:$0xff] %vm1396, %v1363
      %s1429 = scalar_lea.vmem [#allocation2], 48
      %v1430 = vld [vmem:[%s1429] sm:$0xff]
      %v1431 = vld [vmem:[%s1429 + $0x8] sm:$0xff]
      %v1432 = vld [vmem:[%s1429 + $0x18] sm:$0xff]
      %v1433 = vld [vmem:[%s1429 + $0x20] sm:$0xff]
      %v1434 = vld [vmem:[%s1429 + $0x30] sm:$0xff]
      %v1435 = vld [vmem:[%s1429 + $0x38] sm:$0xff]
      %v1436 = vld [vmem:[%s1429 + $0x48] sm:$0xff]
      %v1437 = vld [vmem:[%s1429 + $0x50] sm:$0xff]
      %v1438 = vld [vmem:[%s1429 + $0x60] sm:$0xff]
      %v1439 = vld [vmem:[%s1429 + $0x68] sm:$0xff]
      %v1440 = vld [vmem:[%s1429 + $0x78] sm:$0xff]
      %v1441 = vld [vmem:[%s1429 + $0x80] sm:$0xff]
      %v1442 = vld [vmem:[%s1429 + $0x90] sm:$0xff]
      %v1443 = vld [vmem:[%s1429 + $0x98] sm:$0xff]
      %v1444 = vld [vmem:[%s1429 + $0xa8] sm:$0xff]
      %v1445 = vld [vmem:[%s1429 + $0xb0] sm:$0xff]
      %v1446 = vld [vmem:[%s1429 + $0xc0] sm:$0xff]
      %v1447 = vld [vmem:[%s1429 + $0xc8] sm:$0xff]
      %v1448 = vld [vmem:[%s1429 + $0xd8] sm:$0xff]
      %v1449 = vld [vmem:[%s1429 + $0xe0] sm:$0xff]
      %v1450 = vld [vmem:[%s1429 + $0xf0] sm:$0xff]
      %v1451 = vld [vmem:[%s1429 + $0xf8] sm:$0xff]
      %v1452 = vld [vmem:[%s1429 + $0x108] sm:$0xff]
      %v1453 = vld [vmem:[%s1429 + $0x110] sm:$0xff]
      %v1454 = vld [vmem:[%s1429 + $0x120] sm:$0xff]
      %v1455 = vld [vmem:[%s1429 + $0x128] sm:$0xff]
      %v1456 = vld [vmem:[%s1429 + $0x138] sm:$0xff]
      %v1457 = vld [vmem:[%s1429 + $0x140] sm:$0xff]
      %v1458 = vld [vmem:[%s1429 + $0x150] sm:$0xff]
      %v1459 = vld [vmem:[%s1429 + $0x158] sm:$0xff]
      %v1460 = vld [vmem:[%s1429 + $0x168] sm:$0xff]
      %v1461 = vld [vmem:[%s1429 + $0x170] sm:$0xff]
      %1494 = vrot.lane.b32.xlu0 %v1430, 24
      %v1495 = vpop.permute.xlu0 %1494
      %1496 = vrot.lane.b32.xlu0 %v1431, 24
      %v1497 = vpop.permute.xlu0 %1496
      %1498 = vrot.lane.b32.xlu0 %v1432, 24
      %v1499 = vpop.permute.xlu0 %1498
      %1500 = vrot.lane.b32.xlu0 %v1433, 24
      %v1501 = vpop.permute.xlu0 %1500
      %1502 = vrot.lane.b32.xlu0 %v1434, 24
      %v1503 = vpop.permute.xlu0 %1502
      %1504 = vrot.lane.b32.xlu0 %v1435, 24
      %v1505 = vpop.permute.xlu0 %1504
      %1506 = vrot.lane.b32.xlu0 %v1436, 24
      %v1507 = vpop.permute.xlu0 %1506
      %1508 = vrot.lane.b32.xlu0 %v1437, 24
      %v1509 = vpop.permute.xlu0 %1508
      %1510 = vrot.lane.b32.xlu0 %v1438, 24
      %v1511 = vpop.permute.xlu0 %1510
      %1512 = vrot.lane.b32.xlu0 %v1439, 24
      %v1513 = vpop.permute.xlu0 %1512
      %1514 = vrot.lane.b32.xlu0 %v1440, 24
      %v1515 = vpop.permute.xlu0 %1514
      %1516 = vrot.lane.b32.xlu0 %v1441, 24
      %v1517 = vpop.permute.xlu0 %1516
      %1518 = vrot.lane.b32.xlu0 %v1442, 24
      %v1519 = vpop.permute.xlu0 %1518
      %1520 = vrot.lane.b32.xlu0 %v1443, 24
      %v1521 = vpop.permute.xlu0 %1520
      %1522 = vrot.lane.b32.xlu0 %v1444, 24
      %v1523 = vpop.permute.xlu0 %1522
      %1524 = vrot.lane.b32.xlu0 %v1445, 24
      %v1525 = vpop.permute.xlu0 %1524
      %1526 = vrot.lane.b32.xlu0 %v1446, 24
      %v1527 = vpop.permute.xlu0 %1526
      %1528 = vrot.lane.b32.xlu0 %v1447, 24
      %v1529 = vpop.permute.xlu0 %1528
      %1530 = vrot.lane.b32.xlu0 %v1448, 24
      %v1531 = vpop.permute.xlu0 %1530
      %1532 = vrot.lane.b32.xlu0 %v1449, 24
      %v1533 = vpop.permute.xlu0 %1532
      %1534 = vrot.lane.b32.xlu0 %v1450, 24
      %v1535 = vpop.permute.xlu0 %1534
      %1536 = vrot.lane.b32.xlu0 %v1451, 24
      %v1537 = vpop.permute.xlu0 %1536
      %1538 = vrot.lane.b32.xlu0 %v1452, 24
      %v1539 = vpop.permute.xlu0 %1538
      %1540 = vrot.lane.b32.xlu0 %v1453, 24
      %v1541 = vpop.permute.xlu0 %1540
      %1542 = vrot.lane.b32.xlu0 %v1454, 24
      %v1543 = vpop.permute.xlu0 %1542
      %1544 = vrot.lane.b32.xlu0 %v1455, 24
      %v1545 = vpop.permute.xlu0 %1544
      %1546 = vrot.lane.b32.xlu0 %v1456, 24
      %v1547 = vpop.permute.xlu0 %1546
      %1548 = vrot.lane.b32.xlu0 %v1457, 24
      %v1549 = vpop.permute.xlu0 %1548
      %1550 = vrot.lane.b32.xlu0 %v1458, 24
      %v1551 = vpop.permute.xlu0 %1550
      %1552 = vrot.lane.b32.xlu0 %v1459, 24
      %v1553 = vpop.permute.xlu0 %1552
      %1554 = vrot.lane.b32.xlu0 %v1460, 24
      %v1555 = vpop.permute.xlu0 %1554
      %1556 = vrot.lane.b32.xlu0 %v1461, 24
      %v1557 = vpop.permute.xlu0 %1556
      %vm1590 = vcmask 228544
      %1591 = vst.msk [vmem:[#allocation4] sm:$0xff] %vm1590, %v1495
      %1592 = vst.msk [vmem:[#allocation4 + $0x8] sm:$0xff] %vm1590, %v1497
      %1593 = vst.msk [vmem:[#allocation4 + $0x10] sm:$0xff] %vm1590, %v1499
      %1594 = vst.msk [vmem:[#allocation4 + $0x18] sm:$0xff] %vm1590, %v1501
      %1595 = vst.msk [vmem:[#allocation4 + $0x20] sm:$0xff] %vm1590, %v1503
      %1596 = vst.msk [vmem:[#allocation4 + $0x28] sm:$0xff] %vm1590, %v1505
      %1597 = vst.msk [vmem:[#allocation4 + $0x30] sm:$0xff] %vm1590, %v1507
      %1598 = vst.msk [vmem:[#allocation4 + $0x38] sm:$0xff] %vm1590, %v1509
      %1599 = vst.msk [vmem:[#allocation4 + $0x40] sm:$0xff] %vm1590, %v1511
      %1600 = vst.msk [vmem:[#allocation4 + $0x48] sm:$0xff] %vm1590, %v1513
      %1601 = vst.msk [vmem:[#allocation4 + $0x50] sm:$0xff] %vm1590, %v1515
      %1602 = vst.msk [vmem:[#allocation4 + $0x58] sm:$0xff] %vm1590, %v1517
      %1603 = vst.msk [vmem:[#allocation4 + $0x60] sm:$0xff] %vm1590, %v1519
      %1604 = vst.msk [vmem:[#allocation4 + $0x68] sm:$0xff] %vm1590, %v1521
      %1605 = vst.msk [vmem:[#allocation4 + $0x70] sm:$0xff] %vm1590, %v1523
      %1606 = vst.msk [vmem:[#allocation4 + $0x78] sm:$0xff] %vm1590, %v1525
      %1607 = vst.msk [vmem:[#allocation4 + $0x80] sm:$0xff] %vm1590, %v1527
      %1608 = vst.msk [vmem:[#allocation4 + $0x88] sm:$0xff] %vm1590, %v1529
      %1609 = vst.msk [vmem:[#allocation4 + $0x90] sm:$0xff] %vm1590, %v1531
      %1610 = vst.msk [vmem:[#allocation4 + $0x98] sm:$0xff] %vm1590, %v1533
      %1611 = vst.msk [vmem:[#allocation4 + $0xa0] sm:$0xff] %vm1590, %v1535
      %1612 = vst.msk [vmem:[#allocation4 + $0xa8] sm:$0xff] %vm1590, %v1537
      %1613 = vst.msk [vmem:[#allocation4 + $0xb0] sm:$0xff] %vm1590, %v1539
      %1614 = vst.msk [vmem:[#allocation4 + $0xb8] sm:$0xff] %vm1590, %v1541
      %1615 = vst.msk [vmem:[#allocation4 + $0xc0] sm:$0xff] %vm1590, %v1543
      %1616 = vst.msk [vmem:[#allocation4 + $0xc8] sm:$0xff] %vm1590, %v1545
      %1617 = vst.msk [vmem:[#allocation4 + $0xd0] sm:$0xff] %vm1590, %v1547
      %1618 = vst.msk [vmem:[#allocation4 + $0xd8] sm:$0xff] %vm1590, %v1549
      %1619 = vst.msk [vmem:[#allocation4 + $0xe0] sm:$0xff] %vm1590, %v1551
      %1620 = vst.msk [vmem:[#allocation4 + $0xe8] sm:$0xff] %vm1590, %v1553
      %1621 = vst.msk [vmem:[#allocation4 + $0xf0] sm:$0xff] %vm1590, %v1555
      %1622 = vst.msk [vmem:[#allocation4 + $0xf8] sm:$0xff] %vm1590, %v1557
      %v1623 = vld [vmem:[%s1429 + $0x1] sm:$0xff]
      %v1624 = vld [vmem:[%s1429 + $0x9] sm:$0xff]
      %v1625 = vld [vmem:[%s1429 + $0x19] sm:$0xff]
      %v1626 = vld [vmem:[%s1429 + $0x21] sm:$0xff]
      %v1627 = vld [vmem:[%s1429 + $0x31] sm:$0xff]
      %v1628 = vld [vmem:[%s1429 + $0x39] sm:$0xff]
      %v1629 = vld [vmem:[%s1429 + $0x49] sm:$0xff]
      %v1630 = vld [vmem:[%s1429 + $0x51] sm:$0xff]
      %v1631 = vld [vmem:[%s1429 + $0x61] sm:$0xff]
      %v1632 = vld [vmem:[%s1429 + $0x69] sm:$0xff]
      %v1633 = vld [vmem:[%s1429 + $0x79] sm:$0xff]
      %v1634 = vld [vmem:[%s1429 + $0x81] sm:$0xff]
      %v1635 = vld [vmem:[%s1429 + $0x91] sm:$0xff]
      %v1636 = vld [vmem:[%s1429 + $0x99] sm:$0xff]
      %v1637 = vld [vmem:[%s1429 + $0xa9] sm:$0xff]
      %v1638 = vld [vmem:[%s1429 + $0xb1] sm:$0xff]
      %v1639 = vld [vmem:[%s1429 + $0xc1] sm:$0xff]
      %v1640 = vld [vmem:[%s1429 + $0xc9] sm:$0xff]
      %v1641 = vld [vmem:[%s1429 + $0xd9] sm:$0xff]
      %v1642 = vld [vmem:[%s1429 + $0xe1] sm:$0xff]
      %v1643 = vld [vmem:[%s1429 + $0xf1] sm:$0xff]
      %v1644 = vld [vmem:[%s1429 + $0xf9] sm:$0xff]
      %v1645 = vld [vmem:[%s1429 + $0x109] sm:$0xff]
      %v1646 = vld [vmem:[%s1429 + $0x111] sm:$0xff]
      %v1647 = vld [vmem:[%s1429 + $0x121] sm:$0xff]
      %v1648 = vld [vmem:[%s1429 + $0x129] sm:$0xff]
      %v1649 = vld [vmem:[%s1429 + $0x139] sm:$0xff]
      %v1650 = vld [vmem:[%s1429 + $0x141] sm:$0xff]
      %v1651 = vld [vmem:[%s1429 + $0x151] sm:$0xff]
      %v1652 = vld [vmem:[%s1429 + $0x159] sm:$0xff]
      %v1653 = vld [vmem:[%s1429 + $0x169] sm:$0xff]
      %v1654 = vld [vmem:[%s1429 + $0x171] sm:$0xff]
      %1687 = vrot.lane.b32.xlu0 %v1623, 28
      %v1688 = vpop.permute.xlu0 %1687
      %1689 = vrot.lane.b32.xlu0 %v1624, 28
      %v1690 = vpop.permute.xlu0 %1689
      %1691 = vrot.lane.b32.xlu0 %v1625, 28
      %v1692 = vpop.permute.xlu0 %1691
      %1693 = vrot.lane.b32.xlu0 %v1626, 28
      %v1694 = vpop.permute.xlu0 %1693
      %1695 = vrot.lane.b32.xlu0 %v1627, 28
      %v1696 = vpop.permute.xlu0 %1695
      %1697 = vrot.lane.b32.xlu0 %v1628, 28
      %v1698 = vpop.permute.xlu0 %1697
      %1699 = vrot.lane.b32.xlu0 %v1629, 28
      %v1700 = vpop.permute.xlu0 %1699
      %1701 = vrot.lane.b32.xlu0 %v1630, 28
      %v1702 = vpop.permute.xlu0 %1701
      %1703 = vrot.lane.b32.xlu0 %v1631, 28
      %v1704 = vpop.permute.xlu0 %1703
      %1705 = vrot.lane.b32.xlu0 %v1632, 28
      %v1706 = vpop.permute.xlu0 %1705
      %1707 = vrot.lane.b32.xlu0 %v1633, 28
      %v1708 = vpop.permute.xlu0 %1707
      %1709 = vrot.lane.b32.xlu0 %v1634, 28
      %v1710 = vpop.permute.xlu0 %1709
      %1711 = vrot.lane.b32.xlu0 %v1635, 28
      %v1712 = vpop.permute.xlu0 %1711
      %1713 = vrot.lane.b32.xlu0 %v1636, 28
      %v1714 = vpop.permute.xlu0 %1713
      %1715 = vrot.lane.b32.xlu0 %v1637, 28
      %v1716 = vpop.permute.xlu0 %1715
      %1717 = vrot.lane.b32.xlu0 %v1638, 28
      %v1718 = vpop.permute.xlu0 %1717
      %1719 = vrot.lane.b32.xlu0 %v1639, 28
      %v1720 = vpop.permute.xlu0 %1719
      %1721 = vrot.lane.b32.xlu0 %v1640, 28
      %v1722 = vpop.permute.xlu0 %1721
      %1723 = vrot.lane.b32.xlu0 %v1641, 28
      %v1724 = vpop.permute.xlu0 %1723
      %1725 = vrot.lane.b32.xlu0 %v1642, 28
      %v1726 = vpop.permute.xlu0 %1725
      %1727 = vrot.lane.b32.xlu0 %v1643, 28
      %v1728 = vpop.permute.xlu0 %1727
      %1729 = vrot.lane.b32.xlu0 %v1644, 28
      %v1730 = vpop.permute.xlu0 %1729
      %1731 = vrot.lane.b32.xlu0 %v1645, 28
      %v1732 = vpop.permute.xlu0 %1731
      %1733 = vrot.lane.b32.xlu0 %v1646, 28
      %v1734 = vpop.permute.xlu0 %1733
      %1735 = vrot.lane.b32.xlu0 %v1647, 28
      %v1736 = vpop.permute.xlu0 %1735
      %1737 = vrot.lane.b32.xlu0 %v1648, 28
      %v1738 = vpop.permute.xlu0 %1737
      %1739 = vrot.lane.b32.xlu0 %v1649, 28
      %v1740 = vpop.permute.xlu0 %1739
      %1741 = vrot.lane.b32.xlu0 %v1650, 28
      %v1742 = vpop.permute.xlu0 %1741
      %1743 = vrot.lane.b32.xlu0 %v1651, 28
      %v1744 = vpop.permute.xlu0 %1743
      %1745 = vrot.lane.b32.xlu0 %v1652, 28
      %v1746 = vpop.permute.xlu0 %1745
      %1747 = vrot.lane.b32.xlu0 %v1653, 28
      %v1748 = vpop.permute.xlu0 %1747
      %1749 = vrot.lane.b32.xlu0 %v1654, 28
      %v1750 = vpop.permute.xlu0 %1749
      %vm1783 = vcmask 261344
      %1784 = vst.msk [vmem:[#allocation4] sm:$0xff] %vm1783, %v1688
      %1785 = vst.msk [vmem:[#allocation4 + $0x8] sm:$0xff] %vm1783, %v1690
      %1786 = vst.msk [vmem:[#allocation4 + $0x10] sm:$0xff] %vm1783, %v1692
      %1787 = vst.msk [vmem:[#allocation4 + $0x18] sm:$0xff] %vm1783, %v1694
      %1788 = vst.msk [vmem:[#allocation4 + $0x20] sm:$0xff] %vm1783, %v1696
      %1789 = vst.msk [vmem:[#allocation4 + $0x28] sm:$0xff] %vm1783, %v1698
      %1790 = vst.msk [vmem:[#allocation4 + $0x30] sm:$0xff] %vm1783, %v1700
      %1791 = vst.msk [vmem:[#allocation4 + $0x38] sm:$0xff] %vm1783, %v1702
      %1792 = vst.msk [vmem:[#allocation4 + $0x40] sm:$0xff] %vm1783, %v1704
      %1793 = vst.msk [vmem:[#allocation4 + $0x48] sm:$0xff] %vm1783, %v1706
      %1794 = vst.msk [vmem:[#allocation4 + $0x50] sm:$0xff] %vm1783, %v1708
      %1795 = vst.msk [vmem:[#allocation4 + $0x58] sm:$0xff] %vm1783, %v1710
      %1796 = vst.msk [vmem:[#allocation4 + $0x60] sm:$0xff] %vm1783, %v1712
      %1797 = vst.msk [vmem:[#allocation4 + $0x68] sm:$0xff] %vm1783, %v1714
      %1798 = vst.msk [vmem:[#allocation4 + $0x70] sm:$0xff] %vm1783, %v1716
      %1799 = vst.msk [vmem:[#allocation4 + $0x78] sm:$0xff] %vm1783, %v1718
      %1800 = vst.msk [vmem:[#allocation4 + $0x80] sm:$0xff] %vm1783, %v1720
      %1801 = vst.msk [vmem:[#allocation4 + $0x88] sm:$0xff] %vm1783, %v1722
      %1802 = vst.msk [vmem:[#allocation4 + $0x90] sm:$0xff] %vm1783, %v1724
      %1803 = vst.msk [vmem:[#allocation4 + $0x98] sm:$0xff] %vm1783, %v1726
      %1804 = vst.msk [vmem:[#allocation4 + $0xa0] sm:$0xff] %vm1783, %v1728
      %1805 = vst.msk [vmem:[#allocation4 + $0xa8] sm:$0xff] %vm1783, %v1730
      %1806 = vst.msk [vmem:[#allocation4 + $0xb0] sm:$0xff] %vm1783, %v1732
      %1807 = vst.msk [vmem:[#allocation4 + $0xb8] sm:$0xff] %vm1783, %v1734
      %1808 = vst.msk [vmem:[#allocation4 + $0xc0] sm:$0xff] %vm1783, %v1736
      %1809 = vst.msk [vmem:[#allocation4 + $0xc8] sm:$0xff] %vm1783, %v1738
      %1810 = vst.msk [vmem:[#allocation4 + $0xd0] sm:$0xff] %vm1783, %v1740
      %1811 = vst.msk [vmem:[#allocation4 + $0xd8] sm:$0xff] %vm1783, %v1742
      %1812 = vst.msk [vmem:[#allocation4 + $0xe0] sm:$0xff] %vm1783, %v1744
      %1813 = vst.msk [vmem:[#allocation4 + $0xe8] sm:$0xff] %vm1783, %v1746
      %1814 = vst.msk [vmem:[#allocation4 + $0xf0] sm:$0xff] %vm1783, %v1748
      %1815 = vst.msk [vmem:[#allocation4 + $0xf8] sm:$0xff] %vm1783, %v1750
      %v1816 = vld [vmem:[%s1429 + $0x2] sm:$0xff]
      %v1817 = vld [vmem:[%s1429 + $0xa] sm:$0xff]
      %v1818 = vld [vmem:[%s1429 + $0x1a] sm:$0xff]
      %v1819 = vld [vmem:[%s1429 + $0x22] sm:$0xff]
      %v1820 = vld [vmem:[%s1429 + $0x32] sm:$0xff]
      %v1821 = vld [vmem:[%s1429 + $0x3a] sm:$0xff]
      %v1822 = vld [vmem:[%s1429 + $0x4a] sm:$0xff]
      %v1823 = vld [vmem:[%s1429 + $0x52] sm:$0xff]
      %v1824 = vld [vmem:[%s1429 + $0x62] sm:$0xff]
      %v1825 = vld [vmem:[%s1429 + $0x6a] sm:$0xff]
      %v1826 = vld [vmem:[%s1429 + $0x7a] sm:$0xff]
      %v1827 = vld [vmem:[%s1429 + $0x82] sm:$0xff]
      %v1828 = vld [vmem:[%s1429 + $0x92] sm:$0xff]
      %v1829 = vld [vmem:[%s1429 + $0x9a] sm:$0xff]
      %v1830 = vld [vmem:[%s1429 + $0xaa] sm:$0xff]
      %v1831 = vld [vmem:[%s1429 + $0xb2] sm:$0xff]
      %v1832 = vld [vmem:[%s1429 + $0xc2] sm:$0xff]
      %v1833 = vld [vmem:[%s1429 + $0xca] sm:$0xff]
      %v1834 = vld [vmem:[%s1429 + $0xda] sm:$0xff]
      %v1835 = vld [vmem:[%s1429 + $0xe2] sm:$0xff]
      %v1836 = vld [vmem:[%s1429 + $0xf2] sm:$0xff]
      %v1837 = vld [vmem:[%s1429 + $0xfa] sm:$0xff]
      %v1838 = vld [vmem:[%s1429 + $0x10a] sm:$0xff]
      %v1839 = vld [vmem:[%s1429 + $0x112] sm:$0xff]
      %v1840 = vld [vmem:[%s1429 + $0x122] sm:$0xff]
      %v1841 = vld [vmem:[%s1429 + $0x12a] sm:$0xff]
      %v1842 = vld [vmem:[%s1429 + $0x13a] sm:$0xff]
      %v1843 = vld [vmem:[%s1429 + $0x142] sm:$0xff]
      %v1844 = vld [vmem:[%s1429 + $0x152] sm:$0xff]
      %v1845 = vld [vmem:[%s1429 + $0x15a] sm:$0xff]
      %v1846 = vld [vmem:[%s1429 + $0x16a] sm:$0xff]
      %v1847 = vld [vmem:[%s1429 + $0x172] sm:$0xff]
      %1880 = vrot.lane.b32.xlu0 %v1816, 32
      %v1881 = vpop.permute.xlu0 %1880
      %1882 = vrot.lane.b32.xlu0 %v1817, 32
      %v1883 = vpop.permute.xlu0 %1882
      %1884 = vrot.lane.b32.xlu0 %v1818, 32
      %v1885 = vpop.permute.xlu0 %1884
      %1886 = vrot.lane.b32.xlu0 %v1819, 32
      %v1887 = vpop.permute.xlu0 %1886
      %1888 = vrot.lane.b32.xlu0 %v1820, 32
      %v1889 = vpop.permute.xlu0 %1888
      %1890 = vrot.lane.b32.xlu0 %v1821, 32
      %v1891 = vpop.permute.xlu0 %1890
      %1892 = vrot.lane.b32.xlu0 %v1822, 32
      %v1893 = vpop.permute.xlu0 %1892
      %1894 = vrot.lane.b32.xlu0 %v1823, 32
      %v1895 = vpop.permute.xlu0 %1894
      %1896 = vrot.lane.b32.xlu0 %v1824, 32
      %v1897 = vpop.permute.xlu0 %1896
      %1898 = vrot.lane.b32.xlu0 %v1825, 32
      %v1899 = vpop.permute.xlu0 %1898
      %1900 = vrot.lane.b32.xlu0 %v1826, 32
      %v1901 = vpop.permute.xlu0 %1900
      %1902 = vrot.lane.b32.xlu0 %v1827, 32
      %v1903 = vpop.permute.xlu0 %1902
      %1904 = vrot.lane.b32.xlu0 %v1828, 32
      %v1905 = vpop.permute.xlu0 %1904
      %1906 = vrot.lane.b32.xlu0 %v1829, 32
      %v1907 = vpop.permute.xlu0 %1906
      %1908 = vrot.lane.b32.xlu0 %v1830, 32
      %v1909 = vpop.permute.xlu0 %1908
      %1910 = vrot.lane.b32.xlu0 %v1831, 32
      %v1911 = vpop.permute.xlu0 %1910
      %1912 = vrot.lane.b32.xlu0 %v1832, 32
      %v1913 = vpop.permute.xlu0 %1912
      %1914 = vrot.lane.b32.xlu0 %v1833, 32
      %v1915 = vpop.permute.xlu0 %1914
      %1916 = vrot.lane.b32.xlu0 %v1834, 32
      %v1917 = vpop.permute.xlu0 %1916
      %1918 = vrot.lane.b32.xlu0 %v1835, 32
      %v1919 = vpop.permute.xlu0 %1918
      %1920 = vrot.lane.b32.xlu0 %v1836, 32
      %v1921 = vpop.permute.xlu0 %1920
      %1922 = vrot.lane.b32.xlu0 %v1837, 32
      %v1923 = vpop.permute.xlu0 %1922
      %1924 = vrot.lane.b32.xlu0 %v1838, 32
      %v1925 = vpop.permute.xlu0 %1924
      %1926 = vrot.lane.b32.xlu0 %v1839, 32
      %v1927 = vpop.permute.xlu0 %1926
      %1928 = vrot.lane.b32.xlu0 %v1840, 32
      %v1929 = vpop.permute.xlu0 %1928
      %1930 = vrot.lane.b32.xlu0 %v1841, 32
      %v1931 = vpop.permute.xlu0 %1930
      %1932 = vrot.lane.b32.xlu0 %v1842, 32
      %v1933 = vpop.permute.xlu0 %1932
      %1934 = vrot.lane.b32.xlu0 %v1843, 32
      %v1935 = vpop.permute.xlu0 %1934
      %1936 = vrot.lane.b32.xlu0 %v1844, 32
      %v1937 = vpop.permute.xlu0 %1936
      %1938 = vrot.lane.b32.xlu0 %v1845, 32
      %v1939 = vpop.permute.xlu0 %1938
      %1940 = vrot.lane.b32.xlu0 %v1846, 32
      %v1941 = vpop.permute.xlu0 %1940
      %1942 = vrot.lane.b32.xlu0 %v1847, 32
      %v1943 = vpop.permute.xlu0 %1942
      %vm1976 = vcmask 294144
      %1977 = vst.msk [vmem:[#allocation4] sm:$0xff] %vm1976, %v1881
      %1978 = vst.msk [vmem:[#allocation4 + $0x8] sm:$0xff] %vm1976, %v1883
      %1979 = vst.msk [vmem:[#allocation4 + $0x10] sm:$0xff] %vm1976, %v1885
      %1980 = vst.msk [vmem:[#allocation4 + $0x18] sm:$0xff] %vm1976, %v1887
      %1981 = vst.msk [vmem:[#allocation4 + $0x20] sm:$0xff] %vm1976, %v1889
      %1982 = vst.msk [vmem:[#allocation4 + $0x28] sm:$0xff] %vm1976, %v1891
      %1983 = vst.msk [vmem:[#allocation4 + $0x30] sm:$0xff] %vm1976, %v1893
      %1984 = vst.msk [vmem:[#allocation4 + $0x38] sm:$0xff] %vm1976, %v1895
      %1985 = vst.msk [vmem:[#allocation4 + $0x40] sm:$0xff] %vm1976, %v1897
      %1986 = vst.msk [vmem:[#allocation4 + $0x48] sm:$0xff] %vm1976, %v1899
      %1987 = vst.msk [vmem:[#allocation4 + $0x50] sm:$0xff] %vm1976, %v1901
      %1988 = vst.msk [vmem:[#allocation4 + $0x58] sm:$0xff] %vm1976, %v1903
      %1989 = vst.msk [vmem:[#allocation4 + $0x60] sm:$0xff] %vm1976, %v1905
      %1990 = vst.msk [vmem:[#allocation4 + $0x68] sm:$0xff] %vm1976, %v1907
      %1991 = vst.msk [vmem:[#allocation4 + $0x70] sm:$0xff] %vm1976, %v1909
      %1992 = vst.msk [vmem:[#allocation4 + $0x78] sm:$0xff] %vm1976, %v1911
      %1993 = vst.msk [vmem:[#allocation4 + $0x80] sm:$0xff] %vm1976, %v1913
      %1994 = vst.msk [vmem:[#allocation4 + $0x88] sm:$0xff] %vm1976, %v1915
      %1995 = vst.msk [vmem:[#allocation4 + $0x90] sm:$0xff] %vm1976, %v1917
      %1996 = vst.msk [vmem:[#allocation4 + $0x98] sm:$0xff] %vm1976, %v1919
      %1997 = vst.msk [vmem:[#allocation4 + $0xa0] sm:$0xff] %vm1976, %v1921
      %1998 = vst.msk [vmem:[#allocation4 + $0xa8] sm:$0xff] %vm1976, %v1923
      %1999 = vst.msk [vmem:[#allocation4 + $0xb0] sm:$0xff] %vm1976, %v1925
      %2000 = vst.msk [vmem:[#allocation4 + $0xb8] sm:$0xff] %vm1976, %v1927
      %2001 = vst.msk [vmem:[#allocation4 + $0xc0] sm:$0xff] %vm1976, %v1929
      %2002 = vst.msk [vmem:[#allocation4 + $0xc8] sm:$0xff] %vm1976, %v1931
      %2003 = vst.msk [vmem:[#allocation4 + $0xd0] sm:$0xff] %vm1976, %v1933
      %2004 = vst.msk [vmem:[#allocation4 + $0xd8] sm:$0xff] %vm1976, %v1935
      %2005 = vst.msk [vmem:[#allocation4 + $0xe0] sm:$0xff] %vm1976, %v1937
      %2006 = vst.msk [vmem:[#allocation4 + $0xe8] sm:$0xff] %vm1976, %v1939
      %2007 = vst.msk [vmem:[#allocation4 + $0xf0] sm:$0xff] %vm1976, %v1941
      %2008 = vst.msk [vmem:[#allocation4 + $0xf8] sm:$0xff] %vm1976, %v1943
      %v2009 = vld [vmem:[#allocation4] sm:$0xff]
      %v2010 = vld [vmem:[#allocation4 + $0x8] sm:$0xff]
      %v2011 = vld [vmem:[#allocation4 + $0x10] sm:$0xff]
      %v2012 = vld [vmem:[#allocation4 + $0x18] sm:$0xff]
      %v2013 = vld [vmem:[#allocation4 + $0x20] sm:$0xff]
      %v2014 = vld [vmem:[#allocation4 + $0x28] sm:$0xff]
      %v2015 = vld [vmem:[#allocation4 + $0x30] sm:$0xff]
      %v2016 = vld [vmem:[#allocation4 + $0x38] sm:$0xff]
      %v2017 = vld [vmem:[#allocation4 + $0x40] sm:$0xff]
      %v2018 = vld [vmem:[#allocation4 + $0x48] sm:$0xff]
      %v2019 = vld [vmem:[#allocation4 + $0x50] sm:$0xff]
      %v2020 = vld [vmem:[#allocation4 + $0x58] sm:$0xff]
      %v2021 = vld [vmem:[#allocation4 + $0x60] sm:$0xff]
      %v2022 = vld [vmem:[#allocation4 + $0x68] sm:$0xff]
      %v2023 = vld [vmem:[#allocation4 + $0x70] sm:$0xff]
      %v2024 = vld [vmem:[#allocation4 + $0x78] sm:$0xff]
      %v2025 = vld [vmem:[#allocation4 + $0x80] sm:$0xff]
      %v2026 = vld [vmem:[#allocation4 + $0x88] sm:$0xff]
      %v2027 = vld [vmem:[#allocation4 + $0x90] sm:$0xff]
      %v2028 = vld [vmem:[#allocation4 + $0x98] sm:$0xff]
      %v2029 = vld [vmem:[#allocation4 + $0xa0] sm:$0xff]
      %v2030 = vld [vmem:[#allocation4 + $0xa8] sm:$0xff]
      %v2031 = vld [vmem:[#allocation4 + $0xb0] sm:$0xff]
      %v2032 = vld [vmem:[#allocation4 + $0xb8] sm:$0xff]
      %v2033 = vld [vmem:[#allocation4 + $0xc0] sm:$0xff]
      %v2034 = vld [vmem:[#allocation4 + $0xc8] sm:$0xff]
      %v2035 = vld [vmem:[#allocation4 + $0xd0] sm:$0xff]
      %v2036 = vld [vmem:[#allocation4 + $0xd8] sm:$0xff]
      %v2037 = vld [vmem:[#allocation4 + $0xe0] sm:$0xff]
      %v2038 = vld [vmem:[#allocation4 + $0xe8] sm:$0xff]
      %v2039 = vld [vmem:[#allocation4 + $0xf0] sm:$0xff]
      %v2040 = vld [vmem:[#allocation4 + $0xf8] sm:$0xff]
      %v2041 = vld [vmem:[%s1] sm:$0xff]
      %v2042 = vld [vmem:[%s1 + $0x8] sm:$0xff]
      %v2043 = vld [vmem:[%s1 + $0x10] sm:$0xff]
      %v2044 = vld [vmem:[%s1 + $0x18] sm:$0xff]
      %v2045 = vld [vmem:[%s1 + $0x20] sm:$0xf]
      %vm2046 = vcmask 293888
      %v2048 = vsel %vm2046, %v2009, 0
      %v2051 = vsel %vm2046, %v2010, 0
      %v2054 = vsel %vm2046, %v2011, 0
      %v2057 = vsel %vm2046, %v2012, 0
      %v2060 = vsel %vm2046, %v2013, 0
      %v2063 = vsel %vm2046, %v2014, 0
      %v2066 = vsel %vm2046, %v2015, 0
      %v2069 = vsel %vm2046, %v2016, 0
      %v2072 = vsel %vm2046, %v2017, 0
      %v2075 = vsel %vm2046, %v2018, 0
      %v2078 = vsel %vm2046, %v2019, 0
      %v2081 = vsel %vm2046, %v2020, 0
      %v2084 = vsel %vm2046, %v2021, 0
      %v2087 = vsel %vm2046, %v2022, 0
      %v2090 = vsel %vm2046, %v2023, 0
      %v2093 = vsel %vm2046, %v2024, 0
      %v2096 = vsel %vm2046, %v2025, 0
      %v2099 = vsel %vm2046, %v2026, 0
      %v2102 = vsel %vm2046, %v2027, 0
      %v2105 = vsel %vm2046, %v2028, 0
      %v2108 = vsel %vm2046, %v2029, 0
      %v2111 = vsel %vm2046, %v2030, 0
      %v2114 = vsel %vm2046, %v2031, 0
      %v2117 = vsel %vm2046, %v2032, 0
      %v2120 = vsel %vm2046, %v2033, 0
      %v2123 = vsel %vm2046, %v2034, 0
      %v2126 = vsel %vm2046, %v2035, 0
      %v2129 = vsel %vm2046, %v2036, 0
      %v2132 = vsel %vm2046, %v2037, 0
      %v2135 = vsel %vm2046, %v2038, 0
      %v2138 = vsel %vm2046, %v2039, 0
      %v2141 = vsel %vm2046, %v2040, 0
      %vm2143 = vcmask 1043456
      %v2145 = vsel %vm2143, %v2045, 0
      %2147 = vmatpush.msra.mxu0 0.0
      %2148 = vmatpush.msra.mxu0 0.0
      %2149 = vmatpush.msra.mxu0 0.0
      %2150 = vmatpush.msra.mxu0 0.0
      %2151 = vmatpush.msra.mxu0 0.0
      %2152 = vmatpush.msra.mxu0 0.0
      %2153 = vmatpush.msra.mxu0 0.0
      %2154 = vmatpush.msra.mxu0 0.0
      %2155 = vmatpush.msra.mxu0 0.0
      %2156 = vmatpush.msra.mxu0 0.0
      %2157 = vmatpush.msra.mxu0 0.0
      %2158 = vmatpush.msra.mxu0 %v2145
      %2159 = vmatpush.msra.mxu0 %v2044
      %2160 = vmatpush.msra.mxu0 %v2043
      %2161 = vmatpush.msra.mxu0 %v2042
      %2162 = vmatpush.msra.mxu0 %v2041
      %2163 = vmatmul.f32.gmra.mxu0 %v2048
      %v2164 = vpop.f32.mrf.mxu0
      %v2165 = vadd.f32 0.0, %v2164
      %2166 = vmatmul.f32.gmra.mxu0 %v2051
      %v2167 = vpop.f32.mrf.mxu0
      %v2168 = vadd.f32 0.0, %v2167
      %2169 = vmatmul.f32.gmra.mxu0 %v2054
      %v2170 = vpop.f32.mrf.mxu0
      %v2171 = vadd.f32 0.0, %v2170
      %2172 = vmatmul.f32.gmra.mxu0 %v2057
      %v2173 = vpop.f32.mrf.mxu0
      %v2174 = vadd.f32 0.0, %v2173
      %2175 = vmatmul.f32.gmra.mxu0 %v2060
      %v2176 = vpop.f32.mrf.mxu0
      %v2177 = vadd.f32 0.0, %v2176
      %2178 = vmatmul.f32.gmra.mxu0 %v2063
      %v2179 = vpop.f32.mrf.mxu0
      %v2180 = vadd.f32 0.0, %v2179
      %2181 = vmatmul.f32.gmra.mxu0 %v2066
      %v2182 = vpop.f32.mrf.mxu0
      %v2183 = vadd.f32 0.0, %v2182
      %2184 = vmatmul.f32.gmra.mxu0 %v2069
      %v2185 = vpop.f32.mrf.mxu0
      %v2186 = vadd.f32 0.0, %v2185
      %2187 = vmatmul.f32.gmra.mxu0 %v2072
      %v2188 = vpop.f32.mrf.mxu0
      %v2189 = vadd.f32 0.0, %v2188
      %2190 = vmatmul.f32.gmra.mxu0 %v2075
      %v2191 = vpop.f32.mrf.mxu0
      %v2192 = vadd.f32 0.0, %v2191
      %2193 = vmatmul.f32.gmra.mxu0 %v2078
      %v2194 = vpop.f32.mrf.mxu0
      %v2195 = vadd.f32 0.0, %v2194
      %2196 = vmatmul.f32.gmra.mxu0 %v2081
      %v2197 = vpop.f32.mrf.mxu0
      %v2198 = vadd.f32 0.0, %v2197
      %2199 = vmatmul.f32.gmra.mxu0 %v2084
      %v2200 = vpop.f32.mrf.mxu0
      %v2201 = vadd.f32 0.0, %v2200
      %2202 = vmatmul.f32.gmra.mxu0 %v2087
      %v2203 = vpop.f32.mrf.mxu0
      %v2204 = vadd.f32 0.0, %v2203
      %2205 = vmatmul.f32.gmra.mxu0 %v2090
      %v2206 = vpop.f32.mrf.mxu0
      %v2207 = vadd.f32 0.0, %v2206
      %2208 = vmatmul.f32.gmra.mxu0 %v2093
      %v2209 = vpop.f32.mrf.mxu0
      %v2210 = vadd.f32 0.0, %v2209
      %2211 = vmatmul.f32.gmra.mxu0 %v2096
      %v2212 = vpop.f32.mrf.mxu0
      %v2213 = vadd.f32 0.0, %v2212
      %2214 = vmatmul.f32.gmra.mxu0 %v2099
      %v2215 = vpop.f32.mrf.mxu0
      %v2216 = vadd.f32 0.0, %v2215
      %2217 = vmatmul.f32.gmra.mxu0 %v2102
      %v2218 = vpop.f32.mrf.mxu0
      %v2219 = vadd.f32 0.0, %v2218
      %2220 = vmatmul.f32.gmra.mxu0 %v2105
      %v2221 = vpop.f32.mrf.mxu0
      %v2222 = vadd.f32 0.0, %v2221
      %2223 = vmatmul.f32.gmra.mxu0 %v2108
      %v2224 = vpop.f32.mrf.mxu0
      %v2225 = vadd.f32 0.0, %v2224
      %2226 = vmatmul.f32.gmra.mxu0 %v2111
      %v2227 = vpop.f32.mrf.mxu0
      %v2228 = vadd.f32 0.0, %v2227
      %2229 = vmatmul.f32.gmra.mxu0 %v2114
      %v2230 = vpop.f32.mrf.mxu0
      %v2231 = vadd.f32 0.0, %v2230
      %2232 = vmatmul.f32.gmra.mxu0 %v2117
      %v2233 = vpop.f32.mrf.mxu0
      %v2234 = vadd.f32 0.0, %v2233
      %2235 = vmatmul.f32.gmra.mxu0 %v2120
      %v2236 = vpop.f32.mrf.mxu0
      %v2237 = vadd.f32 0.0, %v2236
      %2238 = vmatmul.f32.gmra.mxu0 %v2123
      %v2239 = vpop.f32.mrf.mxu0
      %v2240 = vadd.f32 0.0, %v2239
      %2241 = vmatmul.f32.gmra.mxu0 %v2126
      %v2242 = vpop.f32.mrf.mxu0
      %v2243 = vadd.f32 0.0, %v2242
      %2244 = vmatmul.f32.gmra.mxu0 %v2129
      %v2245 = vpop.f32.mrf.mxu0
      %v2246 = vadd.f32 0.0, %v2245
      %2247 = vmatmul.f32.gmra.mxu0 %v2132
      %v2248 = vpop.f32.mrf.mxu0
      %v2249 = vadd.f32 0.0, %v2248
      %2250 = vmatmul.f32.gmra.mxu0 %v2135
      %v2251 = vpop.f32.mrf.mxu0
      %v2252 = vadd.f32 0.0, %v2251
      %2253 = vmatmul.f32.gmra.mxu0 %v2138
      %v2254 = vpop.f32.mrf.mxu0
      %v2255 = vadd.f32 0.0, %v2254
      %2256 = vmatmul.f32.gmra.mxu0 %v2141
      %v2257 = vpop.f32.mrf.mxu0
      %v2258 = vadd.f32 0.0, %v2257
      %2259 = vdwg.mxu0
      %v2260 = vld [vmem:[%s2] sm:$0x1]
      %v2262 = vperm.slane %v2260, 0
      %v2264 = vmul.f32 %v2165, %v2262
      %v2265 = vmul.f32 %v2168, %v2262
      %v2266 = vmul.f32 %v2171, %v2262
      %v2267 = vmul.f32 %v2174, %v2262
      %v2268 = vmul.f32 %v2177, %v2262
      %v2269 = vmul.f32 %v2180, %v2262
      %v2270 = vmul.f32 %v2183, %v2262
      %v2271 = vmul.f32 %v2186, %v2262
      %v2272 = vmul.f32 %v2189, %v2262
      %v2273 = vmul.f32 %v2192, %v2262
      %v2274 = vmul.f32 %v2195, %v2262
      %v2275 = vmul.f32 %v2198, %v2262
      %v2276 = vmul.f32 %v2201, %v2262
      %v2277 = vmul.f32 %v2204, %v2262
      %v2278 = vmul.f32 %v2207, %v2262
      %v2279 = vmul.f32 %v2210, %v2262
      %v2280 = vmul.f32 %v2213, %v2262
      %v2281 = vmul.f32 %v2216, %v2262
      %v2282 = vmul.f32 %v2219, %v2262
      %v2283 = vmul.f32 %v2222, %v2262
      %v2284 = vmul.f32 %v2225, %v2262
      %v2285 = vmul.f32 %v2228, %v2262
      %v2286 = vmul.f32 %v2231, %v2262
      %v2287 = vmul.f32 %v2234, %v2262
      %v2288 = vmul.f32 %v2237, %v2262
      %v2289 = vmul.f32 %v2240, %v2262
      %v2290 = vmul.f32 %v2243, %v2262
      %v2291 = vmul.f32 %v2246, %v2262
      %v2292 = vmul.f32 %v2249, %v2262
      %v2293 = vmul.f32 %v2252, %v2262
      %v2294 = vmul.f32 %v2255, %v2262
      %v2295 = vmul.f32 %v2258, %v2262
      %v2296 = vld [vmem:[%s3] sm:$0x1]
      %v2298 = vperm.slane %v2296, 0
      %v2300 = vadd.f32 %v2264, %v2298
      %v2301 = vadd.f32 %v2265, %v2298
      %v2302 = vadd.f32 %v2266, %v2298
      %v2303 = vadd.f32 %v2267, %v2298
      %v2304 = vadd.f32 %v2268, %v2298
      %v2305 = vadd.f32 %v2269, %v2298
      %v2306 = vadd.f32 %v2270, %v2298
      %v2307 = vadd.f32 %v2271, %v2298
      %v2308 = vadd.f32 %v2272, %v2298
      %v2309 = vadd.f32 %v2273, %v2298
      %v2310 = vadd.f32 %v2274, %v2298
      %v2311 = vadd.f32 %v2275, %v2298
      %v2312 = vadd.f32 %v2276, %v2298
      %v2313 = vadd.f32 %v2277, %v2298
      %v2314 = vadd.f32 %v2278, %v2298
      %v2315 = vadd.f32 %v2279, %v2298
      %v2316 = vadd.f32 %v2280, %v2298
      %v2317 = vadd.f32 %v2281, %v2298
      %v2318 = vadd.f32 %v2282, %v2298
      %v2319 = vadd.f32 %v2283, %v2298
      %v2320 = vadd.f32 %v2284, %v2298
      %v2321 = vadd.f32 %v2285, %v2298
      %v2322 = vadd.f32 %v2286, %v2298
      %v2323 = vadd.f32 %v2287, %v2298
      %v2324 = vadd.f32 %v2288, %v2298
      %v2325 = vadd.f32 %v2289, %v2298
      %v2326 = vadd.f32 %v2290, %v2298
      %v2327 = vadd.f32 %v2291, %v2298
      %v2328 = vadd.f32 %v2292, %v2298
      %v2329 = vadd.f32 %v2293, %v2298
      %v2330 = vadd.f32 %v2294, %v2298
      %v2331 = vadd.f32 %v2295, %v2298
      %v2332 = vmax.f32 %v2300, 0.0
      %v2333 = vmax.f32 %v2301, 0.0
      %v2334 = vmax.f32 %v2302, 0.0
      %v2335 = vmax.f32 %v2303, 0.0
      %v2336 = vmax.f32 %v2304, 0.0
      %v2337 = vmax.f32 %v2305, 0.0
      %v2338 = vmax.f32 %v2306, 0.0
      %v2339 = vmax.f32 %v2307, 0.0
      %v2340 = vmax.f32 %v2308, 0.0
      %v2341 = vmax.f32 %v2309, 0.0
      %v2342 = vmax.f32 %v2310, 0.0
      %v2343 = vmax.f32 %v2311, 0.0
      %v2344 = vmax.f32 %v2312, 0.0
      %v2345 = vmax.f32 %v2313, 0.0
      %v2346 = vmax.f32 %v2314, 0.0
      %v2347 = vmax.f32 %v2315, 0.0
      %v2348 = vmax.f32 %v2316, 0.0
      %v2349 = vmax.f32 %v2317, 0.0
      %v2350 = vmax.f32 %v2318, 0.0
      %v2351 = vmax.f32 %v2319, 0.0
      %v2352 = vmax.f32 %v2320, 0.0
      %v2353 = vmax.f32 %v2321, 0.0
      %v2354 = vmax.f32 %v2322, 0.0
      %v2355 = vmax.f32 %v2323, 0.0
      %v2356 = vmax.f32 %v2324, 0.0
      %v2357 = vmax.f32 %v2325, 0.0
      %v2358 = vmax.f32 %v2326, 0.0
      %v2359 = vmax.f32 %v2327, 0.0
      %v2360 = vmax.f32 %v2328, 0.0
      %v2361 = vmax.f32 %v2329, 0.0
      %v2362 = vmax.f32 %v2330, 0.0
      %v2363 = vmax.f32 %v2331, 0.0
      %vm2364 = vcmask 64512
      %2365 = vst.msk [vmem:[#allocation3] sm:$0xff] %vm2364, 0.0
      %2366 = vst.msk [vmem:[#allocation3 + $0x8] sm:$0xff] %vm2364, 0.0
      %vm2367 = vcmask 58368
      %2368 = vst.msk [vmem:[#allocation3 + $0x10] sm:$0x3] %vm2367, 0.0
      %2369 = vst.msk [vmem:[#allocation3 + $0x18] sm:$0xff] %vm2364, 0.0
      %2370 = vst.msk [vmem:[#allocation3 + $0x20] sm:$0xff] %vm2364, 0.0
      %2371 = vst.msk [vmem:[#allocation3 + $0x28] sm:$0x3] %vm2367, 0.0
      %2372 = vst.msk [vmem:[#allocation3 + $0x30] sm:$0xff] %vm2364, 0.0
      %2373 = vst.msk [vmem:[#allocation3 + $0x38] sm:$0xff] %vm2364, 0.0
      %2374 = vst.msk [vmem:[#allocation3 + $0x40] sm:$0x3] %vm2367, 0.0
      %2375 = vst.msk [vmem:[#allocation3 + $0x48] sm:$0xff] %vm2364, 0.0
      %2376 = vst.msk [vmem:[#allocation3 + $0x50] sm:$0xff] %vm2364, 0.0
      %2377 = vst.msk [vmem:[#allocation3 + $0x58] sm:$0x3] %vm2367, 0.0
      %2378 = vst.msk [vmem:[#allocation3 + $0x60] sm:$0xff] %vm2364, 0.0
      %2379 = vst.msk [vmem:[#allocation3 + $0x68] sm:$0xff] %vm2364, 0.0
      %2380 = vst.msk [vmem:[#allocation3 + $0x70] sm:$0x3] %vm2367, 0.0
      %2381 = vst.msk [vmem:[#allocation3 + $0x78] sm:$0xff] %vm2364, 0.0
      %2382 = vst.msk [vmem:[#allocation3 + $0x80] sm:$0xff] %vm2364, 0.0
      %2383 = vst.msk [vmem:[#allocation3 + $0x88] sm:$0x3] %vm2367, 0.0
      %2384 = vst.msk [vmem:[#allocation3 + $0x90] sm:$0xff] %vm2364, 0.0
      %2385 = vst.msk [vmem:[#allocation3 + $0x98] sm:$0xff] %vm2364, 0.0
      %2386 = vst.msk [vmem:[#allocation3 + $0xa0] sm:$0x3] %vm2367, 0.0
      %2387 = vst.msk [vmem:[#allocation3 + $0xa8] sm:$0xff] %vm2364, 0.0
      %2388 = vst.msk [vmem:[#allocation3 + $0xb0] sm:$0xff] %vm2364, 0.0
      %2389 = vst.msk [vmem:[#allocation3 + $0xb8] sm:$0x3] %vm2367, 0.0
      %2390 = vst.msk [vmem:[#allocation3 + $0xc0] sm:$0xff] %vm2364, 0.0
      %2391 = vst.msk [vmem:[#allocation3 + $0xc8] sm:$0xff] %vm2364, 0.0
      %2392 = vst.msk [vmem:[#allocation3 + $0xd0] sm:$0x3] %vm2367, 0.0
      %2393 = vst.msk [vmem:[#allocation3 + $0xd8] sm:$0xff] %vm2364, 0.0
      %2394 = vst.msk [vmem:[#allocation3 + $0xe0] sm:$0xff] %vm2364, 0.0
      %2395 = vst.msk [vmem:[#allocation3 + $0xe8] sm:$0x3] %vm2367, 0.0
      %2396 = vst.msk [vmem:[#allocation3 + $0xf0] sm:$0xff] %vm2364, 0.0
      %2397 = vst.msk [vmem:[#allocation3 + $0xf8] sm:$0xff] %vm2364, 0.0
      %2398 = vst.msk [vmem:[#allocation3 + $0x100] sm:$0x3] %vm2367, 0.0
      %2399 = vst.msk [vmem:[#allocation3 + $0x108] sm:$0xff] %vm2364, 0.0
      %2400 = vst.msk [vmem:[#allocation3 + $0x110] sm:$0xff] %vm2364, 0.0
      %2401 = vst.msk [vmem:[#allocation3 + $0x118] sm:$0x3] %vm2367, 0.0
      %2402 = vst.msk [vmem:[#allocation3 + $0x120] sm:$0xff] %vm2364, 0.0
      %2403 = vst.msk [vmem:[#allocation3 + $0x128] sm:$0xff] %vm2364, 0.0
      %2404 = vst.msk [vmem:[#allocation3 + $0x130] sm:$0x3] %vm2367, 0.0
      %2405 = vst.msk [vmem:[#allocation3 + $0x138] sm:$0xff] %vm2364, 0.0
      %2406 = vst.msk [vmem:[#allocation3 + $0x140] sm:$0xff] %vm2364, 0.0
      %2407 = vst.msk [vmem:[#allocation3 + $0x148] sm:$0x3] %vm2367, 0.0
      %2408 = vst.msk [vmem:[#allocation3 + $0x150] sm:$0xff] %vm2364, 0.0
      %2409 = vst.msk [vmem:[#allocation3 + $0x158] sm:$0xff] %vm2364, 0.0
      %2410 = vst.msk [vmem:[#allocation3 + $0x160] sm:$0x3] %vm2367, 0.0
      %2411 = vst.msk [vmem:[#allocation3 + $0x168] sm:$0xff] %vm2364, 0.0
      %2412 = vst.msk [vmem:[#allocation3 + $0x170] sm:$0xff] %vm2364, 0.0
      %2413 = vst.msk [vmem:[#allocation3 + $0x178] sm:$0x3] %vm2367, 0.0
      %2414 = vst.msk [vmem:[#allocation3 + $0x180] sm:$0xff] %vm2364, 0.0
      %2415 = vst.msk [vmem:[#allocation3 + $0x188] sm:$0xff] %vm2364, 0.0
      %2416 = vst.msk [vmem:[#allocation3 + $0x190] sm:$0x3] %vm2367, 0.0
      %2417 = vst.msk [vmem:[#allocation3 + $0x198] sm:$0xff] %vm2364, 0.0
      %2418 = vst.msk [vmem:[#allocation3 + $0x1a0] sm:$0xff] %vm2364, 0.0
      %2419 = vst.msk [vmem:[#allocation3 + $0x1a8] sm:$0x3] %vm2367, 0.0
      %s2420 = scalar_lea.vmem [#allocation3], 24
      %2421 = vst.msk [vmem:[%s2420 + $0x1] sm:$0xff] %vm2364, %v2332
      %2422 = vst.msk [vmem:[%s2420 + $0x9] sm:$0xff] %vm2364, %v2333
      %2423 = vst.msk [vmem:[%s2420 + $0x19] sm:$0xff] %vm2364, %v2334
      %2424 = vst.msk [vmem:[%s2420 + $0x21] sm:$0xff] %vm2364, %v2335
      %2425 = vst.msk [vmem:[%s2420 + $0x31] sm:$0xff] %vm2364, %v2336
      %2426 = vst.msk [vmem:[%s2420 + $0x39] sm:$0xff] %vm2364, %v2337
      %2427 = vst.msk [vmem:[%s2420 + $0x49] sm:$0xff] %vm2364, %v2338
      %2428 = vst.msk [vmem:[%s2420 + $0x51] sm:$0xff] %vm2364, %v2339
      %2429 = vst.msk [vmem:[%s2420 + $0x61] sm:$0xff] %vm2364, %v2340
      %2430 = vst.msk [vmem:[%s2420 + $0x69] sm:$0xff] %vm2364, %v2341
      %2431 = vst.msk [vmem:[%s2420 + $0x79] sm:$0xff] %vm2364, %v2342
      %2432 = vst.msk [vmem:[%s2420 + $0x81] sm:$0xff] %vm2364, %v2343
      %2433 = vst.msk [vmem:[%s2420 + $0x91] sm:$0xff] %vm2364, %v2344
      %2434 = vst.msk [vmem:[%s2420 + $0x99] sm:$0xff] %vm2364, %v2345
      %2435 = vst.msk [vmem:[%s2420 + $0xa9] sm:$0xff] %vm2364, %v2346
      %2436 = vst.msk [vmem:[%s2420 + $0xb1] sm:$0xff] %vm2364, %v2347
      %2437 = vst.msk [vmem:[%s2420 + $0xc1] sm:$0xff] %vm2364, %v2348
      %2438 = vst.msk [vmem:[%s2420 + $0xc9] sm:$0xff] %vm2364, %v2349
      %2439 = vst.msk [vmem:[%s2420 + $0xd9] sm:$0xff] %vm2364, %v2350
      %2440 = vst.msk [vmem:[%s2420 + $0xe1] sm:$0xff] %vm2364, %v2351
      %2441 = vst.msk [vmem:[%s2420 + $0xf1] sm:$0xff] %vm2364, %v2352
      %2442 = vst.msk [vmem:[%s2420 + $0xf9] sm:$0xff] %vm2364, %v2353
      %2443 = vst.msk [vmem:[%s2420 + $0x109] sm:$0xff] %vm2364, %v2354
      %2444 = vst.msk [vmem:[%s2420 + $0x111] sm:$0xff] %vm2364, %v2355
      %2445 = vst.msk [vmem:[%s2420 + $0x121] sm:$0xff] %vm2364, %v2356
      %2446 = vst.msk [vmem:[%s2420 + $0x129] sm:$0xff] %vm2364, %v2357
      %2447 = vst.msk [vmem:[%s2420 + $0x139] sm:$0xff] %vm2364, %v2358
      %2448 = vst.msk [vmem:[%s2420 + $0x141] sm:$0xff] %vm2364, %v2359
      %2449 = vst.msk [vmem:[%s2420 + $0x151] sm:$0xff] %vm2364, %v2360
      %2450 = vst.msk [vmem:[%s2420 + $0x159] sm:$0xff] %vm2364, %v2361
      %2451 = vst.msk [vmem:[%s2420 + $0x169] sm:$0xff] %vm2364, %v2362
      %2452 = vst.msk [vmem:[%s2420 + $0x171] sm:$0xff] %vm2364, %v2363
      %v2453 = vld [vmem:[#allocation3] sm:$0xff]
      %v2454 = vld [vmem:[#allocation3 + $0x8] sm:$0xff]
      %v2455 = vld [vmem:[#allocation3 + $0x18] sm:$0xff]
      %v2456 = vld [vmem:[#allocation3 + $0x20] sm:$0xff]
      %v2457 = vld [vmem:[#allocation3 + $0x30] sm:$0xff]
      %v2458 = vld [vmem:[#allocation3 + $0x38] sm:$0xff]
      %v2459 = vld [vmem:[#allocation3 + $0x48] sm:$0xff]
      %v2460 = vld [vmem:[#allocation3 + $0x50] sm:$0xff]
      %v2461 = vld [vmem:[#allocation3 + $0x60] sm:$0xff]
      %v2462 = vld [vmem:[#allocation3 + $0x68] sm:$0xff]
      %v2463 = vld [vmem:[#allocation3 + $0x78] sm:$0xff]
      %v2464 = vld [vmem:[#allocation3 + $0x80] sm:$0xff]
      %v2465 = vld [vmem:[#allocation3 + $0x90] sm:$0xff]
      %v2466 = vld [vmem:[#allocation3 + $0x98] sm:$0xff]
      %v2467 = vld [vmem:[#allocation3 + $0xa8] sm:$0xff]
      %v2468 = vld [vmem:[#allocation3 + $0xb0] sm:$0xff]
      %v2469 = vld [vmem:[#allocation3 + $0xc0] sm:$0xff]
      %v2470 = vld [vmem:[#allocation3 + $0xc8] sm:$0xff]
      %v2471 = vld [vmem:[#allocation3 + $0xd8] sm:$0xff]
      %v2472 = vld [vmem:[#allocation3 + $0xe0] sm:$0xff]
      %v2473 = vld [vmem:[#allocation3 + $0xf0] sm:$0xff]
      %v2474 = vld [vmem:[#allocation3 + $0xf8] sm:$0xff]
      %v2475 = vld [vmem:[#allocation3 + $0x108] sm:$0xff]
      %v2476 = vld [vmem:[#allocation3 + $0x110] sm:$0xff]
      %v2477 = vld [vmem:[#allocation3 + $0x120] sm:$0xff]
      %v2478 = vld [vmem:[#allocation3 + $0x128] sm:$0xff]
      %v2479 = vld [vmem:[#allocation3 + $0x138] sm:$0xff]
      %v2480 = vld [vmem:[#allocation3 + $0x140] sm:$0xff]
      %v2481 = vld [vmem:[#allocation3 + $0x150] sm:$0xff]
      %v2482 = vld [vmem:[#allocation3 + $0x158] sm:$0xff]
      %v2483 = vld [vmem:[#allocation3 + $0x168] sm:$0xff]
      %v2484 = vld [vmem:[#allocation3 + $0x170] sm:$0xff]
      %2485 = vst.msk [vmem:[#allocation5] sm:$0xff] %vm2364, %v2453
      %2486 = vst.msk [vmem:[#allocation5 + $0x8] sm:$0xff] %vm2364, %v2454
      %2487 = vst.msk [vmem:[#allocation5 + $0x10] sm:$0xff] %vm2364, %v2455
      %2488 = vst.msk [vmem:[#allocation5 + $0x18] sm:$0xff] %vm2364, %v2456
      %2489 = vst.msk [vmem:[#allocation5 + $0x20] sm:$0xff] %vm2364, %v2457
      %2490 = vst.msk [vmem:[#allocation5 + $0x28] sm:$0xff] %vm2364, %v2458
      %2491 = vst.msk [vmem:[#allocation5 + $0x30] sm:$0xff] %vm2364, %v2459
      %2492 = vst.msk [vmem:[#allocation5 + $0x38] sm:$0xff] %vm2364, %v2460
      %2493 = vst.msk [vmem:[#allocation5 + $0x40] sm:$0xff] %vm2364, %v2461
      %2494 = vst.msk [vmem:[#allocation5 + $0x48] sm:$0xff] %vm2364, %v2462
      %2495 = vst.msk [vmem:[#allocation5 + $0x50] sm:$0xff] %vm2364, %v2463
      %2496 = vst.msk [vmem:[#allocation5 + $0x58] sm:$0xff] %vm2364, %v2464
      %2497 = vst.msk [vmem:[#allocation5 + $0x60] sm:$0xff] %vm2364, %v2465
      %2498 = vst.msk [vmem:[#allocation5 + $0x68] sm:$0xff] %vm2364, %v2466
      %2499 = vst.msk [vmem:[#allocation5 + $0x70] sm:$0xff] %vm2364, %v2467
      %2500 = vst.msk [vmem:[#allocation5 + $0x78] sm:$0xff] %vm2364, %v2468
      %2501 = vst.msk [vmem:[#allocation5 + $0x80] sm:$0xff] %vm2364, %v2469
      %2502 = vst.msk [vmem:[#allocation5 + $0x88] sm:$0xff] %vm2364, %v2470
      %2503 = vst.msk [vmem:[#allocation5 + $0x90] sm:$0xff] %vm2364, %v2471
      %2504 = vst.msk [vmem:[#allocation5 + $0x98] sm:$0xff] %vm2364, %v2472
      %2505 = vst.msk [vmem:[#allocation5 + $0xa0] sm:$0xff] %vm2364, %v2473
      %2506 = vst.msk [vmem:[#allocation5 + $0xa8] sm:$0xff] %vm2364, %v2474
      %2507 = vst.msk [vmem:[#allocation5 + $0xb0] sm:$0xff] %vm2364, %v2475
      %2508 = vst.msk [vmem:[#allocation5 + $0xb8] sm:$0xff] %vm2364, %v2476
      %2509 = vst.msk [vmem:[#allocation5 + $0xc0] sm:$0xff] %vm2364, %v2477
      %2510 = vst.msk [vmem:[#allocation5 + $0xc8] sm:$0xff] %vm2364, %v2478
      %2511 = vst.msk [vmem:[#allocation5 + $0xd0] sm:$0xff] %vm2364, %v2479
      %2512 = vst.msk [vmem:[#allocation5 + $0xd8] sm:$0xff] %vm2364, %v2480
      %2513 = vst.msk [vmem:[#allocation5 + $0xe0] sm:$0xff] %vm2364, %v2481
      %2514 = vst.msk [vmem:[#allocation5 + $0xe8] sm:$0xff] %vm2364, %v2482
      %2515 = vst.msk [vmem:[#allocation5 + $0xf0] sm:$0xff] %vm2364, %v2483
      %2516 = vst.msk [vmem:[#allocation5 + $0xf8] sm:$0xff] %vm2364, %v2484
      %v2517 = vld [vmem:[#allocation3 + $0x1] sm:$0xff]
      %v2518 = vld [vmem:[#allocation3 + $0x9] sm:$0xff]
      %v2519 = vld [vmem:[#allocation3 + $0x19] sm:$0xff]
      %v2520 = vld [vmem:[#allocation3 + $0x21] sm:$0xff]
      %v2521 = vld [vmem:[#allocation3 + $0x31] sm:$0xff]
      %v2522 = vld [vmem:[#allocation3 + $0x39] sm:$0xff]
      %v2523 = vld [vmem:[#allocation3 + $0x49] sm:$0xff]
      %v2524 = vld [vmem:[#allocation3 + $0x51] sm:$0xff]
      %v2525 = vld [vmem:[#allocation3 + $0x61] sm:$0xff]
      %v2526 = vld [vmem:[#allocation3 + $0x69] sm:$0xff]
      %v2527 = vld [vmem:[#allocation3 + $0x79] sm:$0xff]
      %v2528 = vld [vmem:[#allocation3 + $0x81] sm:$0xff]
      %v2529 = vld [vmem:[#allocation3 + $0x91] sm:$0xff]
      %v2530 = vld [vmem:[#allocation3 + $0x99] sm:$0xff]
      %v2531 = vld [vmem:[#allocation3 + $0xa9] sm:$0xff]
      %v2532 = vld [vmem:[#allocation3 + $0xb1] sm:$0xff]
      %v2533 = vld [vmem:[#allocation3 + $0xc1] sm:$0xff]
      %v2534 = vld [vmem:[#allocation3 + $0xc9] sm:$0xff]
      %v2535 = vld [vmem:[#allocation3 + $0xd9] sm:$0xff]
      %v2536 = vld [vmem:[#allocation3 + $0xe1] sm:$0xff]
      %v2537 = vld [vmem:[#allocation3 + $0xf1] sm:$0xff]
      %v2538 = vld [vmem:[#allocation3 + $0xf9] sm:$0xff]
      %v2539 = vld [vmem:[#allocation3 + $0x109] sm:$0xff]
      %v2540 = vld [vmem:[#allocation3 + $0x111] sm:$0xff]
      %v2541 = vld [vmem:[#allocation3 + $0x121] sm:$0xff]
      %v2542 = vld [vmem:[#allocation3 + $0x129] sm:$0xff]
      %v2543 = vld [vmem:[#allocation3 + $0x139] sm:$0xff]
      %v2544 = vld [vmem:[#allocation3 + $0x141] sm:$0xff]
      %v2545 = vld [vmem:[#allocation3 + $0x151] sm:$0xff]
      %v2546 = vld [vmem:[#allocation3 + $0x159] sm:$0xff]
      %v2547 = vld [vmem:[#allocation3 + $0x169] sm:$0xff]
      %v2548 = vld [vmem:[#allocation3 + $0x171] sm:$0xff]
      %2581 = vrot.lane.b32.xlu0 %v2517, 8
      %v2582 = vpop.permute.xlu0 %2581
      %2583 = vrot.lane.b32.xlu0 %v2518, 8
      %v2584 = vpop.permute.xlu0 %2583
      %2585 = vrot.lane.b32.xlu0 %v2519, 8
      %v2586 = vpop.permute.xlu0 %2585
      %2587 = vrot.lane.b32.xlu0 %v2520, 8
      %v2588 = vpop.permute.xlu0 %2587
      %2589 = vrot.lane.b32.xlu0 %v2521, 8
      %v2590 = vpop.permute.xlu0 %2589
      %2591 = vrot.lane.b32.xlu0 %v2522, 8
      %v2592 = vpop.permute.xlu0 %2591
      %2593 = vrot.lane.b32.xlu0 %v2523, 8
      %v2594 = vpop.permute.xlu0 %2593
      %2595 = vrot.lane.b32.xlu0 %v2524, 8
      %v2596 = vpop.permute.xlu0 %2595
      %2597 = vrot.lane.b32.xlu0 %v2525, 8
      %v2598 = vpop.permute.xlu0 %2597
      %2599 = vrot.lane.b32.xlu0 %v2526, 8
      %v2600 = vpop.permute.xlu0 %2599
      %2601 = vrot.lane.b32.xlu0 %v2527, 8
      %v2602 = vpop.permute.xlu0 %2601
      %2603 = vrot.lane.b32.xlu0 %v2528, 8
      %v2604 = vpop.permute.xlu0 %2603
      %2605 = vrot.lane.b32.xlu0 %v2529, 8
      %v2606 = vpop.permute.xlu0 %2605
      %2607 = vrot.lane.b32.xlu0 %v2530, 8
      %v2608 = vpop.permute.xlu0 %2607
      %2609 = vrot.lane.b32.xlu0 %v2531, 8
      %v2610 = vpop.permute.xlu0 %2609
      %2611 = vrot.lane.b32.xlu0 %v2532, 8
      %v2612 = vpop.permute.xlu0 %2611
      %2613 = vrot.lane.b32.xlu0 %v2533, 8
      %v2614 = vpop.permute.xlu0 %2613
      %2615 = vrot.lane.b32.xlu0 %v2534, 8
      %v2616 = vpop.permute.xlu0 %2615
      %2617 = vrot.lane.b32.xlu0 %v2535, 8
      %v2618 = vpop.permute.xlu0 %2617
      %2619 = vrot.lane.b32.xlu0 %v2536, 8
      %v2620 = vpop.permute.xlu0 %2619
      %2621 = vrot.lane.b32.xlu0 %v2537, 8
      %v2622 = vpop.permute.xlu0 %2621
      %2623 = vrot.lane.b32.xlu0 %v2538, 8
      %v2624 = vpop.permute.xlu0 %2623
      %2625 = vrot.lane.b32.xlu0 %v2539, 8
      %v2626 = vpop.permute.xlu0 %2625
      %2627 = vrot.lane.b32.xlu0 %v2540, 8
      %v2628 = vpop.permute.xlu0 %2627
      %2629 = vrot.lane.b32.xlu0 %v2541, 8
      %v2630 = vpop.permute.xlu0 %2629
      %2631 = vrot.lane.b32.xlu0 %v2542, 8
      %v2632 = vpop.permute.xlu0 %2631
      %2633 = vrot.lane.b32.xlu0 %v2543, 8
      %v2634 = vpop.permute.xlu0 %2633
      %2635 = vrot.lane.b32.xlu0 %v2544, 8
      %v2636 = vpop.permute.xlu0 %2635
      %2637 = vrot.lane.b32.xlu0 %v2545, 8
      %v2638 = vpop.permute.xlu0 %2637
      %2639 = vrot.lane.b32.xlu0 %v2546, 8
      %v2640 = vpop.permute.xlu0 %2639
      %2641 = vrot.lane.b32.xlu0 %v2547, 8
      %v2642 = vpop.permute.xlu0 %2641
      %2643 = vrot.lane.b32.xlu0 %v2548, 8
      %v2644 = vpop.permute.xlu0 %2643
      %vm2677 = vcmask 130112
      %2678 = vst.msk [vmem:[#allocation5] sm:$0xff] %vm2677, %v2582
      %2679 = vst.msk [vmem:[#allocation5 + $0x8] sm:$0xff] %vm2677, %v2584
      %2680 = vst.msk [vmem:[#allocation5 + $0x10] sm:$0xff] %vm2677, %v2586
      %2681 = vst.msk [vmem:[#allocation5 + $0x18] sm:$0xff] %vm2677, %v2588
      %2682 = vst.msk [vmem:[#allocation5 + $0x20] sm:$0xff] %vm2677, %v2590
      %2683 = vst.msk [vmem:[#allocation5 + $0x28] sm:$0xff] %vm2677, %v2592
      %2684 = vst.msk [vmem:[#allocation5 + $0x30] sm:$0xff] %vm2677, %v2594
      %2685 = vst.msk [vmem:[#allocation5 + $0x38] sm:$0xff] %vm2677, %v2596
      %2686 = vst.msk [vmem:[#allocation5 + $0x40] sm:$0xff] %vm2677, %v2598
      %2687 = vst.msk [vmem:[#allocation5 + $0x48] sm:$0xff] %vm2677, %v2600
      %2688 = vst.msk [vmem:[#allocation5 + $0x50] sm:$0xff] %vm2677, %v2602
      %2689 = vst.msk [vmem:[#allocation5 + $0x58] sm:$0xff] %vm2677, %v2604
      %2690 = vst.msk [vmem:[#allocation5 + $0x60] sm:$0xff] %vm2677, %v2606
      %2691 = vst.msk [vmem:[#allocation5 + $0x68] sm:$0xff] %vm2677, %v2608
      %2692 = vst.msk [vmem:[#allocation5 + $0x70] sm:$0xff] %vm2677, %v2610
      %2693 = vst.msk [vmem:[#allocation5 + $0x78] sm:$0xff] %vm2677, %v2612
      %2694 = vst.msk [vmem:[#allocation5 + $0x80] sm:$0xff] %vm2677, %v2614
      %2695 = vst.msk [vmem:[#allocation5 + $0x88] sm:$0xff] %vm2677, %v2616
      %2696 = vst.msk [vmem:[#allocation5 + $0x90] sm:$0xff] %vm2677, %v2618
      %2697 = vst.msk [vmem:[#allocation5 + $0x98] sm:$0xff] %vm2677, %v2620
      %2698 = vst.msk [vmem:[#allocation5 + $0xa0] sm:$0xff] %vm2677, %v2622
      %2699 = vst.msk [vmem:[#allocation5 + $0xa8] sm:$0xff] %vm2677, %v2624
      %2700 = vst.msk [vmem:[#allocation5 + $0xb0] sm:$0xff] %vm2677, %v2626
      %2701 = vst.msk [vmem:[#allocation5 + $0xb8] sm:$0xff] %vm2677, %v2628
      %2702 = vst.msk [vmem:[#allocation5 + $0xc0] sm:$0xff] %vm2677, %v2630
      %2703 = vst.msk [vmem:[#allocation5 + $0xc8] sm:$0xff] %vm2677, %v2632
      %2704 = vst.msk [vmem:[#allocation5 + $0xd0] sm:$0xff] %vm2677, %v2634
      %2705 = vst.msk [vmem:[#allocation5 + $0xd8] sm:$0xff] %vm2677, %v2636
      %2706 = vst.msk [vmem:[#allocation5 + $0xe0] sm:$0xff] %vm2677, %v2638
      %2707 = vst.msk [vmem:[#allocation5 + $0xe8] sm:$0xff] %vm2677, %v2640
      %2708 = vst.msk [vmem:[#allocation5 + $0xf0] sm:$0xff] %vm2677, %v2642
      %2709 = vst.msk [vmem:[#allocation5 + $0xf8] sm:$0xff] %vm2677, %v2644
      %v2710 = vld [vmem:[#allocation3 + $0x2] sm:$0xff]
      %v2711 = vld [vmem:[#allocation3 + $0xa] sm:$0xff]
      %v2712 = vld [vmem:[#allocation3 + $0x1a] sm:$0xff]
      %v2713 = vld [vmem:[#allocation3 + $0x22] sm:$0xff]
      %v2714 = vld [vmem:[#allocation3 + $0x32] sm:$0xff]
      %v2715 = vld [vmem:[#allocation3 + $0x3a] sm:$0xff]
      %v2716 = vld [vmem:[#allocation3 + $0x4a] sm:$0xff]
      %v2717 = vld [vmem:[#allocation3 + $0x52] sm:$0xff]
      %v2718 = vld [vmem:[#allocation3 + $0x62] sm:$0xff]
      %v2719 = vld [vmem:[#allocation3 + $0x6a] sm:$0xff]
      %v2720 = vld [vmem:[#allocation3 + $0x7a] sm:$0xff]
      %v2721 = vld [vmem:[#allocation3 + $0x82] sm:$0xff]
      %v2722 = vld [vmem:[#allocation3 + $0x92] sm:$0xff]
      %v2723 = vld [vmem:[#allocation3 + $0x9a] sm:$0xff]
      %v2724 = vld [vmem:[#allocation3 + $0xaa] sm:$0xff]
      %v2725 = vld [vmem:[#allocation3 + $0xb2] sm:$0xff]
      %v2726 = vld [vmem:[#allocation3 + $0xc2] sm:$0xff]
      %v2727 = vld [vmem:[#allocation3 + $0xca] sm:$0xff]
      %v2728 = vld [vmem:[#allocation3 + $0xda] sm:$0xff]
      %v2729 = vld [vmem:[#allocation3 + $0xe2] sm:$0xff]
      %v2730 = vld [vmem:[#allocation3 + $0xf2] sm:$0xff]
      %v2731 = vld [vmem:[#allocation3 + $0xfa] sm:$0xff]
      %v2732 = vld [vmem:[#allocation3 + $0x10a] sm:$0xff]
      %v2733 = vld [vmem:[#allocation3 + $0x112] sm:$0xff]
      %v2734 = vld [vmem:[#allocation3 + $0x122] sm:$0xff]
      %v2735 = vld [vmem:[#allocation3 + $0x12a] sm:$0xff]
      %v2736 = vld [vmem:[#allocation3 + $0x13a] sm:$0xff]
      %v2737 = vld [vmem:[#allocation3 + $0x142] sm:$0xff]
      %v2738 = vld [vmem:[#allocation3 + $0x152] sm:$0xff]
      %v2739 = vld [vmem:[#allocation3 + $0x15a] sm:$0xff]
      %v2740 = vld [vmem:[#allocation3 + $0x16a] sm:$0xff]
      %v2741 = vld [vmem:[#allocation3 + $0x172] sm:$0xff]
      %2774 = vrot.lane.b32.xlu0 %v2710, 16
      %v2775 = vpop.permute.xlu0 %2774
      %2776 = vrot.lane.b32.xlu0 %v2711, 16
      %v2777 = vpop.permute.xlu0 %2776
      %2778 = vrot.lane.b32.xlu0 %v2712, 16
      %v2779 = vpop.permute.xlu0 %2778
      %2780 = vrot.lane.b32.xlu0 %v2713, 16
      %v2781 = vpop.permute.xlu0 %2780
      %2782 = vrot.lane.b32.xlu0 %v2714, 16
      %v2783 = vpop.permute.xlu0 %2782
      %2784 = vrot.lane.b32.xlu0 %v2715, 16
      %v2785 = vpop.permute.xlu0 %2784
      %2786 = vrot.lane.b32.xlu0 %v2716, 16
      %v2787 = vpop.permute.xlu0 %2786
      %2788 = vrot.lane.b32.xlu0 %v2717, 16
      %v2789 = vpop.permute.xlu0 %2788
      %2790 = vrot.lane.b32.xlu0 %v2718, 16
      %v2791 = vpop.permute.xlu0 %2790
      %2792 = vrot.lane.b32.xlu0 %v2719, 16
      %v2793 = vpop.permute.xlu0 %2792
      %2794 = vrot.lane.b32.xlu0 %v2720, 16
      %v2795 = vpop.permute.xlu0 %2794
      %2796 = vrot.lane.b32.xlu0 %v2721, 16
      %v2797 = vpop.permute.xlu0 %2796
      %2798 = vrot.lane.b32.xlu0 %v2722, 16
      %v2799 = vpop.permute.xlu0 %2798
      %2800 = vrot.lane.b32.xlu0 %v2723, 16
      %v2801 = vpop.permute.xlu0 %2800
      %2802 = vrot.lane.b32.xlu0 %v2724, 16
      %v2803 = vpop.permute.xlu0 %2802
      %2804 = vrot.lane.b32.xlu0 %v2725, 16
      %v2805 = vpop.permute.xlu0 %2804
      %2806 = vrot.lane.b32.xlu0 %v2726, 16
      %v2807 = vpop.permute.xlu0 %2806
      %2808 = vrot.lane.b32.xlu0 %v2727, 16
      %v2809 = vpop.permute.xlu0 %2808
      %2810 = vrot.lane.b32.xlu0 %v2728, 16
      %v2811 = vpop.permute.xlu0 %2810
      %2812 = vrot.lane.b32.xlu0 %v2729, 16
      %v2813 = vpop.permute.xlu0 %2812
      %2814 = vrot.lane.b32.xlu0 %v2730, 16
      %v2815 = vpop.permute.xlu0 %2814
      %2816 = vrot.lane.b32.xlu0 %v2731, 16
      %v2817 = vpop.permute.xlu0 %2816
      %2818 = vrot.lane.b32.xlu0 %v2732, 16
      %v2819 = vpop.permute.xlu0 %2818
      %2820 = vrot.lane.b32.xlu0 %v2733, 16
      %v2821 = vpop.permute.xlu0 %2820
      %2822 = vrot.lane.b32.xlu0 %v2734, 16
      %v2823 = vpop.permute.xlu0 %2822
      %2824 = vrot.lane.b32.xlu0 %v2735, 16
      %v2825 = vpop.permute.xlu0 %2824
      %2826 = vrot.lane.b32.xlu0 %v2736, 16
      %v2827 = vpop.permute.xlu0 %2826
      %2828 = vrot.lane.b32.xlu0 %v2737, 16
      %v2829 = vpop.permute.xlu0 %2828
      %2830 = vrot.lane.b32.xlu0 %v2738, 16
      %v2831 = vpop.permute.xlu0 %2830
      %2832 = vrot.lane.b32.xlu0 %v2739, 16
      %v2833 = vpop.permute.xlu0 %2832
      %2834 = vrot.lane.b32.xlu0 %v2740, 16
      %v2835 = vpop.permute.xlu0 %2834
      %2836 = vrot.lane.b32.xlu0 %v2741, 16
      %v2837 = vpop.permute.xlu0 %2836
      %vm2870 = vcmask 195712
      %2871 = vst.msk [vmem:[#allocation5] sm:$0xff] %vm2870, %v2775
      %2872 = vst.msk [vmem:[#allocation5 + $0x8] sm:$0xff] %vm2870, %v2777
      %2873 = vst.msk [vmem:[#allocation5 + $0x10] sm:$0xff] %vm2870, %v2779
      %2874 = vst.msk [vmem:[#allocation5 + $0x18] sm:$0xff] %vm2870, %v2781
      %2875 = vst.msk [vmem:[#allocation5 + $0x20] sm:$0xff] %vm2870, %v2783
      %2876 = vst.msk [vmem:[#allocation5 + $0x28] sm:$0xff] %vm2870, %v2785
      %2877 = vst.msk [vmem:[#allocation5 + $0x30] sm:$0xff] %vm2870, %v2787
      %2878 = vst.msk [vmem:[#allocation5 + $0x38] sm:$0xff] %vm2870, %v2789
      %2879 = vst.msk [vmem:[#allocation5 + $0x40] sm:$0xff] %vm2870, %v2791
      %2880 = vst.msk [vmem:[#allocation5 + $0x48] sm:$0xff] %vm2870, %v2793
      %2881 = vst.msk [vmem:[#allocation5 + $0x50] sm:$0xff] %vm2870, %v2795
      %2882 = vst.msk [vmem:[#allocation5 + $0x58] sm:$0xff] %vm2870, %v2797
      %2883 = vst.msk [vmem:[#allocation5 + $0x60] sm:$0xff] %vm2870, %v2799
      %2884 = vst.msk [vmem:[#allocation5 + $0x68] sm:$0xff] %vm2870, %v2801
      %2885 = vst.msk [vmem:[#allocation5 + $0x70] sm:$0xff] %vm2870, %v2803
      %2886 = vst.msk [vmem:[#allocation5 + $0x78] sm:$0xff] %vm2870, %v2805
      %2887 = vst.msk [vmem:[#allocation5 + $0x80] sm:$0xff] %vm2870, %v2807
      %2888 = vst.msk [vmem:[#allocation5 + $0x88] sm:$0xff] %vm2870, %v2809
      %2889 = vst.msk [vmem:[#allocation5 + $0x90] sm:$0xff] %vm2870, %v2811
      %2890 = vst.msk [vmem:[#allocation5 + $0x98] sm:$0xff] %vm2870, %v2813
      %2891 = vst.msk [vmem:[#allocation5 + $0xa0] sm:$0xff] %vm2870, %v2815
      %2892 = vst.msk [vmem:[#allocation5 + $0xa8] sm:$0xff] %vm2870, %v2817
      %2893 = vst.msk [vmem:[#allocation5 + $0xb0] sm:$0xff] %vm2870, %v2819
      %2894 = vst.msk [vmem:[#allocation5 + $0xb8] sm:$0xff] %vm2870, %v2821
      %2895 = vst.msk [vmem:[#allocation5 + $0xc0] sm:$0xff] %vm2870, %v2823
      %2896 = vst.msk [vmem:[#allocation5 + $0xc8] sm:$0xff] %vm2870, %v2825
      %2897 = vst.msk [vmem:[#allocation5 + $0xd0] sm:$0xff] %vm2870, %v2827
      %2898 = vst.msk [vmem:[#allocation5 + $0xd8] sm:$0xff] %vm2870, %v2829
      %2899 = vst.msk [vmem:[#allocation5 + $0xe0] sm:$0xff] %vm2870, %v2831
      %2900 = vst.msk [vmem:[#allocation5 + $0xe8] sm:$0xff] %vm2870, %v2833
      %2901 = vst.msk [vmem:[#allocation5 + $0xf0] sm:$0xff] %vm2870, %v2835
      %2902 = vst.msk [vmem:[#allocation5 + $0xf8] sm:$0xff] %vm2870, %v2837
      %v2903 = vld [vmem:[%s2420] sm:$0xff]
      %v2904 = vld [vmem:[%s2420 + $0x8] sm:$0xff]
      %v2905 = vld [vmem:[%s2420 + $0x18] sm:$0xff]
      %v2906 = vld [vmem:[%s2420 + $0x20] sm:$0xff]
      %v2907 = vld [vmem:[%s2420 + $0x30] sm:$0xff]
      %v2908 = vld [vmem:[%s2420 + $0x38] sm:$0xff]
      %v2909 = vld [vmem:[%s2420 + $0x48] sm:$0xff]
      %v2910 = vld [vmem:[%s2420 + $0x50] sm:$0xff]
      %v2911 = vld [vmem:[%s2420 + $0x60] sm:$0xff]
      %v2912 = vld [vmem:[%s2420 + $0x68] sm:$0xff]
      %v2913 = vld [vmem:[%s2420 + $0x78] sm:$0xff]
      %v2914 = vld [vmem:[%s2420 + $0x80] sm:$0xff]
      %v2915 = vld [vmem:[%s2420 + $0x90] sm:$0xff]
      %v2916 = vld [vmem:[%s2420 + $0x98] sm:$0xff]
      %v2917 = vld [vmem:[%s2420 + $0xa8] sm:$0xff]
      %v2918 = vld [vmem:[%s2420 + $0xb0] sm:$0xff]
      %v2919 = vld [vmem:[%s2420 + $0xc0] sm:$0xff]
      %v2920 = vld [vmem:[%s2420 + $0xc8] sm:$0xff]
      %v2921 = vld [vmem:[%s2420 + $0xd8] sm:$0xff]
      %v2922 = vld [vmem:[%s2420 + $0xe0] sm:$0xff]
      %v2923 = vld [vmem:[%s2420 + $0xf0] sm:$0xff]
      %v2924 = vld [vmem:[%s2420 + $0xf8] sm:$0xff]
      %v2925 = vld [vmem:[%s2420 + $0x108] sm:$0xff]
      %v2926 = vld [vmem:[%s2420 + $0x110] sm:$0xff]
      %v2927 = vld [vmem:[%s2420 + $0x120] sm:$0xff]
      %v2928 = vld [vmem:[%s2420 + $0x128] sm:$0xff]
      %v2929 = vld [vmem:[%s2420 + $0x138] sm:$0xff]
      %v2930 = vld [vmem:[%s2420 + $0x140] sm:$0xff]
      %v2931 = vld [vmem:[%s2420 + $0x150] sm:$0xff]
      %v2932 = vld [vmem:[%s2420 + $0x158] sm:$0xff]
      %v2933 = vld [vmem:[%s2420 + $0x168] sm:$0xff]
      %v2934 = vld [vmem:[%s2420 + $0x170] sm:$0xff]
      %2967 = vrot.lane.b32.xlu0 %v2903, 24
      %v2968 = vpop.permute.xlu0 %2967
      %2969 = vrot.lane.b32.xlu0 %v2904, 24
      %v2970 = vpop.permute.xlu0 %2969
      %2971 = vrot.lane.b32.xlu0 %v2905, 24
      %v2972 = vpop.permute.xlu0 %2971
      %2973 = vrot.lane.b32.xlu0 %v2906, 24
      %v2974 = vpop.permute.xlu0 %2973
      %2975 = vrot.lane.b32.xlu0 %v2907, 24
      %v2976 = vpop.permute.xlu0 %2975
      %2977 = vrot.lane.b32.xlu0 %v2908, 24
      %v2978 = vpop.permute.xlu0 %2977
      %2979 = vrot.lane.b32.xlu0 %v2909, 24
      %v2980 = vpop.permute.xlu0 %2979
      %2981 = vrot.lane.b32.xlu0 %v2910, 24
      %v2982 = vpop.permute.xlu0 %2981
      %2983 = vrot.lane.b32.xlu0 %v2911, 24
      %v2984 = vpop.permute.xlu0 %2983
      %2985 = vrot.lane.b32.xlu0 %v2912, 24
      %v2986 = vpop.permute.xlu0 %2985
      %2987 = vrot.lane.b32.xlu0 %v2913, 24
      %v2988 = vpop.permute.xlu0 %2987
      %2989 = vrot.lane.b32.xlu0 %v2914, 24
      %v2990 = vpop.permute.xlu0 %2989
      %2991 = vrot.lane.b32.xlu0 %v2915, 24
      %v2992 = vpop.permute.xlu0 %2991
      %2993 = vrot.lane.b32.xlu0 %v2916, 24
      %v2994 = vpop.permute.xlu0 %2993
      %2995 = vrot.lane.b32.xlu0 %v2917, 24
      %v2996 = vpop.permute.xlu0 %2995
      %2997 = vrot.lane.b32.xlu0 %v2918, 24
      %v2998 = vpop.permute.xlu0 %2997
      %2999 = vrot.lane.b32.xlu0 %v2919, 24
      %v3000 = vpop.permute.xlu0 %2999
      %3001 = vrot.lane.b32.xlu0 %v2920, 24
      %v3002 = vpop.permute.xlu0 %3001
      %3003 = vrot.lane.b32.xlu0 %v2921, 24
      %v3004 = vpop.permute.xlu0 %3003
      %3005 = vrot.lane.b32.xlu0 %v2922, 24
      %v3006 = vpop.permute.xlu0 %3005
      %3007 = vrot.lane.b32.xlu0 %v2923, 24
      %v3008 = vpop.permute.xlu0 %3007
      %3009 = vrot.lane.b32.xlu0 %v2924, 24
      %v3010 = vpop.permute.xlu0 %3009
      %3011 = vrot.lane.b32.xlu0 %v2925, 24
      %v3012 = vpop.permute.xlu0 %3011
      %3013 = vrot.lane.b32.xlu0 %v2926, 24
      %v3014 = vpop.permute.xlu0 %3013
      %3015 = vrot.lane.b32.xlu0 %v2927, 24
      %v3016 = vpop.permute.xlu0 %3015
      %3017 = vrot.lane.b32.xlu0 %v2928, 24
      %v3018 = vpop.permute.xlu0 %3017
      %3019 = vrot.lane.b32.xlu0 %v2929, 24
      %v3020 = vpop.permute.xlu0 %3019
      %3021 = vrot.lane.b32.xlu0 %v2930, 24
      %v3022 = vpop.permute.xlu0 %3021
      %3023 = vrot.lane.b32.xlu0 %v2931, 24
      %v3024 = vpop.permute.xlu0 %3023
      %3025 = vrot.lane.b32.xlu0 %v2932, 24
      %v3026 = vpop.permute.xlu0 %3025
      %3027 = vrot.lane.b32.xlu0 %v2933, 24
      %v3028 = vpop.permute.xlu0 %3027
      %3029 = vrot.lane.b32.xlu0 %v2934, 24
      %v3030 = vpop.permute.xlu0 %3029
      %vm3063 = vcmask 261312
      %3064 = vst.msk [vmem:[#allocation5] sm:$0xff] %vm3063, %v2968
      %3065 = vst.msk [vmem:[#allocation5 + $0x8] sm:$0xff] %vm3063, %v2970
      %3066 = vst.msk [vmem:[#allocation5 + $0x10] sm:$0xff] %vm3063, %v2972
      %3067 = vst.msk [vmem:[#allocation5 + $0x18] sm:$0xff] %vm3063, %v2974
      %3068 = vst.msk [vmem:[#allocation5 + $0x20] sm:$0xff] %vm3063, %v2976
      %3069 = vst.msk [vmem:[#allocation5 + $0x28] sm:$0xff] %vm3063, %v2978
      %3070 = vst.msk [vmem:[#allocation5 + $0x30] sm:$0xff] %vm3063, %v2980
      %3071 = vst.msk [vmem:[#allocation5 + $0x38] sm:$0xff] %vm3063, %v2982
      %3072 = vst.msk [vmem:[#allocation5 + $0x40] sm:$0xff] %vm3063, %v2984
      %3073 = vst.msk [vmem:[#allocation5 + $0x48] sm:$0xff] %vm3063, %v2986
      %3074 = vst.msk [vmem:[#allocation5 + $0x50] sm:$0xff] %vm3063, %v2988
      %3075 = vst.msk [vmem:[#allocation5 + $0x58] sm:$0xff] %vm3063, %v2990
      %3076 = vst.msk [vmem:[#allocation5 + $0x60] sm:$0xff] %vm3063, %v2992
      %3077 = vst.msk [vmem:[#allocation5 + $0x68] sm:$0xff] %vm3063, %v2994
      %3078 = vst.msk [vmem:[#allocation5 + $0x70] sm:$0xff] %vm3063, %v2996
      %3079 = vst.msk [vmem:[#allocation5 + $0x78] sm:$0xff] %vm3063, %v2998
      %3080 = vst.msk [vmem:[#allocation5 + $0x80] sm:$0xff] %vm3063, %v3000
      %3081 = vst.msk [vmem:[#allocation5 + $0x88] sm:$0xff] %vm3063, %v3002
      %3082 = vst.msk [vmem:[#allocation5 + $0x90] sm:$0xff] %vm3063, %v3004
      %3083 = vst.msk [vmem:[#allocation5 + $0x98] sm:$0xff] %vm3063, %v3006
      %3084 = vst.msk [vmem:[#allocation5 + $0xa0] sm:$0xff] %vm3063, %v3008
      %3085 = vst.msk [vmem:[#allocation5 + $0xa8] sm:$0xff] %vm3063, %v3010
      %3086 = vst.msk [vmem:[#allocation5 + $0xb0] sm:$0xff] %vm3063, %v3012
      %3087 = vst.msk [vmem:[#allocation5 + $0xb8] sm:$0xff] %vm3063, %v3014
      %3088 = vst.msk [vmem:[#allocation5 + $0xc0] sm:$0xff] %vm3063, %v3016
      %3089 = vst.msk [vmem:[#allocation5 + $0xc8] sm:$0xff] %vm3063, %v3018
      %3090 = vst.msk [vmem:[#allocation5 + $0xd0] sm:$0xff] %vm3063, %v3020
      %3091 = vst.msk [vmem:[#allocation5 + $0xd8] sm:$0xff] %vm3063, %v3022
      %3092 = vst.msk [vmem:[#allocation5 + $0xe0] sm:$0xff] %vm3063, %v3024
      %3093 = vst.msk [vmem:[#allocation5 + $0xe8] sm:$0xff] %vm3063, %v3026
      %3094 = vst.msk [vmem:[#allocation5 + $0xf0] sm:$0xff] %vm3063, %v3028
      %3095 = vst.msk [vmem:[#allocation5 + $0xf8] sm:$0xff] %vm3063, %v3030
      %v3096 = vld [vmem:[%s2420 + $0x1] sm:$0xff]
      %v3097 = vld [vmem:[%s2420 + $0x9] sm:$0xff]
      %v3098 = vld [vmem:[%s2420 + $0x19] sm:$0xff]
      %v3099 = vld [vmem:[%s2420 + $0x21] sm:$0xff]
      %v3100 = vld [vmem:[%s2420 + $0x31] sm:$0xff]
      %v3101 = vld [vmem:[%s2420 + $0x39] sm:$0xff]
      %v3102 = vld [vmem:[%s2420 + $0x49] sm:$0xff]
      %v3103 = vld [vmem:[%s2420 + $0x51] sm:$0xff]
      %v3104 = vld [vmem:[%s2420 + $0x61] sm:$0xff]
      %v3105 = vld [vmem:[%s2420 + $0x69] sm:$0xff]
      %v3106 = vld [vmem:[%s2420 + $0x79] sm:$0xff]
      %v3107 = vld [vmem:[%s2420 + $0x81] sm:$0xff]
      %v3108 = vld [vmem:[%s2420 + $0x91] sm:$0xff]
      %v3109 = vld [vmem:[%s2420 + $0x99] sm:$0xff]
      %v3110 = vld [vmem:[%s2420 + $0xa9] sm:$0xff]
      %v3111 = vld [vmem:[%s2420 + $0xb1] sm:$0xff]
      %v3112 = vld [vmem:[%s2420 + $0xc1] sm:$0xff]
      %v3113 = vld [vmem:[%s2420 + $0xc9] sm:$0xff]
      %v3114 = vld [vmem:[%s2420 + $0xd9] sm:$0xff]
      %v3115 = vld [vmem:[%s2420 + $0xe1] sm:$0xff]
      %v3116 = vld [vmem:[%s2420 + $0xf1] sm:$0xff]
      %v3117 = vld [vmem:[%s2420 + $0xf9] sm:$0xff]
      %v3118 = vld [vmem:[%s2420 + $0x109] sm:$0xff]
      %v3119 = vld [vmem:[%s2420 + $0x111] sm:$0xff]
      %v3120 = vld [vmem:[%s2420 + $0x121] sm:$0xff]
      %v3121 = vld [vmem:[%s2420 + $0x129] sm:$0xff]
      %v3122 = vld [vmem:[%s2420 + $0x139] sm:$0xff]
      %v3123 = vld [vmem:[%s2420 + $0x141] sm:$0xff]
      %v3124 = vld [vmem:[%s2420 + $0x151] sm:$0xff]
      %v3125 = vld [vmem:[%s2420 + $0x159] sm:$0xff]
      %v3126 = vld [vmem:[%s2420 + $0x169] sm:$0xff]
      %v3127 = vld [vmem:[%s2420 + $0x171] sm:$0xff]
      %3160 = vrot.lane.b32.xlu0 %v3096, 32
      %v3161 = vpop.permute.xlu0 %3160
      %3162 = vrot.lane.b32.xlu0 %v3097, 32
      %v3163 = vpop.permute.xlu0 %3162
      %3164 = vrot.lane.b32.xlu0 %v3098, 32
      %v3165 = vpop.permute.xlu0 %3164
      %3166 = vrot.lane.b32.xlu0 %v3099, 32
      %v3167 = vpop.permute.xlu0 %3166
      %3168 = vrot.lane.b32.xlu0 %v3100, 32
      %v3169 = vpop.permute.xlu0 %3168
      %3170 = vrot.lane.b32.xlu0 %v3101, 32
      %v3171 = vpop.permute.xlu0 %3170
      %3172 = vrot.lane.b32.xlu0 %v3102, 32
      %v3173 = vpop.permute.xlu0 %3172
      %3174 = vrot.lane.b32.xlu0 %v3103, 32
      %v3175 = vpop.permute.xlu0 %3174
      %3176 = vrot.lane.b32.xlu0 %v3104, 32
      %v3177 = vpop.permute.xlu0 %3176
      %3178 = vrot.lane.b32.xlu0 %v3105, 32
      %v3179 = vpop.permute.xlu0 %3178
      %3180 = vrot.lane.b32.xlu0 %v3106, 32
      %v3181 = vpop.permute.xlu0 %3180
      %3182 = vrot.lane.b32.xlu0 %v3107, 32
      %v3183 = vpop.permute.xlu0 %3182
      %3184 = vrot.lane.b32.xlu0 %v3108, 32
      %v3185 = vpop.permute.xlu0 %3184
      %3186 = vrot.lane.b32.xlu0 %v3109, 32
      %v3187 = vpop.permute.xlu0 %3186
      %3188 = vrot.lane.b32.xlu0 %v3110, 32
      %v3189 = vpop.permute.xlu0 %3188
      %3190 = vrot.lane.b32.xlu0 %v3111, 32
      %v3191 = vpop.permute.xlu0 %3190
      %3192 = vrot.lane.b32.xlu0 %v3112, 32
      %v3193 = vpop.permute.xlu0 %3192
      %3194 = vrot.lane.b32.xlu0 %v3113, 32
      %v3195 = vpop.permute.xlu0 %3194
      %3196 = vrot.lane.b32.xlu0 %v3114, 32
      %v3197 = vpop.permute.xlu0 %3196
      %3198 = vrot.lane.b32.xlu0 %v3115, 32
      %v3199 = vpop.permute.xlu0 %3198
      %3200 = vrot.lane.b32.xlu0 %v3116, 32
      %v3201 = vpop.permute.xlu0 %3200
      %3202 = vrot.lane.b32.xlu0 %v3117, 32
      %v3203 = vpop.permute.xlu0 %3202
      %3204 = vrot.lane.b32.xlu0 %v3118, 32
      %v3205 = vpop.permute.xlu0 %3204
      %3206 = vrot.lane.b32.xlu0 %v3119, 32
      %v3207 = vpop.permute.xlu0 %3206
      %3208 = vrot.lane.b32.xlu0 %v3120, 32
      %v3209 = vpop.permute.xlu0 %3208
      %3210 = vrot.lane.b32.xlu0 %v3121, 32
      %v3211 = vpop.permute.xlu0 %3210
      %3212 = vrot.lane.b32.xlu0 %v3122, 32
      %v3213 = vpop.permute.xlu0 %3212
      %3214 = vrot.lane.b32.xlu0 %v3123, 32
      %v3215 = vpop.permute.xlu0 %3214
      %3216 = vrot.lane.b32.xlu0 %v3124, 32
      %v3217 = vpop.permute.xlu0 %3216
      %3218 = vrot.lane.b32.xlu0 %v3125, 32
      %v3219 = vpop.permute.xlu0 %3218
      %3220 = vrot.lane.b32.xlu0 %v3126, 32
      %v3221 = vpop.permute.xlu0 %3220
      %3222 = vrot.lane.b32.xlu0 %v3127, 32
      %v3223 = vpop.permute.xlu0 %3222
      %vm3256 = vcmask 326912
      %3257 = vst.msk [vmem:[#allocation5] sm:$0xff] %vm3256, %v3161
      %3258 = vst.msk [vmem:[#allocation5 + $0x8] sm:$0xff] %vm3256, %v3163
      %3259 = vst.msk [vmem:[#allocation5 + $0x10] sm:$0xff] %vm3256, %v3165
      %3260 = vst.msk [vmem:[#allocation5 + $0x18] sm:$0xff] %vm3256, %v3167
      %3261 = vst.msk [vmem:[#allocation5 + $0x20] sm:$0xff] %vm3256, %v3169
      %3262 = vst.msk [vmem:[#allocation5 + $0x28] sm:$0xff] %vm3256, %v3171
      %3263 = vst.msk [vmem:[#allocation5 + $0x30] sm:$0xff] %vm3256, %v3173
      %3264 = vst.msk [vmem:[#allocation5 + $0x38] sm:$0xff] %vm3256, %v3175
      %3265 = vst.msk [vmem:[#allocation5 + $0x40] sm:$0xff] %vm3256, %v3177
      %3266 = vst.msk [vmem:[#allocation5 + $0x48] sm:$0xff] %vm3256, %v3179
      %3267 = vst.msk [vmem:[#allocation5 + $0x50] sm:$0xff] %vm3256, %v3181
      %3268 = vst.msk [vmem:[#allocation5 + $0x58] sm:$0xff] %vm3256, %v3183
      %3269 = vst.msk [vmem:[#allocation5 + $0x60] sm:$0xff] %vm3256, %v3185
      %3270 = vst.msk [vmem:[#allocation5 + $0x68] sm:$0xff] %vm3256, %v3187
      %3271 = vst.msk [vmem:[#allocation5 + $0x70] sm:$0xff] %vm3256, %v3189
      %3272 = vst.msk [vmem:[#allocation5 + $0x78] sm:$0xff] %vm3256, %v3191
      %3273 = vst.msk [vmem:[#allocation5 + $0x80] sm:$0xff] %vm3256, %v3193
      %3274 = vst.msk [vmem:[#allocation5 + $0x88] sm:$0xff] %vm3256, %v3195
      %3275 = vst.msk [vmem:[#allocation5 + $0x90] sm:$0xff] %vm3256, %v3197
      %3276 = vst.msk [vmem:[#allocation5 + $0x98] sm:$0xff] %vm3256, %v3199
      %3277 = vst.msk [vmem:[#allocation5 + $0xa0] sm:$0xff] %vm3256, %v3201
      %3278 = vst.msk [vmem:[#allocation5 + $0xa8] sm:$0xff] %vm3256, %v3203
      %3279 = vst.msk [vmem:[#allocation5 + $0xb0] sm:$0xff] %vm3256, %v3205
      %3280 = vst.msk [vmem:[#allocation5 + $0xb8] sm:$0xff] %vm3256, %v3207
      %3281 = vst.msk [vmem:[#allocation5 + $0xc0] sm:$0xff] %vm3256, %v3209
      %3282 = vst.msk [vmem:[#allocation5 + $0xc8] sm:$0xff] %vm3256, %v3211
      %3283 = vst.msk [vmem:[#allocation5 + $0xd0] sm:$0xff] %vm3256, %v3213
      %3284 = vst.msk [vmem:[#allocation5 + $0xd8] sm:$0xff] %vm3256, %v3215
      %3285 = vst.msk [vmem:[#allocation5 + $0xe0] sm:$0xff] %vm3256, %v3217
      %3286 = vst.msk [vmem:[#allocation5 + $0xe8] sm:$0xff] %vm3256, %v3219
      %3287 = vst.msk [vmem:[#allocation5 + $0xf0] sm:$0xff] %vm3256, %v3221
      %3288 = vst.msk [vmem:[#allocation5 + $0xf8] sm:$0xff] %vm3256, %v3223
      %v3289 = vld [vmem:[%s2420 + $0x2] sm:$0xff]
      %v3290 = vld [vmem:[%s2420 + $0xa] sm:$0xff]
      %v3291 = vld [vmem:[%s2420 + $0x1a] sm:$0xff]
      %v3292 = vld [vmem:[%s2420 + $0x22] sm:$0xff]
      %v3293 = vld [vmem:[%s2420 + $0x32] sm:$0xff]
      %v3294 = vld [vmem:[%s2420 + $0x3a] sm:$0xff]
      %v3295 = vld [vmem:[%s2420 + $0x4a] sm:$0xff]
      %v3296 = vld [vmem:[%s2420 + $0x52] sm:$0xff]
      %v3297 = vld [vmem:[%s2420 + $0x62] sm:$0xff]
      %v3298 = vld [vmem:[%s2420 + $0x6a] sm:$0xff]
      %v3299 = vld [vmem:[%s2420 + $0x7a] sm:$0xff]
      %v3300 = vld [vmem:[%s2420 + $0x82] sm:$0xff]
      %v3301 = vld [vmem:[%s2420 + $0x92] sm:$0xff]
      %v3302 = vld [vmem:[%s2420 + $0x9a] sm:$0xff]
      %v3303 = vld [vmem:[%s2420 + $0xaa] sm:$0xff]
      %v3304 = vld [vmem:[%s2420 + $0xb2] sm:$0xff]
      %v3305 = vld [vmem:[%s2420 + $0xc2] sm:$0xff]
      %v3306 = vld [vmem:[%s2420 + $0xca] sm:$0xff]
      %v3307 = vld [vmem:[%s2420 + $0xda] sm:$0xff]
      %v3308 = vld [vmem:[%s2420 + $0xe2] sm:$0xff]
      %v3309 = vld [vmem:[%s2420 + $0xf2] sm:$0xff]
      %v3310 = vld [vmem:[%s2420 + $0xfa] sm:$0xff]
      %v3311 = vld [vmem:[%s2420 + $0x10a] sm:$0xff]
      %v3312 = vld [vmem:[%s2420 + $0x112] sm:$0xff]
      %v3313 = vld [vmem:[%s2420 + $0x122] sm:$0xff]
      %v3314 = vld [vmem:[%s2420 + $0x12a] sm:$0xff]
      %v3315 = vld [vmem:[%s2420 + $0x13a] sm:$0xff]
      %v3316 = vld [vmem:[%s2420 + $0x142] sm:$0xff]
      %v3317 = vld [vmem:[%s2420 + $0x152] sm:$0xff]
      %v3318 = vld [vmem:[%s2420 + $0x15a] sm:$0xff]
      %v3319 = vld [vmem:[%s2420 + $0x16a] sm:$0xff]
      %v3320 = vld [vmem:[%s2420 + $0x172] sm:$0xff]
      %3353 = vrot.lane.b32.xlu0 %v3289, 40
      %v3354 = vpop.permute.xlu0 %3353
      %3355 = vrot.lane.b32.xlu0 %v3290, 40
      %v3356 = vpop.permute.xlu0 %3355
      %3357 = vrot.lane.b32.xlu0 %v3291, 40
      %v3358 = vpop.permute.xlu0 %3357
      %3359 = vrot.lane.b32.xlu0 %v3292, 40
      %v3360 = vpop.permute.xlu0 %3359
      %3361 = vrot.lane.b32.xlu0 %v3293, 40
      %v3362 = vpop.permute.xlu0 %3361
      %3363 = vrot.lane.b32.xlu0 %v3294, 40
      %v3364 = vpop.permute.xlu0 %3363
      %3365 = vrot.lane.b32.xlu0 %v3295, 40
      %v3366 = vpop.permute.xlu0 %3365
      %3367 = vrot.lane.b32.xlu0 %v3296, 40
      %v3368 = vpop.permute.xlu0 %3367
      %3369 = vrot.lane.b32.xlu0 %v3297, 40
      %v3370 = vpop.permute.xlu0 %3369
      %3371 = vrot.lane.b32.xlu0 %v3298, 40
      %v3372 = vpop.permute.xlu0 %3371
      %3373 = vrot.lane.b32.xlu0 %v3299, 40
      %v3374 = vpop.permute.xlu0 %3373
      %3375 = vrot.lane.b32.xlu0 %v3300, 40
      %v3376 = vpop.permute.xlu0 %3375
      %3377 = vrot.lane.b32.xlu0 %v3301, 40
      %v3378 = vpop.permute.xlu0 %3377
      %3379 = vrot.lane.b32.xlu0 %v3302, 40
      %v3380 = vpop.permute.xlu0 %3379
      %3381 = vrot.lane.b32.xlu0 %v3303, 40
      %v3382 = vpop.permute.xlu0 %3381
      %3383 = vrot.lane.b32.xlu0 %v3304, 40
      %v3384 = vpop.permute.xlu0 %3383
      %3385 = vrot.lane.b32.xlu0 %v3305, 40
      %v3386 = vpop.permute.xlu0 %3385
      %3387 = vrot.lane.b32.xlu0 %v3306, 40
      %v3388 = vpop.permute.xlu0 %3387
      %3389 = vrot.lane.b32.xlu0 %v3307, 40
      %v3390 = vpop.permute.xlu0 %3389
      %3391 = vrot.lane.b32.xlu0 %v3308, 40
      %v3392 = vpop.permute.xlu0 %3391
      %3393 = vrot.lane.b32.xlu0 %v3309, 40
      %v3394 = vpop.permute.xlu0 %3393
      %3395 = vrot.lane.b32.xlu0 %v3310, 40
      %v3396 = vpop.permute.xlu0 %3395
      %3397 = vrot.lane.b32.xlu0 %v3311, 40
      %v3398 = vpop.permute.xlu0 %3397
      %3399 = vrot.lane.b32.xlu0 %v3312, 40
      %v3400 = vpop.permute.xlu0 %3399
      %3401 = vrot.lane.b32.xlu0 %v3313, 40
      %v3402 = vpop.permute.xlu0 %3401
      %3403 = vrot.lane.b32.xlu0 %v3314, 40
      %v3404 = vpop.permute.xlu0 %3403
      %3405 = vrot.lane.b32.xlu0 %v3315, 40
      %v3406 = vpop.permute.xlu0 %3405
      %3407 = vrot.lane.b32.xlu0 %v3316, 40
      %v3408 = vpop.permute.xlu0 %3407
      %3409 = vrot.lane.b32.xlu0 %v3317, 40
      %v3410 = vpop.permute.xlu0 %3409
      %3411 = vrot.lane.b32.xlu0 %v3318, 40
      %v3412 = vpop.permute.xlu0 %3411
      %3413 = vrot.lane.b32.xlu0 %v3319, 40
      %v3414 = vpop.permute.xlu0 %3413
      %3415 = vrot.lane.b32.xlu0 %v3320, 40
      %v3416 = vpop.permute.xlu0 %3415
      %vm3449 = vcmask 392512
      %3450 = vst.msk [vmem:[#allocation5] sm:$0xff] %vm3449, %v3354
      %3451 = vst.msk [vmem:[#allocation5 + $0x8] sm:$0xff] %vm3449, %v3356
      %3452 = vst.msk [vmem:[#allocation5 + $0x10] sm:$0xff] %vm3449, %v3358
      %3453 = vst.msk [vmem:[#allocation5 + $0x18] sm:$0xff] %vm3449, %v3360
      %3454 = vst.msk [vmem:[#allocation5 + $0x20] sm:$0xff] %vm3449, %v3362
      %3455 = vst.msk [vmem:[#allocation5 + $0x28] sm:$0xff] %vm3449, %v3364
      %3456 = vst.msk [vmem:[#allocation5 + $0x30] sm:$0xff] %vm3449, %v3366
      %3457 = vst.msk [vmem:[#allocation5 + $0x38] sm:$0xff] %vm3449, %v3368
      %3458 = vst.msk [vmem:[#allocation5 + $0x40] sm:$0xff] %vm3449, %v3370
      %3459 = vst.msk [vmem:[#allocation5 + $0x48] sm:$0xff] %vm3449, %v3372
      %3460 = vst.msk [vmem:[#allocation5 + $0x50] sm:$0xff] %vm3449, %v3374
      %3461 = vst.msk [vmem:[#allocation5 + $0x58] sm:$0xff] %vm3449, %v3376
      %3462 = vst.msk [vmem:[#allocation5 + $0x60] sm:$0xff] %vm3449, %v3378
      %3463 = vst.msk [vmem:[#allocation5 + $0x68] sm:$0xff] %vm3449, %v3380
      %3464 = vst.msk [vmem:[#allocation5 + $0x70] sm:$0xff] %vm3449, %v3382
      %3465 = vst.msk [vmem:[#allocation5 + $0x78] sm:$0xff] %vm3449, %v3384
      %3466 = vst.msk [vmem:[#allocation5 + $0x80] sm:$0xff] %vm3449, %v3386
      %3467 = vst.msk [vmem:[#allocation5 + $0x88] sm:$0xff] %vm3449, %v3388
      %3468 = vst.msk [vmem:[#allocation5 + $0x90] sm:$0xff] %vm3449, %v3390
      %3469 = vst.msk [vmem:[#allocation5 + $0x98] sm:$0xff] %vm3449, %v3392
      %3470 = vst.msk [vmem:[#allocation5 + $0xa0] sm:$0xff] %vm3449, %v3394
      %3471 = vst.msk [vmem:[#allocation5 + $0xa8] sm:$0xff] %vm3449, %v3396
      %3472 = vst.msk [vmem:[#allocation5 + $0xb0] sm:$0xff] %vm3449, %v3398
      %3473 = vst.msk [vmem:[#allocation5 + $0xb8] sm:$0xff] %vm3449, %v3400
      %3474 = vst.msk [vmem:[#allocation5 + $0xc0] sm:$0xff] %vm3449, %v3402
      %3475 = vst.msk [vmem:[#allocation5 + $0xc8] sm:$0xff] %vm3449, %v3404
      %3476 = vst.msk [vmem:[#allocation5 + $0xd0] sm:$0xff] %vm3449, %v3406
      %3477 = vst.msk [vmem:[#allocation5 + $0xd8] sm:$0xff] %vm3449, %v3408
      %3478 = vst.msk [vmem:[#allocation5 + $0xe0] sm:$0xff] %vm3449, %v3410
      %3479 = vst.msk [vmem:[#allocation5 + $0xe8] sm:$0xff] %vm3449, %v3412
      %3480 = vst.msk [vmem:[#allocation5 + $0xf0] sm:$0xff] %vm3449, %v3414
      %3481 = vst.msk [vmem:[#allocation5 + $0xf8] sm:$0xff] %vm3449, %v3416
      %s3482 = scalar_lea.vmem [#allocation3], 48
      %v3483 = vld [vmem:[%s3482] sm:$0xff]
      %v3484 = vld [vmem:[%s3482 + $0x8] sm:$0xff]
      %v3485 = vld [vmem:[%s3482 + $0x18] sm:$0xff]
      %v3486 = vld [vmem:[%s3482 + $0x20] sm:$0xff]
      %v3487 = vld [vmem:[%s3482 + $0x30] sm:$0xff]
      %v3488 = vld [vmem:[%s3482 + $0x38] sm:$0xff]
      %v3489 = vld [vmem:[%s3482 + $0x48] sm:$0xff]
      %v3490 = vld [vmem:[%s3482 + $0x50] sm:$0xff]
      %v3491 = vld [vmem:[%s3482 + $0x60] sm:$0xff]
      %v3492 = vld [vmem:[%s3482 + $0x68] sm:$0xff]
      %v3493 = vld [vmem:[%s3482 + $0x78] sm:$0xff]
      %v3494 = vld [vmem:[%s3482 + $0x80] sm:$0xff]
      %v3495 = vld [vmem:[%s3482 + $0x90] sm:$0xff]
      %v3496 = vld [vmem:[%s3482 + $0x98] sm:$0xff]
      %v3497 = vld [vmem:[%s3482 + $0xa8] sm:$0xff]
      %v3498 = vld [vmem:[%s3482 + $0xb0] sm:$0xff]
      %v3499 = vld [vmem:[%s3482 + $0xc0] sm:$0xff]
      %v3500 = vld [vmem:[%s3482 + $0xc8] sm:$0xff]
      %v3501 = vld [vmem:[%s3482 + $0xd8] sm:$0xff]
      %v3502 = vld [vmem:[%s3482 + $0xe0] sm:$0xff]
      %v3503 = vld [vmem:[%s3482 + $0xf0] sm:$0xff]
      %v3504 = vld [vmem:[%s3482 + $0xf8] sm:$0xff]
      %v3505 = vld [vmem:[%s3482 + $0x108] sm:$0xff]
      %v3506 = vld [vmem:[%s3482 + $0x110] sm:$0xff]
      %v3507 = vld [vmem:[%s3482 + $0x120] sm:$0xff]
      %v3508 = vld [vmem:[%s3482 + $0x128] sm:$0xff]
      %v3509 = vld [vmem:[%s3482 + $0x138] sm:$0xff]
      %v3510 = vld [vmem:[%s3482 + $0x140] sm:$0xff]
      %v3511 = vld [vmem:[%s3482 + $0x150] sm:$0xff]
      %v3512 = vld [vmem:[%s3482 + $0x158] sm:$0xff]
      %v3513 = vld [vmem:[%s3482 + $0x168] sm:$0xff]
      %v3514 = vld [vmem:[%s3482 + $0x170] sm:$0xff]
      %3547 = vrot.lane.b32.xlu0 %v3483, 48
      %v3548 = vpop.permute.xlu0 %3547
      %3549 = vrot.lane.b32.xlu0 %v3484, 48
      %v3550 = vpop.permute.xlu0 %3549
      %3551 = vrot.lane.b32.xlu0 %v3485, 48
      %v3552 = vpop.permute.xlu0 %3551
      %3553 = vrot.lane.b32.xlu0 %v3486, 48
      %v3554 = vpop.permute.xlu0 %3553
      %3555 = vrot.lane.b32.xlu0 %v3487, 48
      %v3556 = vpop.permute.xlu0 %3555
      %3557 = vrot.lane.b32.xlu0 %v3488, 48
      %v3558 = vpop.permute.xlu0 %3557
      %3559 = vrot.lane.b32.xlu0 %v3489, 48
      %v3560 = vpop.permute.xlu0 %3559
      %3561 = vrot.lane.b32.xlu0 %v3490, 48
      %v3562 = vpop.permute.xlu0 %3561
      %3563 = vrot.lane.b32.xlu0 %v3491, 48
      %v3564 = vpop.permute.xlu0 %3563
      %3565 = vrot.lane.b32.xlu0 %v3492, 48
      %v3566 = vpop.permute.xlu0 %3565
      %3567 = vrot.lane.b32.xlu0 %v3493, 48
      %v3568 = vpop.permute.xlu0 %3567
      %3569 = vrot.lane.b32.xlu0 %v3494, 48
      %v3570 = vpop.permute.xlu0 %3569
      %3571 = vrot.lane.b32.xlu0 %v3495, 48
      %v3572 = vpop.permute.xlu0 %3571
      %3573 = vrot.lane.b32.xlu0 %v3496, 48
      %v3574 = vpop.permute.xlu0 %3573
      %3575 = vrot.lane.b32.xlu0 %v3497, 48
      %v3576 = vpop.permute.xlu0 %3575
      %3577 = vrot.lane.b32.xlu0 %v3498, 48
      %v3578 = vpop.permute.xlu0 %3577
      %3579 = vrot.lane.b32.xlu0 %v3499, 48
      %v3580 = vpop.permute.xlu0 %3579
      %3581 = vrot.lane.b32.xlu0 %v3500, 48
      %v3582 = vpop.permute.xlu0 %3581
      %3583 = vrot.lane.b32.xlu0 %v3501, 48
      %v3584 = vpop.permute.xlu0 %3583
      %3585 = vrot.lane.b32.xlu0 %v3502, 48
      %v3586 = vpop.permute.xlu0 %3585
      %3587 = vrot.lane.b32.xlu0 %v3503, 48
      %v3588 = vpop.permute.xlu0 %3587
      %3589 = vrot.lane.b32.xlu0 %v3504, 48
      %v3590 = vpop.permute.xlu0 %3589
      %3591 = vrot.lane.b32.xlu0 %v3505, 48
      %v3592 = vpop.permute.xlu0 %3591
      %3593 = vrot.lane.b32.xlu0 %v3506, 48
      %v3594 = vpop.permute.xlu0 %3593
      %3595 = vrot.lane.b32.xlu0 %v3507, 48
      %v3596 = vpop.permute.xlu0 %3595
      %3597 = vrot.lane.b32.xlu0 %v3508, 48
      %v3598 = vpop.permute.xlu0 %3597
      %3599 = vrot.lane.b32.xlu0 %v3509, 48
      %v3600 = vpop.permute.xlu0 %3599
      %3601 = vrot.lane.b32.xlu0 %v3510, 48
      %v3602 = vpop.permute.xlu0 %3601
      %3603 = vrot.lane.b32.xlu0 %v3511, 48
      %v3604 = vpop.permute.xlu0 %3603
      %3605 = vrot.lane.b32.xlu0 %v3512, 48
      %v3606 = vpop.permute.xlu0 %3605
      %3607 = vrot.lane.b32.xlu0 %v3513, 48
      %v3608 = vpop.permute.xlu0 %3607
      %3609 = vrot.lane.b32.xlu0 %v3514, 48
      %v3610 = vpop.permute.xlu0 %3609
      %vm3643 = vcmask 458112
      %3644 = vst.msk [vmem:[#allocation5] sm:$0xff] %vm3643, %v3548
      %3645 = vst.msk [vmem:[#allocation5 + $0x8] sm:$0xff] %vm3643, %v3550
      %3646 = vst.msk [vmem:[#allocation5 + $0x10] sm:$0xff] %vm3643, %v3552
      %3647 = vst.msk [vmem:[#allocation5 + $0x18] sm:$0xff] %vm3643, %v3554
      %3648 = vst.msk [vmem:[#allocation5 + $0x20] sm:$0xff] %vm3643, %v3556
      %3649 = vst.msk [vmem:[#allocation5 + $0x28] sm:$0xff] %vm3643, %v3558
      %3650 = vst.msk [vmem:[#allocation5 + $0x30] sm:$0xff] %vm3643, %v3560
      %3651 = vst.msk [vmem:[#allocation5 + $0x38] sm:$0xff] %vm3643, %v3562
      %3652 = vst.msk [vmem:[#allocation5 + $0x40] sm:$0xff] %vm3643, %v3564
      %3653 = vst.msk [vmem:[#allocation5 + $0x48] sm:$0xff] %vm3643, %v3566
      %3654 = vst.msk [vmem:[#allocation5 + $0x50] sm:$0xff] %vm3643, %v3568
      %3655 = vst.msk [vmem:[#allocation5 + $0x58] sm:$0xff] %vm3643, %v3570
      %3656 = vst.msk [vmem:[#allocation5 + $0x60] sm:$0xff] %vm3643, %v3572
      %3657 = vst.msk [vmem:[#allocation5 + $0x68] sm:$0xff] %vm3643, %v3574
      %3658 = vst.msk [vmem:[#allocation5 + $0x70] sm:$0xff] %vm3643, %v3576
      %3659 = vst.msk [vmem:[#allocation5 + $0x78] sm:$0xff] %vm3643, %v3578
      %3660 = vst.msk [vmem:[#allocation5 + $0x80] sm:$0xff] %vm3643, %v3580
      %3661 = vst.msk [vmem:[#allocation5 + $0x88] sm:$0xff] %vm3643, %v3582
      %3662 = vst.msk [vmem:[#allocation5 + $0x90] sm:$0xff] %vm3643, %v3584
      %3663 = vst.msk [vmem:[#allocation5 + $0x98] sm:$0xff] %vm3643, %v3586
      %3664 = vst.msk [vmem:[#allocation5 + $0xa0] sm:$0xff] %vm3643, %v3588
      %3665 = vst.msk [vmem:[#allocation5 + $0xa8] sm:$0xff] %vm3643, %v3590
      %3666 = vst.msk [vmem:[#allocation5 + $0xb0] sm:$0xff] %vm3643, %v3592
      %3667 = vst.msk [vmem:[#allocation5 + $0xb8] sm:$0xff] %vm3643, %v3594
      %3668 = vst.msk [vmem:[#allocation5 + $0xc0] sm:$0xff] %vm3643, %v3596
      %3669 = vst.msk [vmem:[#allocation5 + $0xc8] sm:$0xff] %vm3643, %v3598
      %3670 = vst.msk [vmem:[#allocation5 + $0xd0] sm:$0xff] %vm3643, %v3600
      %3671 = vst.msk [vmem:[#allocation5 + $0xd8] sm:$0xff] %vm3643, %v3602
      %3672 = vst.msk [vmem:[#allocation5 + $0xe0] sm:$0xff] %vm3643, %v3604
      %3673 = vst.msk [vmem:[#allocation5 + $0xe8] sm:$0xff] %vm3643, %v3606
      %3674 = vst.msk [vmem:[#allocation5 + $0xf0] sm:$0xff] %vm3643, %v3608
      %3675 = vst.msk [vmem:[#allocation5 + $0xf8] sm:$0xff] %vm3643, %v3610
      %v3676 = vld [vmem:[%s3482 + $0x1] sm:$0xff]
      %v3677 = vld [vmem:[%s3482 + $0x9] sm:$0xff]
      %v3678 = vld [vmem:[%s3482 + $0x19] sm:$0xff]
      %v3679 = vld [vmem:[%s3482 + $0x21] sm:$0xff]
      %v3680 = vld [vmem:[%s3482 + $0x31] sm:$0xff]
      %v3681 = vld [vmem:[%s3482 + $0x39] sm:$0xff]
      %v3682 = vld [vmem:[%s3482 + $0x49] sm:$0xff]
      %v3683 = vld [vmem:[%s3482 + $0x51] sm:$0xff]
      %v3684 = vld [vmem:[%s3482 + $0x61] sm:$0xff]
      %v3685 = vld [vmem:[%s3482 + $0x69] sm:$0xff]
      %v3686 = vld [vmem:[%s3482 + $0x79] sm:$0xff]
      %v3687 = vld [vmem:[%s3482 + $0x81] sm:$0xff]
      %v3688 = vld [vmem:[%s3482 + $0x91] sm:$0xff]
      %v3689 = vld [vmem:[%s3482 + $0x99] sm:$0xff]
      %v3690 = vld [vmem:[%s3482 + $0xa9] sm:$0xff]
      %v3691 = vld [vmem:[%s3482 + $0xb1] sm:$0xff]
      %v3692 = vld [vmem:[%s3482 + $0xc1] sm:$0xff]
      %v3693 = vld [vmem:[%s3482 + $0xc9] sm:$0xff]
      %v3694 = vld [vmem:[%s3482 + $0xd9] sm:$0xff]
      %v3695 = vld [vmem:[%s3482 + $0xe1] sm:$0xff]
      %v3696 = vld [vmem:[%s3482 + $0xf1] sm:$0xff]
      %v3697 = vld [vmem:[%s3482 + $0xf9] sm:$0xff]
      %v3698 = vld [vmem:[%s3482 + $0x109] sm:$0xff]
      %v3699 = vld [vmem:[%s3482 + $0x111] sm:$0xff]
      %v3700 = vld [vmem:[%s3482 + $0x121] sm:$0xff]
      %v3701 = vld [vmem:[%s3482 + $0x129] sm:$0xff]
      %v3702 = vld [vmem:[%s3482 + $0x139] sm:$0xff]
      %v3703 = vld [vmem:[%s3482 + $0x141] sm:$0xff]
      %v3704 = vld [vmem:[%s3482 + $0x151] sm:$0xff]
      %v3705 = vld [vmem:[%s3482 + $0x159] sm:$0xff]
      %v3706 = vld [vmem:[%s3482 + $0x169] sm:$0xff]
      %v3707 = vld [vmem:[%s3482 + $0x171] sm:$0xff]
      %3740 = vrot.lane.b32.xlu0 %v3676, 56
      %v3741 = vpop.permute.xlu0 %3740
      %3742 = vrot.lane.b32.xlu0 %v3677, 56
      %v3743 = vpop.permute.xlu0 %3742
      %3744 = vrot.lane.b32.xlu0 %v3678, 56
      %v3745 = vpop.permute.xlu0 %3744
      %3746 = vrot.lane.b32.xlu0 %v3679, 56
      %v3747 = vpop.permute.xlu0 %3746
      %3748 = vrot.lane.b32.xlu0 %v3680, 56
      %v3749 = vpop.permute.xlu0 %3748
      %3750 = vrot.lane.b32.xlu0 %v3681, 56
      %v3751 = vpop.permute.xlu0 %3750
      %3752 = vrot.lane.b32.xlu0 %v3682, 56
      %v3753 = vpop.permute.xlu0 %3752
      %3754 = vrot.lane.b32.xlu0 %v3683, 56
      %v3755 = vpop.permute.xlu0 %3754
      %3756 = vrot.lane.b32.xlu0 %v3684, 56
      %v3757 = vpop.permute.xlu0 %3756
      %3758 = vrot.lane.b32.xlu0 %v3685, 56
      %v3759 = vpop.permute.xlu0 %3758
      %3760 = vrot.lane.b32.xlu0 %v3686, 56
      %v3761 = vpop.permute.xlu0 %3760
      %3762 = vrot.lane.b32.xlu0 %v3687, 56
      %v3763 = vpop.permute.xlu0 %3762
      %3764 = vrot.lane.b32.xlu0 %v3688, 56
      %v3765 = vpop.permute.xlu0 %3764
      %3766 = vrot.lane.b32.xlu0 %v3689, 56
      %v3767 = vpop.permute.xlu0 %3766
      %3768 = vrot.lane.b32.xlu0 %v3690, 56
      %v3769 = vpop.permute.xlu0 %3768
      %3770 = vrot.lane.b32.xlu0 %v3691, 56
      %v3771 = vpop.permute.xlu0 %3770
      %3772 = vrot.lane.b32.xlu0 %v3692, 56
      %v3773 = vpop.permute.xlu0 %3772
      %3774 = vrot.lane.b32.xlu0 %v3693, 56
      %v3775 = vpop.permute.xlu0 %3774
      %3776 = vrot.lane.b32.xlu0 %v3694, 56
      %v3777 = vpop.permute.xlu0 %3776
      %3778 = vrot.lane.b32.xlu0 %v3695, 56
      %v3779 = vpop.permute.xlu0 %3778
      %3780 = vrot.lane.b32.xlu0 %v3696, 56
      %v3781 = vpop.permute.xlu0 %3780
      %3782 = vrot.lane.b32.xlu0 %v3697, 56
      %v3783 = vpop.permute.xlu0 %3782
      %3784 = vrot.lane.b32.xlu0 %v3698, 56
      %v3785 = vpop.permute.xlu0 %3784
      %3786 = vrot.lane.b32.xlu0 %v3699, 56
      %v3787 = vpop.permute.xlu0 %3786
      %3788 = vrot.lane.b32.xlu0 %v3700, 56
      %v3789 = vpop.permute.xlu0 %3788
      %3790 = vrot.lane.b32.xlu0 %v3701, 56
      %v3791 = vpop.permute.xlu0 %3790
      %3792 = vrot.lane.b32.xlu0 %v3702, 56
      %v3793 = vpop.permute.xlu0 %3792
      %3794 = vrot.lane.b32.xlu0 %v3703, 56
      %v3795 = vpop.permute.xlu0 %3794
      %3796 = vrot.lane.b32.xlu0 %v3704, 56
      %v3797 = vpop.permute.xlu0 %3796
      %3798 = vrot.lane.b32.xlu0 %v3705, 56
      %v3799 = vpop.permute.xlu0 %3798
      %3800 = vrot.lane.b32.xlu0 %v3706, 56
      %v3801 = vpop.permute.xlu0 %3800
      %3802 = vrot.lane.b32.xlu0 %v3707, 56
      %v3803 = vpop.permute.xlu0 %3802
      %vm3836 = vcmask 523712
      %3837 = vst.msk [vmem:[#allocation5] sm:$0xff] %vm3836, %v3741
      %3838 = vst.msk [vmem:[#allocation5 + $0x8] sm:$0xff] %vm3836, %v3743
      %3839 = vst.msk [vmem:[#allocation5 + $0x10] sm:$0xff] %vm3836, %v3745
      %3840 = vst.msk [vmem:[#allocation5 + $0x18] sm:$0xff] %vm3836, %v3747
      %3841 = vst.msk [vmem:[#allocation5 + $0x20] sm:$0xff] %vm3836, %v3749
      %3842 = vst.msk [vmem:[#allocation5 + $0x28] sm:$0xff] %vm3836, %v3751
      %3843 = vst.msk [vmem:[#allocation5 + $0x30] sm:$0xff] %vm3836, %v3753
      %3844 = vst.msk [vmem:[#allocation5 + $0x38] sm:$0xff] %vm3836, %v3755
      %3845 = vst.msk [vmem:[#allocation5 + $0x40] sm:$0xff] %vm3836, %v3757
      %3846 = vst.msk [vmem:[#allocation5 + $0x48] sm:$0xff] %vm3836, %v3759
      %3847 = vst.msk [vmem:[#allocation5 + $0x50] sm:$0xff] %vm3836, %v3761
      %3848 = vst.msk [vmem:[#allocation5 + $0x58] sm:$0xff] %vm3836, %v3763
      %3849 = vst.msk [vmem:[#allocation5 + $0x60] sm:$0xff] %vm3836, %v3765
      %3850 = vst.msk [vmem:[#allocation5 + $0x68] sm:$0xff] %vm3836, %v3767
      %3851 = vst.msk [vmem:[#allocation5 + $0x70] sm:$0xff] %vm3836, %v3769
      %3852 = vst.msk [vmem:[#allocation5 + $0x78] sm:$0xff] %vm3836, %v3771
      %3853 = vst.msk [vmem:[#allocation5 + $0x80] sm:$0xff] %vm3836, %v3773
      %3854 = vst.msk [vmem:[#allocation5 + $0x88] sm:$0xff] %vm3836, %v3775
      %3855 = vst.msk [vmem:[#allocation5 + $0x90] sm:$0xff] %vm3836, %v3777
      %3856 = vst.msk [vmem:[#allocation5 + $0x98] sm:$0xff] %vm3836, %v3779
      %3857 = vst.msk [vmem:[#allocation5 + $0xa0] sm:$0xff] %vm3836, %v3781
      %3858 = vst.msk [vmem:[#allocation5 + $0xa8] sm:$0xff] %vm3836, %v3783
      %3859 = vst.msk [vmem:[#allocation5 + $0xb0] sm:$0xff] %vm3836, %v3785
      %3860 = vst.msk [vmem:[#allocation5 + $0xb8] sm:$0xff] %vm3836, %v3787
      %3861 = vst.msk [vmem:[#allocation5 + $0xc0] sm:$0xff] %vm3836, %v3789
      %3862 = vst.msk [vmem:[#allocation5 + $0xc8] sm:$0xff] %vm3836, %v3791
      %3863 = vst.msk [vmem:[#allocation5 + $0xd0] sm:$0xff] %vm3836, %v3793
      %3864 = vst.msk [vmem:[#allocation5 + $0xd8] sm:$0xff] %vm3836, %v3795
      %3865 = vst.msk [vmem:[#allocation5 + $0xe0] sm:$0xff] %vm3836, %v3797
      %3866 = vst.msk [vmem:[#allocation5 + $0xe8] sm:$0xff] %vm3836, %v3799
      %3867 = vst.msk [vmem:[#allocation5 + $0xf0] sm:$0xff] %vm3836, %v3801
      %3868 = vst.msk [vmem:[#allocation5 + $0xf8] sm:$0xff] %vm3836, %v3803
      %v3869 = vld [vmem:[%s3482 + $0x2] sm:$0xff]
      %v3870 = vld [vmem:[%s3482 + $0xa] sm:$0xff]
      %v3871 = vld [vmem:[%s3482 + $0x1a] sm:$0xff]
      %v3872 = vld [vmem:[%s3482 + $0x22] sm:$0xff]
      %v3873 = vld [vmem:[%s3482 + $0x32] sm:$0xff]
      %v3874 = vld [vmem:[%s3482 + $0x3a] sm:$0xff]
      %v3875 = vld [vmem:[%s3482 + $0x4a] sm:$0xff]
      %v3876 = vld [vmem:[%s3482 + $0x52] sm:$0xff]
      %v3877 = vld [vmem:[%s3482 + $0x62] sm:$0xff]
      %v3878 = vld [vmem:[%s3482 + $0x6a] sm:$0xff]
      %v3879 = vld [vmem:[%s3482 + $0x7a] sm:$0xff]
      %v3880 = vld [vmem:[%s3482 + $0x82] sm:$0xff]
      %v3881 = vld [vmem:[%s3482 + $0x92] sm:$0xff]
      %v3882 = vld [vmem:[%s3482 + $0x9a] sm:$0xff]
      %v3883 = vld [vmem:[%s3482 + $0xaa] sm:$0xff]
      %v3884 = vld [vmem:[%s3482 + $0xb2] sm:$0xff]
      %v3885 = vld [vmem:[%s3482 + $0xc2] sm:$0xff]
      %v3886 = vld [vmem:[%s3482 + $0xca] sm:$0xff]
      %v3887 = vld [vmem:[%s3482 + $0xda] sm:$0xff]
      %v3888 = vld [vmem:[%s3482 + $0xe2] sm:$0xff]
      %v3889 = vld [vmem:[%s3482 + $0xf2] sm:$0xff]
      %v3890 = vld [vmem:[%s3482 + $0xfa] sm:$0xff]
      %v3891 = vld [vmem:[%s3482 + $0x10a] sm:$0xff]
      %v3892 = vld [vmem:[%s3482 + $0x112] sm:$0xff]
      %v3893 = vld [vmem:[%s3482 + $0x122] sm:$0xff]
      %v3894 = vld [vmem:[%s3482 + $0x12a] sm:$0xff]
      %v3895 = vld [vmem:[%s3482 + $0x13a] sm:$0xff]
      %v3896 = vld [vmem:[%s3482 + $0x142] sm:$0xff]
      %v3897 = vld [vmem:[%s3482 + $0x152] sm:$0xff]
      %v3898 = vld [vmem:[%s3482 + $0x15a] sm:$0xff]
      %v3899 = vld [vmem:[%s3482 + $0x16a] sm:$0xff]
      %v3900 = vld [vmem:[%s3482 + $0x172] sm:$0xff]
      %3933 = vrot.lane.b32.xlu0 %v3869, 64
      %v3934 = vpop.permute.xlu0 %3933
      %3935 = vrot.lane.b32.xlu0 %v3870, 64
      %v3936 = vpop.permute.xlu0 %3935
      %3937 = vrot.lane.b32.xlu0 %v3871, 64
      %v3938 = vpop.permute.xlu0 %3937
      %3939 = vrot.lane.b32.xlu0 %v3872, 64
      %v3940 = vpop.permute.xlu0 %3939
      %3941 = vrot.lane.b32.xlu0 %v3873, 64
      %v3942 = vpop.permute.xlu0 %3941
      %3943 = vrot.lane.b32.xlu0 %v3874, 64
      %v3944 = vpop.permute.xlu0 %3943
      %3945 = vrot.lane.b32.xlu0 %v3875, 64
      %v3946 = vpop.permute.xlu0 %3945
      %3947 = vrot.lane.b32.xlu0 %v3876, 64
      %v3948 = vpop.permute.xlu0 %3947
      %3949 = vrot.lane.b32.xlu0 %v3877, 64
      %v3950 = vpop.permute.xlu0 %3949
      %3951 = vrot.lane.b32.xlu0 %v3878, 64
      %v3952 = vpop.permute.xlu0 %3951
      %3953 = vrot.lane.b32.xlu0 %v3879, 64
      %v3954 = vpop.permute.xlu0 %3953
      %3955 = vrot.lane.b32.xlu0 %v3880, 64
      %v3956 = vpop.permute.xlu0 %3955
      %3957 = vrot.lane.b32.xlu0 %v3881, 64
      %v3958 = vpop.permute.xlu0 %3957
      %3959 = vrot.lane.b32.xlu0 %v3882, 64
      %v3960 = vpop.permute.xlu0 %3959
      %3961 = vrot.lane.b32.xlu0 %v3883, 64
      %v3962 = vpop.permute.xlu0 %3961
      %3963 = vrot.lane.b32.xlu0 %v3884, 64
      %v3964 = vpop.permute.xlu0 %3963
      %3965 = vrot.lane.b32.xlu0 %v3885, 64
      %v3966 = vpop.permute.xlu0 %3965
      %3967 = vrot.lane.b32.xlu0 %v3886, 64
      %v3968 = vpop.permute.xlu0 %3967
      %3969 = vrot.lane.b32.xlu0 %v3887, 64
      %v3970 = vpop.permute.xlu0 %3969
      %3971 = vrot.lane.b32.xlu0 %v3888, 64
      %v3972 = vpop.permute.xlu0 %3971
      %3973 = vrot.lane.b32.xlu0 %v3889, 64
      %v3974 = vpop.permute.xlu0 %3973
      %3975 = vrot.lane.b32.xlu0 %v3890, 64
      %v3976 = vpop.permute.xlu0 %3975
      %3977 = vrot.lane.b32.xlu0 %v3891, 64
      %v3978 = vpop.permute.xlu0 %3977
      %3979 = vrot.lane.b32.xlu0 %v3892, 64
      %v3980 = vpop.permute.xlu0 %3979
      %3981 = vrot.lane.b32.xlu0 %v3893, 64
      %v3982 = vpop.permute.xlu0 %3981
      %3983 = vrot.lane.b32.xlu0 %v3894, 64
      %v3984 = vpop.permute.xlu0 %3983
      %3985 = vrot.lane.b32.xlu0 %v3895, 64
      %v3986 = vpop.permute.xlu0 %3985
      %3987 = vrot.lane.b32.xlu0 %v3896, 64
      %v3988 = vpop.permute.xlu0 %3987
      %3989 = vrot.lane.b32.xlu0 %v3897, 64
      %v3990 = vpop.permute.xlu0 %3989
      %3991 = vrot.lane.b32.xlu0 %v3898, 64
      %v3992 = vpop.permute.xlu0 %3991
      %3993 = vrot.lane.b32.xlu0 %v3899, 64
      %v3994 = vpop.permute.xlu0 %3993
      %3995 = vrot.lane.b32.xlu0 %v3900, 64
      %v3996 = vpop.permute.xlu0 %3995
      %vm4029 = vcmask 589312
      %4030 = vst.msk [vmem:[#allocation5] sm:$0xff] %vm4029, %v3934
      %4031 = vst.msk [vmem:[#allocation5 + $0x8] sm:$0xff] %vm4029, %v3936
      %4032 = vst.msk [vmem:[#allocation5 + $0x10] sm:$0xff] %vm4029, %v3938
      %4033 = vst.msk [vmem:[#allocation5 + $0x18] sm:$0xff] %vm4029, %v3940
      %4034 = vst.msk [vmem:[#allocation5 + $0x20] sm:$0xff] %vm4029, %v3942
      %4035 = vst.msk [vmem:[#allocation5 + $0x28] sm:$0xff] %vm4029, %v3944
      %4036 = vst.msk [vmem:[#allocation5 + $0x30] sm:$0xff] %vm4029, %v3946
      %4037 = vst.msk [vmem:[#allocation5 + $0x38] sm:$0xff] %vm4029, %v3948
      %4038 = vst.msk [vmem:[#allocation5 + $0x40] sm:$0xff] %vm4029, %v3950
      %4039 = vst.msk [vmem:[#allocation5 + $0x48] sm:$0xff] %vm4029, %v3952
      %4040 = vst.msk [vmem:[#allocation5 + $0x50] sm:$0xff] %vm4029, %v3954
      %4041 = vst.msk [vmem:[#allocation5 + $0x58] sm:$0xff] %vm4029, %v3956
      %4042 = vst.msk [vmem:[#allocation5 + $0x60] sm:$0xff] %vm4029, %v3958
      %4043 = vst.msk [vmem:[#allocation5 + $0x68] sm:$0xff] %vm4029, %v3960
      %4044 = vst.msk [vmem:[#allocation5 + $0x70] sm:$0xff] %vm4029, %v3962
      %4045 = vst.msk [vmem:[#allocation5 + $0x78] sm:$0xff] %vm4029, %v3964
      %4046 = vst.msk [vmem:[#allocation5 + $0x80] sm:$0xff] %vm4029, %v3966
      %4047 = vst.msk [vmem:[#allocation5 + $0x88] sm:$0xff] %vm4029, %v3968
      %4048 = vst.msk [vmem:[#allocation5 + $0x90] sm:$0xff] %vm4029, %v3970
      %4049 = vst.msk [vmem:[#allocation5 + $0x98] sm:$0xff] %vm4029, %v3972
      %4050 = vst.msk [vmem:[#allocation5 + $0xa0] sm:$0xff] %vm4029, %v3974
      %4051 = vst.msk [vmem:[#allocation5 + $0xa8] sm:$0xff] %vm4029, %v3976
      %4052 = vst.msk [vmem:[#allocation5 + $0xb0] sm:$0xff] %vm4029, %v3978
      %4053 = vst.msk [vmem:[#allocation5 + $0xb8] sm:$0xff] %vm4029, %v3980
      %4054 = vst.msk [vmem:[#allocation5 + $0xc0] sm:$0xff] %vm4029, %v3982
      %4055 = vst.msk [vmem:[#allocation5 + $0xc8] sm:$0xff] %vm4029, %v3984
      %4056 = vst.msk [vmem:[#allocation5 + $0xd0] sm:$0xff] %vm4029, %v3986
      %4057 = vst.msk [vmem:[#allocation5 + $0xd8] sm:$0xff] %vm4029, %v3988
      %4058 = vst.msk [vmem:[#allocation5 + $0xe0] sm:$0xff] %vm4029, %v3990
      %4059 = vst.msk [vmem:[#allocation5 + $0xe8] sm:$0xff] %vm4029, %v3992
      %4060 = vst.msk [vmem:[#allocation5 + $0xf0] sm:$0xff] %vm4029, %v3994
      %4061 = vst.msk [vmem:[#allocation5 + $0xf8] sm:$0xff] %vm4029, %v3996
      %v4062 = vld [vmem:[#allocation5] sm:$0xff]
      %v4063 = vld [vmem:[#allocation5 + $0x8] sm:$0xff]
      %v4064 = vld [vmem:[#allocation5 + $0x10] sm:$0xff]
      %v4065 = vld [vmem:[#allocation5 + $0x18] sm:$0xff]
      %v4066 = vld [vmem:[#allocation5 + $0x20] sm:$0xff]
      %v4067 = vld [vmem:[#allocation5 + $0x28] sm:$0xff]
      %v4068 = vld [vmem:[#allocation5 + $0x30] sm:$0xff]
      %v4069 = vld [vmem:[#allocation5 + $0x38] sm:$0xff]
      %v4070 = vld [vmem:[#allocation5 + $0x40] sm:$0xff]
      %v4071 = vld [vmem:[#allocation5 + $0x48] sm:$0xff]
      %v4072 = vld [vmem:[#allocation5 + $0x50] sm:$0xff]
      %v4073 = vld [vmem:[#allocation5 + $0x58] sm:$0xff]
      %v4074 = vld [vmem:[#allocation5 + $0x60] sm:$0xff]
      %v4075 = vld [vmem:[#allocation5 + $0x68] sm:$0xff]
      %v4076 = vld [vmem:[#allocation5 + $0x70] sm:$0xff]
      %v4077 = vld [vmem:[#allocation5 + $0x78] sm:$0xff]
      %v4078 = vld [vmem:[#allocation5 + $0x80] sm:$0xff]
      %v4079 = vld [vmem:[#allocation5 + $0x88] sm:$0xff]
      %v4080 = vld [vmem:[#allocation5 + $0x90] sm:$0xff]
      %v4081 = vld [vmem:[#allocation5 + $0x98] sm:$0xff]
      %v4082 = vld [vmem:[#allocation5 + $0xa0] sm:$0xff]
      %v4083 = vld [vmem:[#allocation5 + $0xa8] sm:$0xff]
      %v4084 = vld [vmem:[#allocation5 + $0xb0] sm:$0xff]
      %v4085 = vld [vmem:[#allocation5 + $0xb8] sm:$0xff]
      %v4086 = vld [vmem:[#allocation5 + $0xc0] sm:$0xff]
      %v4087 = vld [vmem:[#allocation5 + $0xc8] sm:$0xff]
      %v4088 = vld [vmem:[#allocation5 + $0xd0] sm:$0xff]
      %v4089 = vld [vmem:[#allocation5 + $0xd8] sm:$0xff]
      %v4090 = vld [vmem:[#allocation5 + $0xe0] sm:$0xff]
      %v4091 = vld [vmem:[#allocation5 + $0xe8] sm:$0xff]
      %v4092 = vld [vmem:[#allocation5 + $0xf0] sm:$0xff]
      %v4093 = vld [vmem:[#allocation5 + $0xf8] sm:$0xff]
      %v4094 = vld [vmem:[%s4] sm:$0xff]
      %v4095 = vld [vmem:[%s4 + $0x8] sm:$0xff]
      %v4096 = vld [vmem:[%s4 + $0x10] sm:$0xff]
      %v4097 = vld [vmem:[%s4 + $0x18] sm:$0xff]
      %v4098 = vld [vmem:[%s4 + $0x20] sm:$0xff]
      %v4099 = vld [vmem:[%s4 + $0x28] sm:$0xff]
      %v4100 = vld [vmem:[%s4 + $0x30] sm:$0xff]
      %v4101 = vld [vmem:[%s4 + $0x38] sm:$0xff]
      %v4102 = vld [vmem:[%s4 + $0x40] sm:$0xff]
      %vm4103 = vcmask 588800
      %v4105 = vsel %vm4103, %v4062, 0
      %v4108 = vsel %vm4103, %v4063, 0
      %v4111 = vsel %vm4103, %v4064, 0
      %v4114 = vsel %vm4103, %v4065, 0
      %v4117 = vsel %vm4103, %v4066, 0
      %v4120 = vsel %vm4103, %v4067, 0
      %v4123 = vsel %vm4103, %v4068, 0
      %v4126 = vsel %vm4103, %v4069, 0
      %v4129 = vsel %vm4103, %v4070, 0
      %v4132 = vsel %vm4103, %v4071, 0
      %v4135 = vsel %vm4103, %v4072, 0
      %v4138 = vsel %vm4103, %v4073, 0
      %v4141 = vsel %vm4103, %v4074, 0
      %v4144 = vsel %vm4103, %v4075, 0
      %v4147 = vsel %vm4103, %v4076, 0
      %v4150 = vsel %vm4103, %v4077, 0
      %v4153 = vsel %vm4103, %v4078, 0
      %v4156 = vsel %vm4103, %v4079, 0
      %v4159 = vsel %vm4103, %v4080, 0
      %v4162 = vsel %vm4103, %v4081, 0
      %v4165 = vsel %vm4103, %v4082, 0
      %v4168 = vsel %vm4103, %v4083, 0
      %v4171 = vsel %vm4103, %v4084, 0
      %v4174 = vsel %vm4103, %v4085, 0
      %v4177 = vsel %vm4103, %v4086, 0
      %v4180 = vsel %vm4103, %v4087, 0
      %v4183 = vsel %vm4103, %v4088, 0
      %v4186 = vsel %vm4103, %v4089, 0
      %v4189 = vsel %vm4103, %v4090, 0
      %v4192 = vsel %vm4103, %v4091, 0
      %v4195 = vsel %vm4103, %v4092, 0
      %v4198 = vsel %vm4103, %v4093, 0
      %4200 = vmatpush.msra.mxu0 0.0
      %4201 = vmatpush.msra.mxu0 0.0
      %4202 = vmatpush.msra.mxu0 0.0
      %4203 = vmatpush.msra.mxu0 0.0
      %4204 = vmatpush.msra.mxu0 0.0
      %4205 = vmatpush.msra.mxu0 0.0
      %4206 = vmatpush.msra.mxu0 0.0
      %4207 = vmatpush.msra.mxu0 %v4102
      %4208 = vmatpush.msra.mxu0 %v4101
      %4209 = vmatpush.msra.mxu0 %v4100
      %4210 = vmatpush.msra.mxu0 %v4099
      %4211 = vmatpush.msra.mxu0 %v4098
      %4212 = vmatpush.msra.mxu0 %v4097
      %4213 = vmatpush.msra.mxu0 %v4096
      %4214 = vmatpush.msra.mxu0 %v4095
      %4215 = vmatpush.msra.mxu0 %v4094
      %4216 = vmatmul.f32.gmra.mxu0 %v4105
      %v4217 = vpop.f32.mrf.mxu0
      %v4218 = vadd.f32 0.0, %v4217
      %4219 = vmatmul.f32.gmra.mxu0 %v4108
      %v4220 = vpop.f32.mrf.mxu0
      %v4221 = vadd.f32 0.0, %v4220
      %4222 = vmatmul.f32.gmra.mxu0 %v4111
      %v4223 = vpop.f32.mrf.mxu0
      %v4224 = vadd.f32 0.0, %v4223
      %4225 = vmatmul.f32.gmra.mxu0 %v4114
      %v4226 = vpop.f32.mrf.mxu0
      %v4227 = vadd.f32 0.0, %v4226
      %4228 = vmatmul.f32.gmra.mxu0 %v4117
      %v4229 = vpop.f32.mrf.mxu0
      %v4230 = vadd.f32 0.0, %v4229
      %4231 = vmatmul.f32.gmra.mxu0 %v4120
      %v4232 = vpop.f32.mrf.mxu0
      %v4233 = vadd.f32 0.0, %v4232
      %4234 = vmatmul.f32.gmra.mxu0 %v4123
      %v4235 = vpop.f32.mrf.mxu0
      %v4236 = vadd.f32 0.0, %v4235
      %4237 = vmatmul.f32.gmra.mxu0 %v4126
      %v4238 = vpop.f32.mrf.mxu0
      %v4239 = vadd.f32 0.0, %v4238
      %4240 = vmatmul.f32.gmra.mxu0 %v4129
      %v4241 = vpop.f32.mrf.mxu0
      %v4242 = vadd.f32 0.0, %v4241
      %4243 = vmatmul.f32.gmra.mxu0 %v4132
      %v4244 = vpop.f32.mrf.mxu0
      %v4245 = vadd.f32 0.0, %v4244
      %4246 = vmatmul.f32.gmra.mxu0 %v4135
      %v4247 = vpop.f32.mrf.mxu0
      %v4248 = vadd.f32 0.0, %v4247
      %4249 = vmatmul.f32.gmra.mxu0 %v4138
      %v4250 = vpop.f32.mrf.mxu0
      %v4251 = vadd.f32 0.0, %v4250
      %4252 = vmatmul.f32.gmra.mxu0 %v4141
      %v4253 = vpop.f32.mrf.mxu0
      %v4254 = vadd.f32 0.0, %v4253
      %4255 = vmatmul.f32.gmra.mxu0 %v4144
      %v4256 = vpop.f32.mrf.mxu0
      %v4257 = vadd.f32 0.0, %v4256
      %4258 = vmatmul.f32.gmra.mxu0 %v4147
      %v4259 = vpop.f32.mrf.mxu0
      %v4260 = vadd.f32 0.0, %v4259
      %4261 = vmatmul.f32.gmra.mxu0 %v4150
      %v4262 = vpop.f32.mrf.mxu0
      %v4263 = vadd.f32 0.0, %v4262
      %4264 = vmatmul.f32.gmra.mxu0 %v4153
      %v4265 = vpop.f32.mrf.mxu0
      %v4266 = vadd.f32 0.0, %v4265
      %4267 = vmatmul.f32.gmra.mxu0 %v4156
      %v4268 = vpop.f32.mrf.mxu0
      %v4269 = vadd.f32 0.0, %v4268
      %4270 = vmatmul.f32.gmra.mxu0 %v4159
      %v4271 = vpop.f32.mrf.mxu0
      %v4272 = vadd.f32 0.0, %v4271
      %4273 = vmatmul.f32.gmra.mxu0 %v4162
      %v4274 = vpop.f32.mrf.mxu0
      %v4275 = vadd.f32 0.0, %v4274
      %4276 = vmatmul.f32.gmra.mxu0 %v4165
      %v4277 = vpop.f32.mrf.mxu0
      %v4278 = vadd.f32 0.0, %v4277
      %4279 = vmatmul.f32.gmra.mxu0 %v4168
      %v4280 = vpop.f32.mrf.mxu0
      %v4281 = vadd.f32 0.0, %v4280
      %4282 = vmatmul.f32.gmra.mxu0 %v4171
      %v4283 = vpop.f32.mrf.mxu0
      %v4284 = vadd.f32 0.0, %v4283
      %4285 = vmatmul.f32.gmra.mxu0 %v4174
      %v4286 = vpop.f32.mrf.mxu0
      %v4287 = vadd.f32 0.0, %v4286
      %4288 = vmatmul.f32.gmra.mxu0 %v4177
      %v4289 = vpop.f32.mrf.mxu0
      %v4290 = vadd.f32 0.0, %v4289
      %4291 = vmatmul.f32.gmra.mxu0 %v4180
      %v4292 = vpop.f32.mrf.mxu0
      %v4293 = vadd.f32 0.0, %v4292
      %4294 = vmatmul.f32.gmra.mxu0 %v4183
      %v4295 = vpop.f32.mrf.mxu0
      %v4296 = vadd.f32 0.0, %v4295
      %4297 = vmatmul.f32.gmra.mxu0 %v4186
      %v4298 = vpop.f32.mrf.mxu0
      %v4299 = vadd.f32 0.0, %v4298
      %4300 = vmatmul.f32.gmra.mxu0 %v4189
      %v4301 = vpop.f32.mrf.mxu0
      %v4302 = vadd.f32 0.0, %v4301
      %4303 = vmatmul.f32.gmra.mxu0 %v4192
      %v4304 = vpop.f32.mrf.mxu0
      %v4305 = vadd.f32 0.0, %v4304
      %4306 = vmatmul.f32.gmra.mxu0 %v4195
      %v4307 = vpop.f32.mrf.mxu0
      %v4308 = vadd.f32 0.0, %v4307
      %4309 = vmatmul.f32.gmra.mxu0 %v4198
      %v4310 = vpop.f32.mrf.mxu0
      %v4311 = vadd.f32 0.0, %v4310
      %4312 = vdwg.mxu0
      %v4313 = vld [vmem:[%s5] sm:$0x1]
      %v4315 = vperm.slane %v4313, 0
      %v4317 = vmul.f32 %v4218, %v4315
      %v4318 = vmul.f32 %v4221, %v4315
      %v4319 = vmul.f32 %v4224, %v4315
      %v4320 = vmul.f32 %v4227, %v4315
      %v4321 = vmul.f32 %v4230, %v4315
      %v4322 = vmul.f32 %v4233, %v4315
      %v4323 = vmul.f32 %v4236, %v4315
      %v4324 = vmul.f32 %v4239, %v4315
      %v4325 = vmul.f32 %v4242, %v4315
      %v4326 = vmul.f32 %v4245, %v4315
      %v4327 = vmul.f32 %v4248, %v4315
      %v4328 = vmul.f32 %v4251, %v4315
      %v4329 = vmul.f32 %v4254, %v4315
      %v4330 = vmul.f32 %v4257, %v4315
      %v4331 = vmul.f32 %v4260, %v4315
      %v4332 = vmul.f32 %v4263, %v4315
      %v4333 = vmul.f32 %v4266, %v4315
      %v4334 = vmul.f32 %v4269, %v4315
      %v4335 = vmul.f32 %v4272, %v4315
      %v4336 = vmul.f32 %v4275, %v4315
      %v4337 = vmul.f32 %v4278, %v4315
      %v4338 = vmul.f32 %v4281, %v4315
      %v4339 = vmul.f32 %v4284, %v4315
      %v4340 = vmul.f32 %v4287, %v4315
      %v4341 = vmul.f32 %v4290, %v4315
      %v4342 = vmul.f32 %v4293, %v4315
      %v4343 = vmul.f32 %v4296, %v4315
      %v4344 = vmul.f32 %v4299, %v4315
      %v4345 = vmul.f32 %v4302, %v4315
      %v4346 = vmul.f32 %v4305, %v4315
      %v4347 = vmul.f32 %v4308, %v4315
      %v4348 = vmul.f32 %v4311, %v4315
      %v4349 = vld [vmem:[%s6] sm:$0x1]
      %v4351 = vperm.slane %v4349, 0
      %v4353 = vadd.f32 %v4317, %v4351
      %v4354 = vadd.f32 %v4318, %v4351
      %v4355 = vadd.f32 %v4319, %v4351
      %v4356 = vadd.f32 %v4320, %v4351
      %v4357 = vadd.f32 %v4321, %v4351
      %v4358 = vadd.f32 %v4322, %v4351
      %v4359 = vadd.f32 %v4323, %v4351
      %v4360 = vadd.f32 %v4324, %v4351
      %v4361 = vadd.f32 %v4325, %v4351
      %v4362 = vadd.f32 %v4326, %v4351
      %v4363 = vadd.f32 %v4327, %v4351
      %v4364 = vadd.f32 %v4328, %v4351
      %v4365 = vadd.f32 %v4329, %v4351
      %v4366 = vadd.f32 %v4330, %v4351
      %v4367 = vadd.f32 %v4331, %v4351
      %v4368 = vadd.f32 %v4332, %v4351
      %v4369 = vadd.f32 %v4333, %v4351
      %v4370 = vadd.f32 %v4334, %v4351
      %v4371 = vadd.f32 %v4335, %v4351
      %v4372 = vadd.f32 %v4336, %v4351
      %v4373 = vadd.f32 %v4337, %v4351
      %v4374 = vadd.f32 %v4338, %v4351
      %v4375 = vadd.f32 %v4339, %v4351
      %v4376 = vadd.f32 %v4340, %v4351
      %v4377 = vadd.f32 %v4341, %v4351
      %v4378 = vadd.f32 %v4342, %v4351
      %v4379 = vadd.f32 %v4343, %v4351
      %v4380 = vadd.f32 %v4344, %v4351
      %v4381 = vadd.f32 %v4345, %v4351
      %v4382 = vadd.f32 %v4346, %v4351
      %v4383 = vadd.f32 %v4347, %v4351
      %v4384 = vadd.f32 %v4348, %v4351
      %v4385 = vmax.f32 %v4353, 0.0
      %v4386 = vmax.f32 %v4354, 0.0
      %v4387 = vmax.f32 %v4355, 0.0
      %v4388 = vmax.f32 %v4356, 0.0
      %v4389 = vmax.f32 %v4357, 0.0
      %v4390 = vmax.f32 %v4358, 0.0
      %v4391 = vmax.f32 %v4359, 0.0
      %v4392 = vmax.f32 %v4360, 0.0
      %v4393 = vmax.f32 %v4361, 0.0
      %v4394 = vmax.f32 %v4362, 0.0
      %v4395 = vmax.f32 %v4363, 0.0
      %v4396 = vmax.f32 %v4364, 0.0
      %v4397 = vmax.f32 %v4365, 0.0
      %v4398 = vmax.f32 %v4366, 0.0
      %v4399 = vmax.f32 %v4367, 0.0
      %v4400 = vmax.f32 %v4368, 0.0
      %v4401 = vmax.f32 %v4369, 0.0
      %v4402 = vmax.f32 %v4370, 0.0
      %v4403 = vmax.f32 %v4371, 0.0
      %v4404 = vmax.f32 %v4372, 0.0
      %v4405 = vmax.f32 %v4373, 0.0
      %v4406 = vmax.f32 %v4374, 0.0
      %v4407 = vmax.f32 %v4375, 0.0
      %v4408 = vmax.f32 %v4376, 0.0
      %v4409 = vmax.f32 %v4377, 0.0
      %v4410 = vmax.f32 %v4378, 0.0
      %v4411 = vmax.f32 %v4379, 0.0
      %v4412 = vmax.f32 %v4380, 0.0
      %v4413 = vmax.f32 %v4381, 0.0
      %v4414 = vmax.f32 %v4382, 0.0
      %v4415 = vmax.f32 %v4383, 0.0
      %v4416 = vmax.f32 %v4384, 0.0
      %4417 = vxpose.xlu0.b32.start [1/16] %v4385, 128
      %4418 = vxpose.xlu0.b32.cont [2/16] %v4386, 128
      %4419 = vxpose.xlu0.b32.cont [3/16] %v4387, 128
      %4420 = vxpose.xlu0.b32.cont [4/16] %v4388, 128
      %4421 = vxpose.xlu0.b32.cont [5/16] %v4389, 128
      %4422 = vxpose.xlu0.b32.cont [6/16] %v4390, 128
      %4423 = vxpose.xlu0.b32.cont [7/16] %v4391, 128
      %4424 = vxpose.xlu0.b32.cont [8/16] %v4392, 128
      %4425 = vxpose.xlu0.b32.cont [9/16] %v4393, 128
      %4426 = vxpose.xlu0.b32.cont [10/16] %v4394, 128
      %4427 = vxpose.xlu0.b32.cont [11/16] %v4395, 128
      %4428 = vxpose.xlu0.b32.cont [12/16] %v4396, 128
      %4429 = vxpose.xlu0.b32.cont [13/16] %v4397, 128
      %4430 = vxpose.xlu0.b32.cont [14/16] %v4398, 128
      %4431 = vxpose.xlu0.b32.cont [15/16] %v4399, 128
      %4432 = vxpose.xlu0.b32.end [16/16] %v4400, 128
      %v4433 = vpop.trf.xlu0
      %v4434 = vpop.trf.xlu0
      %v4435 = vpop.trf.xlu0
      %v4436 = vpop.trf.xlu0
      %v4437 = vpop.trf.xlu0
      %v4438 = vpop.trf.xlu0
      %v4439 = vpop.trf.xlu0
      %v4440 = vpop.trf.xlu0
      %v4441 = vpop.trf.xlu0
      %v4442 = vpop.trf.xlu0
      %v4443 = vpop.trf.xlu0
      %v4444 = vpop.trf.xlu0
      %v4445 = vpop.trf.xlu0
      %v4446 = vpop.trf.xlu0
      %v4447 = vpop.trf.xlu0
      %v4448 = vpop.trf.xlu0
      %4449 = vxpose.xlu0.b32.start [1/16] %v4401, 128
      %4450 = vxpose.xlu0.b32.cont [2/16] %v4402, 128
      %4451 = vxpose.xlu0.b32.cont [3/16] %v4403, 128
      %4452 = vxpose.xlu0.b32.cont [4/16] %v4404, 128
      %4453 = vxpose.xlu0.b32.cont [5/16] %v4405, 128
      %4454 = vxpose.xlu0.b32.cont [6/16] %v4406, 128
      %4455 = vxpose.xlu0.b32.cont [7/16] %v4407, 128
      %4456 = vxpose.xlu0.b32.cont [8/16] %v4408, 128
      %4457 = vxpose.xlu0.b32.cont [9/16] %v4409, 128
      %4458 = vxpose.xlu0.b32.cont [10/16] %v4410, 128
      %4459 = vxpose.xlu0.b32.cont [11/16] %v4411, 128
      %4460 = vxpose.xlu0.b32.cont [12/16] %v4412, 128
      %4461 = vxpose.xlu0.b32.cont [13/16] %v4413, 128
      %4462 = vxpose.xlu0.b32.cont [14/16] %v4414, 128
      %4463 = vxpose.xlu0.b32.cont [15/16] %v4415, 128
      %4464 = vxpose.xlu0.b32.end [16/16] %v4416, 128
      %v4465 = vpop.trf.xlu0
      %v4466 = vpop.trf.xlu0
      %v4467 = vpop.trf.xlu0
      %v4468 = vpop.trf.xlu0
      %v4469 = vpop.trf.xlu0
      %v4470 = vpop.trf.xlu0
      %v4471 = vpop.trf.xlu0
      %v4472 = vpop.trf.xlu0
      %v4473 = vpop.trf.xlu0
      %v4474 = vpop.trf.xlu0
      %v4475 = vpop.trf.xlu0
      %v4476 = vpop.trf.xlu0
      %v4477 = vpop.trf.xlu0
      %v4478 = vpop.trf.xlu0
      %v4479 = vpop.trf.xlu0
      %v4480 = vpop.trf.xlu0
      %4481 = vst [vmem:[%s278] sm:$0xff] %v4433
      %4482 = vst [vmem:[%s278 + $0x8] sm:$0xff] %v4465
      %p4483 = scmp.lt.s32.totalorder %s18, 1
      %s4484 = scalar_select %p4483, %s18, 1
      %s4485 = smul.addr %s4484, 2
      %s4486 = smul.addr %s4485, 8
      %s4487 = scalar_lea.vmem %s7, %s4486
      // Predicated region
      $region49: #{double_conv_forward.1} parent=47 // pred_check
        %p4488 = pneg %p188
      $region50: #{double_conv_forward.1} parent=47 // pred_check_branch
        %4490 = sbr.rel (%p4488) target = $region52
      $region51: #{double_conv_forward.1} parent=47 // pred_region
        _
      $region52: #{double_conv_forward.1} parent=47 // pred_fallthru
        _
    $region48: #{double_conv_forward.1} parent=5 // pred_fallthru
      _
    %p4491 = scmp.le.s32.totalorder 2, %s13
    // Predicated region
    $region53: #{double_conv_forward.1} parent=5 // pred_check
      %p4492 = pneg %p4491
    $region54: #{double_conv_forward.1} parent=5 // pred_check_branch
      %4494 = sbr.rel (%p4492) target = $region56
    $region55: #{double_conv_forward.1} parent=5 // pred_region
      %s4495 = ssub.s32 %s13, 2
      // Predicated region
      $region57: #{double_conv_forward.1} parent=55 // pred_check
        %p4496 = pneg %p194
      $region58: #{double_conv_forward.1} parent=55 // pred_check_branch
        %4498 = sbr.rel (%p4496) target = $region60
      $region59: #{double_conv_forward.1} parent=55 // pred_region
        %p4499 = scmp.lt.s32.totalorder %s19, 1
        %s4500 = scalar_select %p4499, %s19, 1
        %s4501 = smul.addr %s4500, 2
        %s4502 = smul.addr %s4501, 8
        %s4503 = scalar_lea.vmem %s7, %s4502
      $region60: #{double_conv_forward.1} parent=55 // pred_fallthru
        _
    $region56: #{double_conv_forward.1} parent=5 // pred_fallthru
      _
  $region6: #{double_conv_forward.1} parent=0 // loop_footer
    %s17 = sadd.s32 1, %s13
  $region7: #{double_conv_forward.1} parent=0 // loop_footer_branch
    %12 = sbr.rel target = $region3
  $region8: #{double_conv_forward.1} parent=0 // loop_exit
    _

</llo_original>
